<compile_context>
chip_gen: v7x
topology: tpu7x:2x2x1
jax: 0.10.0
libtpu: 0.0.40
codegen_flags: <defaults>
</compile_context>

<pallas_src>
import functools

import jax
import jax.numpy as jnp
from jax.experimental import pallas as pl
from jax.experimental.pallas import tpu as pltpu

LEAKY_SLOPE = 0.01          # nn.LeakyReLU default negative_slope
BN_EPS = 1e-5               # nn.BatchNorm1d default eps
LANE = 128                  # channel (lane) alignment
SUB = 8                     # row (sublane) alignment
HALO_BLK = 8                # halo side block (rows); supports n_res_block <= 7
TM_MAX = 256                # rows per output tile
VMEM_LIMIT = 32 * 1024 * 1024


def _round_up(x, m):
    return ((x + m - 1) // m) * m


def _pick_tm(l_out):
    """Output rows per tile: multiple of 8, <= TM_MAX."""
    return min(TM_MAX, _round_up(max(l_out, 1), SUB))


# ----------------------------------------------------------------------------
# Kernel 1: downsample conv (k=4, s=2, p=1) as a stride-1 2-tap conv on a
# row-pair-merged input; folded BN shift and LeakyReLU fused into the epilogue.
# ----------------------------------------------------------------------------
def _down_kernel(zc_ref, zr_ref, w_ref, shift_ref, o_ref, win_ref, *, tm, slope):
    cp = o_ref.shape[-1]
    # assemble contiguous (tm + HALO_BLK, Cz) window with aligned stores only
    win_ref[pl.ds(0, tm), :] = zc_ref[0]
    win_ref[pl.ds(tm, HALO_BLK), :] = zr_ref[0]
    acc = jnp.zeros((tm, cp), jnp.float32)
    for k in range(2):                                      # static, unrolled
        xk = win_ref[pl.ds(k, tm), :]
        acc = acc + jnp.dot(xk.astype(jnp.bfloat16), w_ref[k],
                            preferred_element_type=jnp.float32)
    y = acc + shift_ref[...]                                # conv bias + folded BN
    o_ref[0] = jnp.where(y >= 0, y, slope * y).astype(o_ref.dtype)


# ----------------------------------------------------------------------------
# Kernel 2: fused tail = conv_last (k=3, p=1) + all ResBlocks + trailing act.
# scratch row j  <->  global row  i*tm - HALO_BLK + j.
# ----------------------------------------------------------------------------
def _tail_kernel(xl_ref, xc_ref, xr_ref, wl_ref, bl_ref, w1_ref, b1_ref,
                 w2_ref, b2_ref, o_ref, win_ref, *, tm, n_res, l_valid, slope):
    cp = o_ref.shape[-1]
    R = n_res
    H = R + 1                                               # halo rows per side

    win_ref[pl.ds(0, HALO_BLK), :] = xl_ref[0]              # last 8 rows of prev tile
    win_ref[pl.ds(HALO_BLK, tm), :] = xc_ref[0]             # center tile
    win_ref[pl.ds(HALO_BLK + tm, HALO_BLK), :] = xr_ref[0]  # first 8 rows of next

    s = pl.program_id(1) * tm
    rows = tm + 2 * HALO_BLK
    gid = s - HALO_BLK + jax.lax.broadcasted_iota(jnp.int32, (rows, 1), 0)
    # 0/1 row mask: implements conv zero padding AND zeroes garbage rows of the
    # previous stage's padded output (rows >= l_valid).
    valid = ((gid >= 0) & (gid < l_valid)).astype(jnp.float32)

    # ---- conv_last ----
    e0 = tm + 2 * R
    lo = HALO_BLK - H
    x0 = win_ref[pl.ds(lo, e0 + 2), :] * valid[lo:lo + e0 + 2]
    acc = jnp.zeros((e0, cp), jnp.float32)
    for k in range(3):
        acc = acc + jnp.dot(x0[k:k + e0].astype(jnp.bfloat16), wl_ref[k],
                            preferred_element_type=jnp.float32)
    u = acc + bl_ref[...]

    # ---- ResBlocks:  u <- u + conv1x1( act( conv3( act(u) ) + b1 ) ) + b2 ----
    for r in range(R):
        e_in = tm + 2 * (R - r)
        e_out = e_in - 2
        lo = HALO_BLK - (R - r)
        a = jnp.where(u >= 0, u, slope * u) * valid[lo:lo + e_in]   # act + zero pad
        acc = jnp.zeros((e_out, cp), jnp.float32)
        for k in range(3):
            acc = acc + jnp.dot(a[k:k + e_out].astype(jnp.bfloat16),
                                w1_ref[3 * r + k],
                                preferred_element_type=jnp.float32)
        t = acc + b1_ref[r]
        m = jnp.where(t >= 0, t, slope * t)
        v = jnp.dot(m.astype(jnp.bfloat16), w2_ref[r],
                    preferred_element_type=jnp.float32) + b2_ref[r]
        u = u[1:1 + e_out] + v                              # residual skip

    # encoder's trailing LeakyReLU
    o_ref[0] = jnp.where(u >= 0, u, slope * u).astype(o_ref.dtype)


# ----------------------------------------------------------------------------
# Host glue
# ----------------------------------------------------------------------------
def _downsample_stage(h_cl, l_in, w, b, bn, cp):
    """Conv1d(k=4, s=2, p=1) [+ folded BN] + LeakyReLU.
    h_cl: (B, >=l_in, c_eff) channels-last f32.  Returns ((B, n*tm, cp), l_out)."""
    B = h_cl.shape[0]
    c_eff = h_cl.shape[-1]
    cout, cin, _k = w.shape
    l_out = l_in // 2
    tm = _pick_tm(l_out)
    n_tiles = pl.cdiv(l_out, tm)
    cz = _round_up(2 * c_eff, LANE)

    # Host prep (cheap for layer 0): conv zero pad, row-pair merge (stride-2 ->
    # stride-1) and zero tail so the kernel window [i*tm, i*tm+tm+8) is in bounds.
    rows = 2 * (n_tiles * tm + HALO_BLK)
    x = h_cl[:, :l_in, :]
    x = jnp.pad(x, ((0, 0), (1, rows - l_in - 1), (0, 0)))
    z = x.reshape(B, rows // 2, 2 * c_eff)
    z = jnp.pad(z, ((0, 0), (0, 0), (0, cz - 2 * c_eff)))

    # Weights: (cout, cin, 4) -> 2 merged taps of (cz -> cp), BN scale folded.
    wt = jnp.transpose(w, (2, 1, 0))                        # (4, cin, cout)
    if bn is not None:
        gamma, beta, mean, var = bn
        scale = gamma / jnp.sqrt(var + BN_EPS)
        shift = scale * (b - mean) + beta
        wt = wt * scale[None, None, :]
    else:
        shift = b
    wt = jnp.pad(wt, ((0, 0), (0, c_eff - cin), (0, cp - cout)))
    wm = wt.reshape(2, 2 * c_eff, cp)
    wm = jnp.pad(wm, ((0, 0), (0, cz - 2 * c_eff), (0, 0))).astype(jnp.bfloat16)
    shift = jnp.pad(shift, (0, cp - cout)).reshape(1, cp).astype(jnp.float32)

    tpb = tm // HALO_BLK
    flops = 2 * B * n_tiles * tm * cz * cp * 2
    bytes_acc = (z.size * 4 + wm.size * 2 + shift.size * 4
                 + B * n_tiles * tm * cp * 4)
    out = pl.pallas_call(
        functools.partial(_down_kernel, tm=tm, slope=LEAKY_SLOPE),
        grid=(B, n_tiles),
        in_specs=[
            pl.BlockSpec((1, tm, cz), lambda b_, i: (b_, i, 0)),
            pl.BlockSpec((1, HALO_BLK, cz), lambda b_, i: (b_, (i + 1) * tpb, 0)),
            pl.BlockSpec((2, cz, cp), lambda b_, i: (0, 0, 0)),
            pl.BlockSpec((1, cp), lambda b_, i: (0, 0)),
        ],
        out_specs=pl.BlockSpec((1, tm, cp), lambda b_, i: (b_, i, 0)),
        out_shape=jax.ShapeDtypeStruct((B, n_tiles * tm, cp), jnp.float32),
        scratch_shapes=[pltpu.VMEM((tm + HALO_BLK, cz), jnp.float32)],
        compiler_params=pltpu.CompilerParams(
            dimension_semantics=("parallel", "parallel"),
            vmem_limit_bytes=VMEM_LIMIT),
        cost_estimate=pl.CostEstimate(flops=int(flops), transcendentals=0,
                                      bytes_accessed=int(bytes_acc)),
    )(z, z, wm, shift)
    return out, l_out


def _fold_taps(w, b, cp):
    """(cout, cin, K) PyTorch conv weight -> (K, cp, cp) bf16 taps, (1, cp) f32 bias."""
    cout, cin, _ = w.shape
    wt = jnp.transpose(w, (2, 1, 0))
    wt = jnp.pad(wt, ((0, 0), (0, cp - cin), (0, cp - cout))).astype(jnp.bfloat16)
    bs = jnp.pad(b, (0, cp - cout)).reshape(1, cp).astype(jnp.float32)
    return wt, bs


def _tail_stage(h, l_valid, wl, bl, res_blocks, cp):
    """conv_last + all ResBlocks + trailing LeakyReLU in ONE pallas_call.
    h: (B, Lh, cp) f32 where rows >= l_valid may be garbage (masked in-kernel)."""
    B = h.shape[0]
    n_res = len(res_blocks)
    if n_res + 1 > HALO_BLK:
        raise NotImplementedError("n_res_block > 7 needs a wider halo block")
    tm = _pick_tm(l_valid)
    n_tiles = pl.cdiv(l_valid, tm)

    # guard (no-op in the normal flow): tile range covered, 8-row aligned.
    need = max(n_tiles * tm, HALO_BLK)
    lh = h.shape[1]
    if lh < need or lh % SUB:
        h = jnp.pad(h, ((0, 0), (0, _round_up(max(need, lh), SUB) - lh), (0, 0)))
        lh = h.shape[1]

    wlt, bls = _fold_taps(wl, bl, cp)
    if n_res:
        w1s = jnp.concatenate([_fold_taps(rb["w1"], rb["b1"], cp)[0]
                               for rb in res_blocks], axis=0)       # (3R, cp, cp)
        b1s = jnp.stack([_fold_taps(rb["w1"], rb["b1"], cp)[1]
                         for rb in res_blocks])                     # (R, 1, cp)
        w2s = jnp.stack([_fold_taps(rb["w2"], rb["b2"], cp)[0][0]
                         for rb in res_blocks])                     # (R, cp, cp)
        b2s = jnp.stack([_fold_taps(rb["w2"], rb["b2"], cp)[1]
                         for rb in res_blocks])                     # (R, 1, cp)
    else:  # dummies (never read by the kernel)
        w1s = jnp.zeros((3, cp, cp), jnp.bfloat16)
        b1s = jnp.zeros((1, 1, cp), jnp.float32)
        w2s = jnp.zeros((1, cp, cp), jnp.bfloat16)
        b2s = jnp.zeros((1, 1, cp), jnp.float32)

    tpb = tm // HALO_BLK
    max_blk = lh // HALO_BLK - 1
    flops = 2 * B * n_tiles * tm * cp * cp * (3 + 4 * n_res)
    bytes_acc = (B * n_tiles * (tm + 2 * HALO_BLK) * cp * 4
                 + (wlt.size + w1s.size + w2s.size) * 2
                 + (bls.size + b1s.size + b2s.size) * 4
                 + B * n_tiles * tm * cp * 4)
    kernel = functools.partial(_tail_kernel, tm=tm, n_res=n_res,
                               l_valid=l_valid, slope=LEAKY_SLOPE)
    out = pl.pallas_call(
        kernel,
        grid=(B, n_tiles),
        in_specs=[
            pl.BlockSpec((1, HALO_BLK, cp),
                         lambda b_, i: (b_, jnp.maximum(i * tpb - 1, 0), 0)),
            pl.BlockSpec((1, tm, cp), lambda b_, i: (b_, i, 0)),
            pl.BlockSpec((1, HALO_BLK, cp),
                         lambda b_, i: (b_, jnp.minimum((i + 1) * tpb, max_blk), 0)),
            pl.BlockSpec((3, cp, cp), lambda b_, i: (0, 0, 0)),
            pl.BlockSpec((1, cp), lambda b_, i: (0, 0)),
            pl.BlockSpec(w1s.shape, lambda b_, i: (0, 0, 0)),
            pl.BlockSpec(b1s.shape, lambda b_, i: (0, 0, 0)),
            pl.BlockSpec(w2s.shape, lambda b_, i: (0, 0, 0)),
            pl.BlockSpec(b2s.shape, lambda b_, i: (0, 0, 0)),
        ],
        out_specs=pl.BlockSpec((1, tm, cp), lambda b_, i: (b_, i, 0)),
        out_shape=jax.ShapeDtypeStruct((B, n_tiles * tm, cp), jnp.float32),
        scratch_shapes=[pltpu.VMEM((tm + 2 * HALO_BLK, cp), jnp.float32)],
        compiler_params=pltpu.CompilerParams(
            dimension_semantics=("parallel", "parallel"),
            vmem_limit_bytes=VMEM_LIMIT),
        cost_estimate=pl.CostEstimate(flops=int(flops), transcendentals=0,
                                      bytes_accessed=int(bytes_acc)),
    )(h, h, h, wlt, bls, w1s, b1s, w2s, b2s)
    return out


# ----------------------------------------------------------------------------
# MelEncoder forward
# ----------------------------------------------------------------------------
def mel_encoder_forward(x_ncl, params):
    """x_ncl: (B, in_channel, L) f32 (PyTorch NCL).  Returns (B, channel, L_out)."""
    B, cin, L = x_ncl.shape
    stride = params["stride"]
    channel = params["conv_last"][0].shape[0]
    cp = _round_up(channel, LANE)

    # channels-last; in_channel is NOT lane-padded here: the downsample stage
    # merges the conv taps into the contraction dim before padding.
    h = jnp.transpose(x_ncl, (0, 2, 1)).astype(jnp.float32)

    w0, b0 = params["conv0"]
    h, l_cur = _downsample_stage(h, L, w0, b0, params["bn0"], cp)
    if stride == 4:
        w1, b1 = params["conv1"]
        h, l_cur = _downsample_stage(h, l_cur, w1, b1, params["bn1"], cp)

    wl, bl = params["conv_last"]
    h = _tail_stage(h, l_cur, wl, bl, params["res_blocks"], cp)

    out = h[:, :l_cur, :channel]                 # drop padded rows / channels
    return jnp.transpose(out, (0, 2, 1))         # back to (B, channel, L_out)


# ----------------------------------------------------------------------------
# Parameter init (deterministic, weights_init-style)
# ----------------------------------------------------------------------------
def _conv_params(key, cout, cin, k):
    kw, kb = jax.random.split(key)
    w = 0.02 * jax.random.normal(kw, (cout, cin, k), jnp.float32)
    b = 0.01 * jax.random.normal(kb, (cout,), jnp.float32)
    return w, b


def _bn_params(key, c):
    gamma = 1.0 + 0.02 * jax.random.normal(key, (c,), jnp.float32)
    beta = jnp.zeros((c,), jnp.float32)
    r_mean = jnp.zeros((c,), jnp.float32)
    r_var = jnp.ones((c,), jnp.float32)
    return gamma, beta, r_mean, r_var


def init_mel_encoder_params(key, in_channel, channel, stride, n_res_block=3):
    keys = jax.random.split(key, 8 + 4 * max(n_res_block, 1))
    p = {"stride": stride}
    if stride == 2:
        p["conv0"] = _conv_params(keys[0], channel, in_channel, 4)
        p["bn0"] = _bn_params(keys[1], channel)
        p["conv_last"] = _conv_params(keys[2], channel, channel, 3)
    elif stride == 4:
        p["conv0"] = _conv_params(keys[0], channel, in_channel, 4)
        p["bn0"] = _bn_params(keys[1], channel)
        p["conv1"] = _conv_params(keys[2], channel, channel, 4)
        p["bn1"] = _bn_params(keys[3], channel)
        p["conv_last"] = _conv_params(keys[4], channel, channel, 3)
    else:
        raise ValueError("stride must be 2 or 4")
    res = []
    for i in range(n_res_block):
        w1, b1 = _conv_params(keys[8 + 4 * i], channel, channel, 3)
        w2, b2 = _conv_params(keys[8 + 4 * i + 1], channel, channel, 1)
        res.append({"w1": w1, "b1": b1, "w2": w2, "b2": b2})
    p["res_blocks"] = res
    return p


# ----------------------------------------------------------------------------
# Pure-JAX reference (for a tolerance check against the Pallas path)
# ----------------------------------------------------------------------------
def _reference_forward(x, params):
    def conv1d(h, w, b, s, p):
        y = jax.lax.conv_general_dilated(
            h, w, window_strides=(s,), padding=[(p, p)],
            dimension_numbers=("NCH", "OIH", "NCH"),
            precision=jax.lax.Precision.HIGHEST)
        return y + b[None, :, None]

    def bn(h, bnp):
        g, be, m, v = bnp
        return (g[None, :, None] * (h - m[None, :, None])
                / jnp.sqrt(v[None, :, None] + BN_EPS) + be[None, :, None])

    def leaky(h):
        return jnp.where(h >= 0, h, LEAKY_SLOPE * h)

    w0, b0 = params["conv0"]
    h = leaky(bn(conv1d(x, w0, b0, 2, 1), params["bn0"]))
    if params["stride"] == 4:
        w1, b1 = params["conv1"]
        h = leaky(bn(conv1d(h, w1, b1, 2, 1), params["bn1"]))
    wl, bl = params["conv_last"]
    h = conv1d(h, wl, bl, 1, 1)
    for rb in params["res_blocks"]:
        t = conv1d(leaky(h), rb["w1"], rb["b1"], 1, 1)
        h = h + conv1d(leaky(t), rb["w2"], rb["b2"], 1, 0)
    return leaky(h)


# ----------------------------------------------------------------------------
if __name__ == "__main__":
    key = jax.random.PRNGKey(0)
    k_param, k_input = jax.random.split(key)

    B, IN_CH, CH, L = 2, 8, 32, 32
    STRIDE, N_RES = 2, 3

    params = init_mel_encoder_params(k_param, IN_CH, CH, STRIDE, N_RES)
    x = jax.random.normal(k_input, (B, IN_CH, L), jnp.float32)   # PyTorch NCL layout

    fwd = jax.jit(functools.partial(mel_encoder_forward, params=params))
    out = jax.block_until_ready(fwd(x))

    expected_L = L // STRIDE
    assert out.shape == (B, CH, expected_L), out.shape
    assert out.dtype == jnp.float32
    assert bool(jnp.all(jnp.isfinite(out)))

    ref = _reference_forward(x, params)
    err = float(jnp.max(jnp.abs(out - ref)))
    assert err < 1e-2, f"max abs err vs reference = {err}"   # bf16-MXU tolerance

    print("KERNEL_OK")
</pallas_src>

<mosaic_0001>
module attributes {stable_mosaic.version = 11 : i64} {
  func.func @_down_kernel(%arg0: i32, %arg1: i32, %arg2: memref<1x16x128xf32, #tpu.memory_space<vmem>>, %arg3: memref<1x8x128xf32, #tpu.memory_space<vmem>>, %arg4: memref<2x128x128xbf16, #tpu.memory_space<vmem>>, %arg5: memref<1x128xf32, #tpu.memory_space<vmem>>, %arg6: memref<1x16x128xf32, #tpu.memory_space<vmem>>, %arg7: memref<24x128xf32, #tpu.memory_space<vmem>>) attributes {dimension_semantics = [#tpu.dimension_semantics<parallel>, #tpu.dimension_semantics<parallel>], iteration_bounds = array<i64: 2, 1>, scalar_prefetch = 0 : i64, scratch_operands = 1 : i64, tpu.core_type = #tpu.core_type<tc>, window_params = [{transform_indices = @transform_0, window_bounds = array<i64: 1, 16, 128>}, {transform_indices = @transform_1, window_bounds = array<i64: 1, 8, 128>}, {pipeline_mode = #tpu.pipeline_mode<synchronous>, transform_indices = @transform_2, window_bounds = array<i64: 2, 128, 128>}, {pipeline_mode = #tpu.pipeline_mode<synchronous>, transform_indices = @transform_3, window_bounds = array<i64: 1, 128>}, {transform_indices = @transform_4, window_bounds = array<i64: 1, 16, 128>}]} {
    %c0 = arith.constant 0 : index
    %c0_0 = arith.constant 0 : index
    %c0_1 = arith.constant 0 : index
    %0 = vector.load %arg2[%c0, %c0_0, %c0_1] : memref<1x16x128xf32, #tpu.memory_space<vmem>>, vector<1x16x128xf32>
    %1 = vector.shape_cast %0 : vector<1x16x128xf32> to vector<16x128xf32>
    %c0_2 = arith.constant 0 : index
    %c0_3 = arith.constant 0 : index
    %2 = vector.load %arg7[%c0_2, %c0_3] : memref<24x128xf32, #tpu.memory_space<vmem>>, vector<16x128xf32>
    tpu.vector_store %arg7[%c0_2, %c0_3], %1 {strides = array<i32>} : memref<24x128xf32, #tpu.memory_space<vmem>>, vector<16x128xf32>,
    %c0_4 = arith.constant 0 : index
    %c0_5 = arith.constant 0 : index
    %c0_6 = arith.constant 0 : index
    %3 = vector.load %arg3[%c0_4, %c0_5, %c0_6] : memref<1x8x128xf32, #tpu.memory_space<vmem>>, vector<1x8x128xf32>
    %4 = vector.shape_cast %3 : vector<1x8x128xf32> to vector<8x128xf32>
    %c16 = arith.constant 16 : index
    %c0_7 = arith.constant 0 : index
    %5 = vector.load %arg7[%c16, %c0_7] : memref<24x128xf32, #tpu.memory_space<vmem>>, vector<8x128xf32>
    tpu.vector_store %arg7[%c16, %c0_7], %4 {strides = array<i32>} : memref<24x128xf32, #tpu.memory_space<vmem>>, vector<8x128xf32>,
    %cst = arith.constant 0.000000e+00 : f32
    %6 = vector.broadcast %cst : f32 to vector<16x128xf32>
    %c0_8 = arith.constant 0 : index
    %c0_9 = arith.constant 0 : index
    %7 = vector.load %arg7[%c0_8, %c0_9] : memref<24x128xf32, #tpu.memory_space<vmem>>, vector<16x128xf32>
    %8 = arith.truncf %7 : vector<16x128xf32> to vector<16x128xbf16>
    %c0_10 = arith.constant 0 : index
    %c0_11 = arith.constant 0 : index
    %c0_12 = arith.constant 0 : index
    %9 = vector.load %arg4[%c0_10, %c0_11, %c0_12] : memref<2x128x128xbf16, #tpu.memory_space<vmem>>, vector<1x128x128xbf16>
    %10 = vector.shape_cast %9 : vector<1x128x128xbf16> to vector<128x128xbf16>
    %cst_13 = arith.constant dense<0.000000e+00> : vector<16x128xf32>
    %11 = tpu.matmul %8, %10, %cst_13 {dimension_numbers = #tpu.dot_dimension_numbers<[1], [0], [0], [1], [0, 0, 1, 1], [], []>} : vector<16x128xbf16>, vector<128x128xbf16>, vector<16x128xf32> -> vector<16x128xf32>
    %12 = arith.addf %6, %11 : vector<16x128xf32>
    %c1 = arith.constant 1 : index
    %c0_14 = arith.constant 0 : index
    %13 = vector.load %arg7[%c1, %c0_14] : memref<24x128xf32, #tpu.memory_space<vmem>>, vector<16x128xf32>
    %14 = arith.truncf %13 : vector<16x128xf32> to vector<16x128xbf16>
    %c1_15 = arith.constant 1 : index
    %c0_16 = arith.constant 0 : index
    %c0_17 = arith.constant 0 : index
    %15 = vector.load %arg4[%c1_15, %c0_16, %c0_17] : memref<2x128x128xbf16, #tpu.memory_space<vmem>>, vector<1x128x128xbf16>
    %16 = vector.shape_cast %15 : vector<1x128x128xbf16> to vector<128x128xbf16>
    %cst_18 = arith.constant dense<0.000000e+00> : vector<16x128xf32>
    %17 = tpu.matmul %14, %16, %cst_18 {dimension_numbers = #tpu.dot_dimension_numbers<[1], [0], [0], [1], [0, 0, 1, 1], [], []>} : vector<16x128xbf16>, vector<128x128xbf16>, vector<16x128xf32> -> vector<16x128xf32>
    %18 = arith.addf %12, %17 : vector<16x128xf32>
    %c0_19 = arith.constant 0 : index
    %c0_20 = arith.constant 0 : index
    %19 = vector.load %arg5[%c0_19, %c0_20] : memref<1x128xf32, #tpu.memory_space<vmem>>, vector<1x128xf32>
    %20 = vector.broadcast %19 : vector<1x128xf32> to vector<16x128xf32>
    %21 = arith.addf %18, %20 : vector<16x128xf32>
    %cst_21 = arith.constant 0.000000e+00 : f32
    %22 = vector.broadcast %cst_21 : f32 to vector<16x128xf32>
    %23 = arith.cmpf oge, %21, %22 : vector<16x128xf32>
    %cst_22 = arith.constant 0.00999999977 : f32
    %24 = vector.broadcast %cst_22 : f32 to vector<16x128xf32>
    %25 = arith.mulf %24, %21 : vector<16x128xf32>
    %26 = arith.select %23, %21, %25 : vector<16x128xi1>, vector<16x128xf32>
    %c0_23 = arith.constant 0 : index
    %c0_24 = arith.constant 0 : index
    %c0_25 = arith.constant 0 : index
    %27 = vector.load %arg6[%c0_23, %c0_24, %c0_25] : memref<1x16x128xf32, #tpu.memory_space<vmem>>, vector<1x16x128xf32>
    %28 = vector.shape_cast %27 : vector<1x16x128xf32> to vector<16x128xf32>
    %29 = vector.shape_cast %26 : vector<16x128xf32> to vector<1x16x128xf32>
    tpu.vector_store %arg6[%c0_23, %c0_24, %c0_25], %29 {strides = array<i32>} : memref<1x16x128xf32, #tpu.memory_space<vmem>>, vector<1x16x128xf32>,
    return
  }
  func.func @transform_0(%arg0: i32, %arg1: i32) -> (i32, i32, i32) {
    %c0_i32 = arith.constant 0 : i32
    %c0_i32_0 = arith.constant 0 : i32
    return %arg0, %arg1, %c0_i32 : i32, i32, i32
  }
  func.func @transform_1(%arg0: i32, %arg1: i32) -> (i32, i32, i32) {
    %c1_i32 = arith.constant 1 : i32
    %0 = arith.addi %arg1, %c1_i32 : i32
    %c2_i32 = arith.constant 2 : i32
    %1 = arith.muli %0, %c2_i32 : i32
    %c0_i32 = arith.constant 0 : i32
    %c0_i32_0 = arith.constant 0 : i32
    return %arg0, %1, %c0_i32 : i32, i32, i32
  }
  func.func @transform_2(%arg0: i32, %arg1: i32) -> (i32, i32, i32) {
    %c0_i32 = arith.constant 0 : i32
    %c0_i32_0 = arith.constant 0 : i32
    %c0_i32_1 = arith.constant 0 : i32
    %c0_i32_2 = arith.constant 0 : i32
    return %c0_i32, %c0_i32_0, %c0_i32_1 : i32, i32, i32
  }
  func.func @transform_3(%arg0: i32, %arg1: i32) -> (i32, i32) {
    %c0_i32 = arith.constant 0 : i32
    %c0_i32_0 = arith.constant 0 : i32
    %c0_i32_1 = arith.constant 0 : i32
    return %c0_i32, %c0_i32_0 : i32, i32
  }
  func.func @transform_4(%arg0: i32, %arg1: i32) -> (i32, i32, i32) {
    %c0_i32 = arith.constant 0 : i32
    %c0_i32_0 = arith.constant 0 : i32
    return %arg0, %arg1, %c0_i32 : i32, i32, i32
  }
}

module attributes {stable_mosaic.version = 11 : i64} {
  func.func @_tail_kernel(%arg0: i32, %arg1: i32, %arg2: memref<1x8x128xf32, #tpu.memory_space<vmem>>, %arg3: memref<1x16x128xf32, #tpu.memory_space<vmem>>, %arg4: memref<1x8x128xf32, #tpu.memory_space<vmem>>, %arg5: memref<3x128x128xbf16, #tpu.memory_space<vmem>>, %arg6: memref<1x128xf32, #tpu.memory_space<vmem>>, %arg7: memref<9x128x128xbf16, #tpu.memory_space<vmem>>, %arg8: memref<3x1x128xf32, #tpu.memory_space<vmem>>, %arg9: memref<3x128x128xbf16, #tpu.memory_space<vmem>>, %arg10: memref<3x1x128xf32, #tpu.memory_space<vmem>>, %arg11: memref<1x16x128xf32, #tpu.memory_space<vmem>>, %arg12: memref<32x128xf32, #tpu.memory_space<vmem>>) attributes {dimension_semantics = [#tpu.dimension_semantics<parallel>, #tpu.dimension_semantics<parallel>], iteration_bounds = array<i64: 2, 1>, scalar_prefetch = 0 : i64, scratch_operands = 1 : i64, tpu.core_type = #tpu.core_type<tc>, window_params = [{transform_indices = @transform_0, window_bounds = array<i64: 1, 8, 128>}, {transform_indices = @transform_1, window_bounds = array<i64: 1, 16, 128>}, {transform_indices = @transform_2, window_bounds = array<i64: 1, 8, 128>}, {pipeline_mode = #tpu.pipeline_mode<synchronous>, transform_indices = @transform_3, window_bounds = array<i64: 3, 128, 128>}, {pipeline_mode = #tpu.pipeline_mode<synchronous>, transform_indices = @transform_4, window_bounds = array<i64: 1, 128>}, {pipeline_mode = #tpu.pipeline_mode<synchronous>, transform_indices = @transform_5, window_bounds = array<i64: 9, 128, 128>}, {pipeline_mode = #tpu.pipeline_mode<synchronous>, transform_indices = @transform_6, window_bounds = array<i64: 3, 1, 128>}, {pipeline_mode = #tpu.pipeline_mode<synchronous>, transform_indices = @transform_7, window_bounds = array<i64: 3, 128, 128>}, {pipeline_mode = #tpu.pipeline_mode<synchronous>, transform_indices = @transform_8, window_bounds = array<i64: 3, 1, 128>}, {transform_indices = @transform_9, window_bounds = array<i64: 1, 16, 128>}]} {
    %c0 = arith.constant 0 : index
    %c0_0 = arith.constant 0 : index
    %c0_1 = arith.constant 0 : index
    %0 = vector.load %arg2[%c0, %c0_0, %c0_1] : memref<1x8x128xf32, #tpu.memory_space<vmem>>, vector<1x8x128xf32>
    %1 = vector.shape_cast %0 : vector<1x8x128xf32> to vector<8x128xf32>
    %c0_2 = arith.constant 0 : index
    %c0_3 = arith.constant 0 : index
    %2 = vector.load %arg12[%c0_2, %c0_3] : memref<32x128xf32, #tpu.memory_space<vmem>>, vector<8x128xf32>
    tpu.vector_store %arg12[%c0_2, %c0_3], %1 {strides = array<i32>} : memref<32x128xf32, #tpu.memory_space<vmem>>, vector<8x128xf32>,
    %c0_4 = arith.constant 0 : index
    %c0_5 = arith.constant 0 : index
    %c0_6 = arith.constant 0 : index
    %3 = vector.load %arg3[%c0_4, %c0_5, %c0_6] : memref<1x16x128xf32, #tpu.memory_space<vmem>>, vector<1x16x128xf32>
    %4 = vector.shape_cast %3 : vector<1x16x128xf32> to vector<16x128xf32>
    %c8 = arith.constant 8 : index
    %c0_7 = arith.constant 0 : index
    %5 = vector.load %arg12[%c8, %c0_7] : memref<32x128xf32, #tpu.memory_space<vmem>>, vector<16x128xf32>
    tpu.vector_store %arg12[%c8, %c0_7], %4 {strides = array<i32>} : memref<32x128xf32, #tpu.memory_space<vmem>>, vector<16x128xf32>,
    %c0_8 = arith.constant 0 : index
    %c0_9 = arith.constant 0 : index
    %c0_10 = arith.constant 0 : index
    %6 = vector.load %arg4[%c0_8, %c0_9, %c0_10] : memref<1x8x128xf32, #tpu.memory_space<vmem>>, vector<1x8x128xf32>
    %7 = vector.shape_cast %6 : vector<1x8x128xf32> to vector<8x128xf32>
    %c24 = arith.constant 24 : index
    %c0_11 = arith.constant 0 : index
    %8 = vector.load %arg12[%c24, %c0_11] : memref<32x128xf32, #tpu.memory_space<vmem>>, vector<8x128xf32>
    tpu.vector_store %arg12[%c24, %c0_11], %7 {strides = array<i32>} : memref<32x128xf32, #tpu.memory_space<vmem>>, vector<8x128xf32>,
    %c16_i32 = arith.constant 16 : i32
    %9 = arith.muli %arg1, %c16_i32 : i32
    %c8_i32 = arith.constant 8 : i32
    %10 = arith.subi %9, %c8_i32 : i32
    %11 = tpu.iota {dimensions = array<i32: 0>} : vector<32x1xi32>
    %12 = vector.broadcast %10 : i32 to vector<32x1xi32>
    %13 = arith.addi %12, %11 : vector<32x1xi32>
    %c0_i32 = arith.constant 0 : i32
    %14 = vector.broadcast %c0_i32 : i32 to vector<32x1xi32>
    %15 = arith.cmpi sge, %13, %14 : vector<32x1xi32>
    %c16_i32_12 = arith.constant 16 : i32
    %16 = vector.broadcast %c16_i32_12 : i32 to vector<32x1xi32>
    %17 = arith.cmpi slt, %13, %16 : vector<32x1xi32>
    %18 = arith.andi %15, %17 : vector<32x1xi1>
    %19 = arith.extui %18 : vector<32x1xi1> to vector<32x1xi32>
    %20 = arith.sitofp %19 : vector<32x1xi32> to vector<32x1xf32>
    %c4 = arith.constant 4 : index
    %c0_13 = arith.constant 0 : index
    %21 = vector.load %arg12[%c4, %c0_13] : memref<32x128xf32, #tpu.memory_space<vmem>>, vector<24x128xf32>
    %22 = vector.extract_strided_slice %20 {offsets = [4, 0], sizes = [24, 1], strides = [1, 1]} : vector<32x1xf32> to vector<24x1xf32>
    %23 = vector.broadcast %22 : vector<24x1xf32> to vector<24x128xf32>
    %24 = arith.mulf %21, %23 : vector<24x128xf32>
    %cst = arith.constant 0.000000e+00 : f32
    %25 = vector.broadcast %cst : f32 to vector<22x128xf32>
    %26 = vector.extract_strided_slice %24 {offsets = [0, 0], sizes = [22, 128], strides = [1, 1]} : vector<24x128xf32> to vector<22x128xf32>
    %27 = arith.truncf %26 : vector<22x128xf32> to vector<22x128xbf16>
    %c0_14 = arith.constant 0 : index
    %c0_15 = arith.constant 0 : index
    %c0_16 = arith.constant 0 : index
    %28 = vector.load %arg5[%c0_14, %c0_15, %c0_16] : memref<3x128x128xbf16, #tpu.memory_space<vmem>>, vector<1x128x128xbf16>
    %29 = vector.shape_cast %28 : vector<1x128x128xbf16> to vector<128x128xbf16>
    %cst_17 = arith.constant dense<0.000000e+00> : vector<22x128xf32>
    %30 = tpu.matmul %27, %29, %cst_17 {dimension_numbers = #tpu.dot_dimension_numbers<[1], [0], [0], [1], [0, 0, 1, 1], [], []>} : vector<22x128xbf16>, vector<128x128xbf16>, vector<22x128xf32> -> vector<22x128xf32>
    %31 = arith.addf %25, %30 : vector<22x128xf32>
    %32 = vector.extract_strided_slice %24 {offsets = [1, 0], sizes = [22, 128], strides = [1, 1]} : vector<24x128xf32> to vector<22x128xf32>
    %33 = arith.truncf %32 : vector<22x128xf32> to vector<22x128xbf16>
    %c1 = arith.constant 1 : index
    %c0_18 = arith.constant 0 : index
    %c0_19 = arith.constant 0 : index
    %34 = vector.load %arg5[%c1, %c0_18, %c0_19] : memref<3x128x128xbf16, #tpu.memory_space<vmem>>, vector<1x128x128xbf16>
    %35 = vector.shape_cast %34 : vector<1x128x128xbf16> to vector<128x128xbf16>
    %cst_20 = arith.constant dense<0.000000e+00> : vector<22x128xf32>
    %36 = tpu.matmul %33, %35, %cst_20 {dimension_numbers = #tpu.dot_dimension_numbers<[1], [0], [0], [1], [0, 0, 1, 1], [], []>} : vector<22x128xbf16>, vector<128x128xbf16>, vector<22x128xf32> -> vector<22x128xf32>
    %37 = arith.addf %31, %36 : vector<22x128xf32>
    %38 = vector.extract_strided_slice %24 {offsets = [2, 0], sizes = [22, 128], strides = [1, 1]} : vector<24x128xf32> to vector<22x128xf32>
    %39 = arith.truncf %38 : vector<22x128xf32> to vector<22x128xbf16>
    %c2 = arith.constant 2 : index
    %c0_21 = arith.constant 0 : index
    %c0_22 = arith.constant 0 : index
    %40 = vector.load %arg5[%c2, %c0_21, %c0_22] : memref<3x128x128xbf16, #tpu.memory_space<vmem>>, vector<1x128x128xbf16>
    %41 = vector.shape_cast %40 : vector<1x128x128xbf16> to vector<128x128xbf16>
    %cst_23 = arith.constant dense<0.000000e+00> : vector<22x128xf32>
    %42 = tpu.matmul %39, %41, %cst_23 {dimension_numbers = #tpu.dot_dimension_numbers<[1], [0], [0], [1], [0, 0, 1, 1], [], []>} : vector<22x128xbf16>, vector<128x128xbf16>, vector<22x128xf32> -> vector<22x128xf32>
    %43 = arith.addf %37, %42 : vector<22x128xf32>
    %c0_24 = arith.constant 0 : index
    %c0_25 = arith.constant 0 : index
    %44 = vector.load %arg6[%c0_24, %c0_25] : memref<1x128xf32, #tpu.memory_space<vmem>>, vector<1x128xf32>
    %45 = vector.broadcast %44 : vector<1x128xf32> to vector<22x128xf32>
    %46 = arith.addf %43, %45 : vector<22x128xf32>
    %cst_26 = arith.constant 0.000000e+00 : f32
    %47 = vector.broadcast %cst_26 : f32 to vector<22x128xf32>
    %48 = arith.cmpf oge, %46, %47 : vector<22x128xf32>
    %cst_27 = arith.constant 0.00999999977 : f32
    %49 = vector.broadcast %cst_27 : f32 to vector<22x128xf32>
    %50 = arith.mulf %49, %46 : vector<22x128xf32>
    %51 = arith.select %48, %46, %50 : vector<22x128xi1>, vector<22x128xf32>
    %52 = vector.extract_strided_slice %20 {offsets = [5, 0], sizes = [22, 1], strides = [1, 1]} : vector<32x1xf32> to vector<22x1xf32>
    %53 = vector.broadcast %52 : vector<22x1xf32> to vector<22x128xf32>
    %54 = arith.mulf %51, %53 : vector<22x128xf32>
    %cst_28 = arith.constant 0.000000e+00 : f32
    %55 = vector.broadcast %cst_28 : f32 to vector<20x128xf32>
    %56 = vector.extract_strided_slice %54 {offsets = [0, 0], sizes = [20, 128], strides = [1, 1]} : vector<22x128xf32> to vector<20x128xf32>
    %57 = arith.truncf %56 : vector<20x128xf32> to vector<20x128xbf16>
    %c0_29 = arith.constant 0 : index
    %c0_30 = arith.constant 0 : index
    %c0_31 = arith.constant 0 : index
    %58 = vector.load %arg7[%c0_29, %c0_30, %c0_31] : memref<9x128x128xbf16, #tpu.memory_space<vmem>>, vector<1x128x128xbf16>
    %59 = vector.shape_cast %58 : vector<1x128x128xbf16> to vector<128x128xbf16>
    %cst_32 = arith.constant dense<0.000000e+00> : vector<20x128xf32>
    %60 = tpu.matmul %57, %59, %cst_32 {dimension_numbers = #tpu.dot_dimension_numbers<[1], [0], [0], [1], [0, 0, 1, 1], [], []>} : vector<20x128xbf16>, vector<128x128xbf16>, vector<20x128xf32> -> vector<20x128xf32>
    %61 = arith.addf %55, %60 : vector<20x128xf32>
    %62 = vector.extract_strided_slice %54 {offsets = [1, 0], sizes = [20, 128], strides = [1, 1]} : vector<22x128xf32> to vector<20x128xf32>
    %63 = arith.truncf %62 : vector<20x128xf32> to vector<20x128xbf16>
    %c1_33 = arith.constant 1 : index
    %c0_34 = arith.constant 0 : index
    %c0_35 = arith.constant 0 : index
    %64 = vector.load %arg7[%c1_33, %c0_34, %c0_35] : memref<9x128x128xbf16, #tpu.memory_space<vmem>>, vector<1x128x128xbf16>
    %65 = vector.shape_cast %64 : vector<1x128x128xbf16> to vector<128x128xbf16>
    %cst_36 = arith.constant dense<0.000000e+00> : vector<20x128xf32>
    %66 = tpu.matmul %63, %65, %cst_36 {dimension_numbers = #tpu.dot_dimension_numbers<[1], [0], [0], [1], [0, 0, 1, 1], [], []>} : vector<20x128xbf16>, vector<128x128xbf16>, vector<20x128xf32> -> vector<20x128xf32>
    %67 = arith.addf %61, %66 : vector<20x128xf32>
    %68 = vector.extract_strided_slice %54 {offsets = [2, 0], sizes = [20, 128], strides = [1, 1]} : vector<22x128xf32> to vector<20x128xf32>
    %69 = arith.truncf %68 : vector<20x128xf32> to vector<20x128xbf16>
    %c2_37 = arith.constant 2 : index
    %c0_38 = arith.constant 0 : index
    %c0_39 = arith.constant 0 : index
    %70 = vector.load %arg7[%c2_37, %c0_38, %c0_39] : memref<9x128x128xbf16, #tpu.memory_space<vmem>>, vector<1x128x128xbf16>
    %71 = vector.shape_cast %70 : vector<1x128x128xbf16> to vector<128x128xbf16>
    %cst_40 = arith.constant dense<0.000000e+00> : vector<20x128xf32>
    %72 = tpu.matmul %69, %71, %cst_40 {dimension_numbers = #tpu.dot_dimension_numbers<[1], [0], [0], [1], [0, 0, 1, 1], [], []>} : vector<20x128xbf16>, vector<128x128xbf16>, vector<20x128xf32> -> vector<20x128xf32>
    %73 = arith.addf %67, %72 : vector<20x128xf32>
    %c0_41 = arith.constant 0 : index
    %c0_42 = arith.constant 0 : index
    %c0_43 = arith.constant 0 : index
    %74 = vector.load %arg8[%c0_41, %c0_42, %c0_43] : memref<3x1x128xf32, #tpu.memory_space<vmem>>, vector<1x1x128xf32>
    %75 = vector.shape_cast %74 : vector<1x1x128xf32> to vector<1x128xf32>
    %76 = vector.broadcast %75 : vector<1x128xf32> to vector<20x128xf32>
    %77 = arith.addf %73, %76 : vector<20x128xf32>
    %cst_44 = arith.constant 0.000000e+00 : f32
    %78 = vector.broadcast %cst_44 : f32 to vector<20x128xf32>
    %79 = arith.cmpf oge, %77, %78 : vector<20x128xf32>
    %cst_45 = arith.constant 0.00999999977 : f32
    %80 = vector.broadcast %cst_45 : f32 to vector<20x128xf32>
    %81 = arith.mulf %80, %77 : vector<20x128xf32>
    %82 = arith.select %79, %77, %81 : vector<20x128xi1>, vector<20x128xf32>
    %83 = arith.truncf %82 : vector<20x128xf32> to vector<20x128xbf16>
    %c0_46 = arith.constant 0 : index
    %c0_47 = arith.constant 0 : index
    %c0_48 = arith.constant 0 : index
    %84 = vector.load %arg9[%c0_46, %c0_47, %c0_48] : memref<3x128x128xbf16, #tpu.memory_space<vmem>>, vector<1x128x128xbf16>
    %85 = vector.shape_cast %84 : vector<1x128x128xbf16> to vector<128x128xbf16>
    %cst_49 = arith.constant dense<0.000000e+00> : vector<20x128xf32>
    %86 = tpu.matmul %83, %85, %cst_49 {dimension_numbers = #tpu.dot_dimension_numbers<[1], [0], [0], [1], [0, 0, 1, 1], [], []>} : vector<20x128xbf16>, vector<128x128xbf16>, vector<20x128xf32> -> vector<20x128xf32>
    %c0_50 = arith.constant 0 : index
    %c0_51 = arith.constant 0 : index
    %c0_52 = arith.constant 0 : index
    %87 = vector.load %arg10[%c0_50, %c0_51, %c0_52] : memref<3x1x128xf32, #tpu.memory_space<vmem>>, vector<1x1x128xf32>
    %88 = vector.shape_cast %87 : vector<1x1x128xf32> to vector<1x128xf32>
    %89 = vector.broadcast %88 : vector<1x128xf32> to vector<20x128xf32>
    %90 = arith.addf %86, %89 : vector<20x128xf32>
    %91 = vector.extract_strided_slice %46 {offsets = [1, 0], sizes = [20, 128], strides = [1, 1]} : vector<22x128xf32> to vector<20x128xf32>
    %92 = arith.addf %91, %90 : vector<20x128xf32>
    %cst_53 = arith.constant 0.000000e+00 : f32
    %93 = vector.broadcast %cst_53 : f32 to vector<20x128xf32>
    %94 = arith.cmpf oge, %92, %93 : vector<20x128xf32>
    %cst_54 = arith.constant 0.00999999977 : f32
    %95 = vector.broadcast %cst_54 : f32 to vector<20x128xf32>
    %96 = arith.mulf %95, %92 : vector<20x128xf32>
    %97 = arith.select %94, %92, %96 : vector<20x128xi1>, vector<20x128xf32>
    %98 = vector.extract_strided_slice %20 {offsets = [6, 0], sizes = [20, 1], strides = [1, 1]} : vector<32x1xf32> to vector<20x1xf32>
    %99 = vector.broadcast %98 : vector<20x1xf32> to vector<20x128xf32>
    %100 = arith.mulf %97, %99 : vector<20x128xf32>
    %cst_55 = arith.constant 0.000000e+00 : f32
    %101 = vector.broadcast %cst_55 : f32 to vector<18x128xf32>
    %102 = vector.extract_strided_slice %100 {offsets = [0, 0], sizes = [18, 128], strides = [1, 1]} : vector<20x128xf32> to vector<18x128xf32>
    %103 = arith.truncf %102 : vector<18x128xf32> to vector<18x128xbf16>
    %c3 = arith.constant 3 : index
    %c0_56 = arith.constant 0 : index
    %c0_57 = arith.constant 0 : index
    %104 = vector.load %arg7[%c3, %c0_56, %c0_57] : memref<9x128x128xbf16, #tpu.memory_space<vmem>>, vector<1x128x128xbf16>
    %105 = vector.shape_cast %104 : vector<1x128x128xbf16> to vector<128x128xbf16>
    %cst_58 = arith.constant dense<0.000000e+00> : vector<18x128xf32>
    %106 = tpu.matmul %103, %105, %cst_58 {dimension_numbers = #tpu.dot_dimension_numbers<[1], [0], [0], [1], [0, 0, 1, 1], [], []>} : vector<18x128xbf16>, vector<128x128xbf16>, vector<18x128xf32> -> vector<18x128xf32>
    %107 = arith.addf %101, %106 : vector<18x128xf32>
    %108 = vector.extract_strided_slice %100 {offsets = [1, 0], sizes = [18, 128], strides = [1, 1]} : vector<20x128xf32> to vector<18x128xf32>
    %109 = arith.truncf %108 : vector<18x128xf32> to vector<18x128xbf16>
    %c4_59 = arith.constant 4 : index
    %c0_60 = arith.constant 0 : index
    %c0_61 = arith.constant 0 : index
    %110 = vector.load %arg7[%c4_59, %c0_60, %c0_61] : memref<9x128x128xbf16, #tpu.memory_space<vmem>>, vector<1x128x128xbf16>
    %111 = vector.shape_cast %110 : vector<1x128x128xbf16> to vector<128x128xbf16>
    %cst_62 = arith.constant dense<0.000000e+00> : vector<18x128xf32>
    %112 = tpu.matmul %109, %111, %cst_62 {dimension_numbers = #tpu.dot_dimension_numbers<[1], [0], [0], [1], [0, 0, 1, 1], [], []>} : vector<18x128xbf16>, vector<128x128xbf16>, vector<18x128xf32> -> vector<18x128xf32>
    %113 = arith.addf %107, %112 : vector<18x128xf32>
    %114 = vector.extract_strided_slice %100 {offsets = [2, 0], sizes = [18, 128], strides = [1, 1]} : vector<20x128xf32> to vector<18x128xf32>
    %115 = arith.truncf %114 : vector<18x128xf32> to vector<18x128xbf16>
    %c5 = arith.constant 5 : index
    %c0_63 = arith.constant 0 : index
    %c0_64 = arith.constant 0 : index
    %116 = vector.load %arg7[%c5, %c0_63, %c0_64] : memref<9x128x128xbf16, #tpu.memory_space<vmem>>, vector<1x128x128xbf16>
    %117 = vector.shape_cast %116 : vector<1x128x128xbf16> to vector<128x128xbf16>
    %cst_65 = arith.constant dense<0.000000e+00> : vector<18x128xf32>
    %118 = tpu.matmul %115, %117, %cst_65 {dimension_numbers = #tpu.dot_dimension_numbers<[1], [0], [0], [1], [0, 0, 1, 1], [], []>} : vector<18x128xbf16>, vector<128x128xbf16>, vector<18x128xf32> -> vector<18x128xf32>
    %119 = arith.addf %113, %118 : vector<18x128xf32>
    %c1_66 = arith.constant 1 : index
    %c0_67 = arith.constant 0 : index
    %c0_68 = arith.constant 0 : index
    %120 = vector.load %arg8[%c1_66, %c0_67, %c0_68] : memref<3x1x128xf32, #tpu.memory_space<vmem>>, vector<1x1x128xf32>
    %121 = vector.shape_cast %120 : vector<1x1x128xf32> to vector<1x128xf32>
    %122 = vector.broadcast %121 : vector<1x128xf32> to vector<18x128xf32>
    %123 = arith.addf %119, %122 : vector<18x128xf32>
    %cst_69 = arith.constant 0.000000e+00 : f32
    %124 = vector.broadcast %cst_69 : f32 to vector<18x128xf32>
    %125 = arith.cmpf oge, %123, %124 : vector<18x128xf32>
    %cst_70 = arith.constant 0.00999999977 : f32
    %126 = vector.broadcast %cst_70 : f32 to vector<18x128xf32>
    %127 = arith.mulf %126, %123 : vector<18x128xf32>
    %128 = arith.select %125, %123, %127 : vector<18x128xi1>, vector<18x128xf32>
    %129 = arith.truncf %128 : vector<18x128xf32> to vector<18x128xbf16>
    %c1_71 = arith.constant 1 : index
    %c0_72 = arith.constant 0 : index
    %c0_73 = arith.constant 0 : index
    %130 = vector.load %arg9[%c1_71, %c0_72, %c0_73] : memref<3x128x128xbf16, #tpu.memory_space<vmem>>, vector<1x128x128xbf16>
    %131 = vector.shape_cast %130 : vector<1x128x128xbf16> to vector<128x128xbf16>
    %cst_74 = arith.constant dense<0.000000e+00> : vector<18x128xf32>
    %132 = tpu.matmul %129, %131, %cst_74 {dimension_numbers = #tpu.dot_dimension_numbers<[1], [0], [0], [1], [0, 0, 1, 1], [], []>} : vector<18x128xbf16>, vector<128x128xbf16>, vector<18x128xf32> -> vector<18x128xf32>
    %c1_75 = arith.constant 1 : index
    %c0_76 = arith.constant 0 : index
    %c0_77 = arith.constant 0 : index
    %133 = vector.load %arg10[%c1_75, %c0_76, %c0_77] : memref<3x1x128xf32, #tpu.memory_space<vmem>>, vector<1x1x128xf32>
    %134 = vector.shape_cast %133 : vector<1x1x128xf32> to vector<1x128xf32>
    %135 = vector.broadcast %134 : vector<1x128xf32> to vector<18x128xf32>
    %136 = arith.addf %132, %135 : vector<18x128xf32>
    %137 = vector.extract_strided_slice %92 {offsets = [1, 0], sizes = [18, 128], strides = [1, 1]} : vector<20x128xf32> to vector<18x128xf32>
    %138 = arith.addf %137, %136 : vector<18x128xf32>
    %cst_78 = arith.constant 0.000000e+00 : f32
    %139 = vector.broadcast %cst_78 : f32 to vector<18x128xf32>
    %140 = arith.cmpf oge, %138, %139 : vector<18x128xf32>
    %cst_79 = arith.constant 0.00999999977 : f32
    %141 = vector.broadcast %cst_79 : f32 to vector<18x128xf32>
    %142 = arith.mulf %141, %138 : vector<18x128xf32>
    %143 = arith.select %140, %138, %142 : vector<18x128xi1>, vector<18x128xf32>
    %144 = vector.extract_strided_slice %20 {offsets = [7, 0], sizes = [18, 1], strides = [1, 1]} : vector<32x1xf32> to vector<18x1xf32>
    %145 = vector.broadcast %144 : vector<18x1xf32> to vector<18x128xf32>
    %146 = arith.mulf %143, %145 : vector<18x128xf32>
    %cst_80 = arith.constant 0.000000e+00 : f32
    %147 = vector.broadcast %cst_80 : f32 to vector<16x128xf32>
    %148 = vector.extract_strided_slice %146 {offsets = [0, 0], sizes = [16, 128], strides = [1, 1]} : vector<18x128xf32> to vector<16x128xf32>
    %149 = arith.truncf %148 : vector<16x128xf32> to vector<16x128xbf16>
    %c6 = arith.constant 6 : index
    %c0_81 = arith.constant 0 : index
    %c0_82 = arith.constant 0 : index
    %150 = vector.load %arg7[%c6, %c0_81, %c0_82] : memref<9x128x128xbf16, #tpu.memory_space<vmem>>, vector<1x128x128xbf16>
    %151 = vector.shape_cast %150 : vector<1x128x128xbf16> to vector<128x128xbf16>
    %cst_83 = arith.constant dense<0.000000e+00> : vector<16x128xf32>
    %152 = tpu.matmul %149, %151, %cst_83 {dimension_numbers = #tpu.dot_dimension_numbers<[1], [0], [0], [1], [0, 0, 1, 1], [], []>} : vector<16x128xbf16>, vector<128x128xbf16>, vector<16x128xf32> -> vector<16x128xf32>
    %153 = arith.addf %147, %152 : vector<16x128xf32>
    %154 = vector.extract_strided_slice %146 {offsets = [1, 0], sizes = [16, 128], strides = [1, 1]} : vector<18x128xf32> to vector<16x128xf32>
    %155 = arith.truncf %154 : vector<16x128xf32> to vector<16x128xbf16>
    %c7 = arith.constant 7 : index
    %c0_84 = arith.constant 0 : index
    %c0_85 = arith.constant 0 : index
    %156 = vector.load %arg7[%c7, %c0_84, %c0_85] : memref<9x128x128xbf16, #tpu.memory_space<vmem>>, vector<1x128x128xbf16>
    %157 = vector.shape_cast %156 : vector<1x128x128xbf16> to vector<128x128xbf16>
    %cst_86 = arith.constant dense<0.000000e+00> : vector<16x128xf32>
    %158 = tpu.matmul %155, %157, %cst_86 {dimension_numbers = #tpu.dot_dimension_numbers<[1], [0], [0], [1], [0, 0, 1, 1], [], []>} : vector<16x128xbf16>, vector<128x128xbf16>, vector<16x128xf32> -> vector<16x128xf32>
    %159 = arith.addf %153, %158 : vector<16x128xf32>
    %160 = vector.extract_strided_slice %146 {offsets = [2, 0], sizes = [16, 128], strides = [1, 1]} : vector<18x128xf32> to vector<16x128xf32>
    %161 = arith.truncf %160 : vector<16x128xf32> to vector<16x128xbf16>
    %c8_87 = arith.constant 8 : index
    %c0_88 = arith.constant 0 : index
    %c0_89 = arith.constant 0 : index
    %162 = vector.load %arg7[%c8_87, %c0_88, %c0_89] : memref<9x128x128xbf16, #tpu.memory_space<vmem>>, vector<1x128x128xbf16>
    %163 = vector.shape_cast %162 : vector<1x128x128xbf16> to vector<128x128xbf16>
    %cst_90 = arith.constant dense<0.000000e+00> : vector<16x128xf32>
    %164 = tpu.matmul %161, %163, %cst_90 {dimension_numbers = #tpu.dot_dimension_numbers<[1], [0], [0], [1], [0, 0, 1, 1], [], []>} : vector<16x128xbf16>, vector<128x128xbf16>, vector<16x128xf32> -> vector<16x128xf32>
    %165 = arith.addf %159, %164 : vector<16x128xf32>
    %c2_91 = arith.constant 2 : index
    %c0_92 = arith.constant 0 : index
    %c0_93 = arith.constant 0 : index
    %166 = vector.load %arg8[%c2_91, %c0_92, %c0_93] : memref<3x1x128xf32, #tpu.memory_space<vmem>>, vector<1x1x128xf32>
    %167 = vector.shape_cast %166 : vector<1x1x128xf32> to vector<1x128xf32>
    %168 = vector.broadcast %167 : vector<1x128xf32> to vector<16x128xf32>
    %169 = arith.addf %165, %168 : vector<16x128xf32>
    %cst_94 = arith.constant 0.000000e+00 : f32
    %170 = vector.broadcast %cst_94 : f32 to vector<16x128xf32>
    %171 = arith.cmpf oge, %169, %170 : vector<16x128xf32>
    %cst_95 = arith.constant 0.00999999977 : f32
    %172 = vector.broadcast %cst_95 : f32 to vector<16x128xf32>
    %173 = arith.mulf %172, %169 : vector<16x128xf32>
    %174 = arith.select %171, %169, %173 : vector<16x128xi1>, vector<16x128xf32>
    %175 = arith.truncf %174 : vector<16x128xf32> to vector<16x128xbf16>
    %c2_96 = arith.constant 2 : index
    %c0_97 = arith.constant 0 : index
    %c0_98 = arith.constant 0 : index
    %176 = vector.load %arg9[%c2_96, %c0_97, %c0_98] : memref<3x128x128xbf16, #tpu.memory_space<vmem>>, vector<1x128x128xbf16>
    %177 = vector.shape_cast %176 : vector<1x128x128xbf16> to vector<128x128xbf16>
    %cst_99 = arith.constant dense<0.000000e+00> : vector<16x128xf32>
    %178 = tpu.matmul %175, %177, %cst_99 {dimension_numbers = #tpu.dot_dimension_numbers<[1], [0], [0], [1], [0, 0, 1, 1], [], []>} : vector<16x128xbf16>, vector<128x128xbf16>, vector<16x128xf32> -> vector<16x128xf32>
    %c2_100 = arith.constant 2 : index
    %c0_101 = arith.constant 0 : index
    %c0_102 = arith.constant 0 : index
    %179 = vector.load %arg10[%c2_100, %c0_101, %c0_102] : memref<3x1x128xf32, #tpu.memory_space<vmem>>, vector<1x1x128xf32>
    %180 = vector.shape_cast %179 : vector<1x1x128xf32> to vector<1x128xf32>
    %181 = vector.broadcast %180 : vector<1x128xf32> to vector<16x128xf32>
    %182 = arith.addf %178, %181 : vector<16x128xf32>
    %183 = vector.extract_strided_slice %138 {offsets = [1, 0], sizes = [16, 128], strides = [1, 1]} : vector<18x128xf32> to vector<16x128xf32>
    %184 = arith.addf %183, %182 : vector<16x128xf32>
    %cst_103 = arith.constant 0.000000e+00 : f32
    %185 = vector.broadcast %cst_103 : f32 to vector<16x128xf32>
    %186 = arith.cmpf oge, %184, %185 : vector<16x128xf32>
    %cst_104 = arith.constant 0.00999999977 : f32
    %187 = vector.broadcast %cst_104 : f32 to vector<16x128xf32>
    %188 = arith.mulf %187, %184 : vector<16x128xf32>
    %189 = arith.select %186, %184, %188 : vector<16x128xi1>, vector<16x128xf32>
    %c0_105 = arith.constant 0 : index
    %c0_106 = arith.constant 0 : index
    %c0_107 = arith.constant 0 : index
    %190 = vector.load %arg11[%c0_105, %c0_106, %c0_107] : memref<1x16x128xf32, #tpu.memory_space<vmem>>, vector<1x16x128xf32>
    %191 = vector.shape_cast %190 : vector<1x16x128xf32> to vector<16x128xf32>
    %192 = vector.shape_cast %189 : vector<16x128xf32> to vector<1x16x128xf32>
    tpu.vector_store %arg11[%c0_105, %c0_106, %c0_107], %192 {strides = array<i32>} : memref<1x16x128xf32, #tpu.memory_space<vmem>>, vector<1x16x128xf32>,
    return
  }
  func.func @transform_0(%arg0: i32, %arg1: i32) -> (i32, i32, i32) {
    %c2_i32 = arith.constant 2 : i32
    %0 = arith.muli %arg1, %c2_i32 : i32
    %c1_i32 = arith.constant 1 : i32
    %1 = arith.subi %0, %c1_i32 : i32
    %c0_i32 = arith.constant 0 : i32
    %2 = arith.maxsi %1, %c0_i32 : i32
    %c0_i32_0 = arith.constant 0 : i32
    %c0_i32_1 = arith.constant 0 : i32
    return %arg0, %2, %c0_i32_0 : i32, i32, i32
  }
  func.func @transform_1(%arg0: i32, %arg1: i32) -> (i32, i32, i32) {
    %c0_i32 = arith.constant 0 : i32
    %c0_i32_0 = arith.constant 0 : i32
    return %arg0, %arg1, %c0_i32 : i32, i32, i32
  }
  func.func @transform_2(%arg0: i32, %arg1: i32) -> (i32, i32, i32) {
    %c1_i32 = arith.constant 1 : i32
    %0 = arith.addi %arg1, %c1_i32 : i32
    %c2_i32 = arith.constant 2 : i32
    %1 = arith.muli %0, %c2_i32 : i32
    %c1_i32_0 = arith.constant 1 : i32
    %2 = arith.minsi %1, %c1_i32_0 : i32
    %c0_i32 = arith.constant 0 : i32
    %c0_i32_1 = arith.constant 0 : i32
    return %arg0, %2, %c0_i32 : i32, i32, i32
  }
  func.func @transform_3(%arg0: i32, %arg1: i32) -> (i32, i32, i32) {
    %c0_i32 = arith.constant 0 : i32
    %c0_i32_0 = arith.constant 0 : i32
    %c0_i32_1 = arith.constant 0 : i32
    %c0_i32_2 = arith.constant 0 : i32
    return %c0_i32, %c0_i32_0, %c0_i32_1 : i32, i32, i32
  }
  func.func @transform_4(%arg0: i32, %arg1: i32) -> (i32, i32) {
    %c0_i32 = arith.constant 0 : i32
    %c0_i32_0 = arith.constant 0 : i32
    %c0_i32_1 = arith.constant 0 : i32
    return %c0_i32, %c0_i32_0 : i32, i32
  }
  func.func @transform_5(%arg0: i32, %arg1: i32) -> (i32, i32, i32) {
    %c0_i32 = arith.constant 0 : i32
    %c0_i32_0 = arith.constant 0 : i32
    %c0_i32_1 = arith.constant 0 : i32
    %c0_i32_2 = arith.constant 0 : i32
    return %c0_i32, %c0_i32_0, %c0_i32_1 : i32, i32, i32
  }
  func.func @transform_6(%arg0: i32, %arg1: i32) -> (i32, i32, i32) {
    %c0_i32 = arith.constant 0 : i32
    %c0_i32_0 = arith.constant 0 : i32
    %c0_i32_1 = arith.constant 0 : i32
    %c0_i32_2 = arith.constant 0 : i32
    return %c0_i32, %c0_i32_0, %c0_i32_1 : i32, i32, i32
  }
  func.func @transform_7(%arg0: i32, %arg1: i32) -> (i32, i32, i32) {
    %c0_i32 = arith.constant 0 : i32
    %c0_i32_0 = arith.constant 0 : i32
    %c0_i32_1 = arith.constant 0 : i32
    %c0_i32_2 = arith.constant 0 : i32
    return %c0_i32, %c0_i32_0, %c0_i32_1 : i32, i32, i32
  }
  func.func @transform_8(%arg0: i32, %arg1: i32) -> (i32, i32, i32) {
    %c0_i32 = arith.constant 0 : i32
    %c0_i32_0 = arith.constant 0 : i32
    %c0_i32_1 = arith.constant 0 : i32
    %c0_i32_2 = arith.constant 0 : i32
    return %c0_i32, %c0_i32_0, %c0_i32_1 : i32, i32, i32
  }
  func.func @transform_9(%arg0: i32, %arg1: i32) -> (i32, i32, i32) {
    %c0_i32 = arith.constant 0 : i32
    %c0_i32_0 = arith.constant 0 : i32
    return %arg0, %arg1, %c0_i32 : i32, i32, i32
  }
}

</mosaic_0001>

<llo_original>
// kernel: mel_encoder_forward.2
$region0: #{mel_encoder_forward.2}
  #allocation0 [shape = 'u32[]', space=smem, size = 0x4, offset = 0x4, fixed_abs, tag = 'smem constant byte address 0x4 - core index']
  #allocation1 [shape = 'u32[144,128]{1,0:T(1,128)}', space=vmem, size = 0x12000, scoped, tag = 'internal scratch']
  #allocation2 [shape = 'f32[24,128]{1,0:T(8,128)}', space=vmem, size = 0x3000, scoped, tag = 'scratch operand']
  %s0 = inlined_call_operand.vmem [shape: f32[2,24,128], index: 0, kind: input, shape index: {}, may-alias: {0,1}]
  %s1 = inlined_call_operand.vmem [shape: f32[2,24,128], index: 1, kind: input, shape index: {}, may-alias: {0,1}]
  %s2 = inlined_call_operand.hbm [shape: bf16[2,128,128], index: 2, kind: input, shape index: {}]
  %s3 = inlined_call_operand.hbm [shape: f32[1,128], index: 3, kind: input, shape index: {}]
  %s4 = inlined_call_operand.vmem [shape: f32[2,16,128], index: 4, kind: output, shape index: {}]
  %s5 = sld [smem:[#allocation0]]
  $region57: #{mel_encoder_forward.2} parent=0
    _
  %s7 = ssub.s32 1, %s5
  %s8 = scalar_select 0, %s7, %s5
  $region1: #{mel_encoder_forward.2} parent=0
    #allocation3 [shape = 'u8[65536]{0}', space=vmem, size = 0x10000, scoped, tag = 'input window, operand 2, single buffered']
    #allocation4 [shape = 's32[2]{0}', space=sflag, size = 0x8, scoped, tag = 'scoped memory for mel_encoder_forward.2']
    #allocation5 [shape = 'u8[512]{0}', space=vmem, size = 0x400, scoped, tag = 'input window, operand 3, single buffered']
    #allocation6 [shape = 's32[1]{0}', space=sflag, size = 0x4, scoped, tag = 'scoped memory for mel_encoder_forward.2']
    %9 = vsyncpa [#allocation4], 0
    %10 = vsyncpa [#allocation6], 0
    loop: start=0, step=1, limit=4
    $region2: #{mel_encoder_forward.2} parent=1 // loop_pre_header
      _
    $region3: #{mel_encoder_forward.2} parent=1 // loop_header
      %s12 = sphi 0, %s16
      %p13 = scmp.ge.s32.totalorder %s12, 4
      %s19 = sphi 0, %s31
      %s20 = sphi 0, %s27
      %s21 = sphi 0, %s19
      %s22 = sphi 0, %s20
      %s23 = sphi 0, %s21
      %s24 = sphi 0, %s22
      %s36 = sphi 0, %s38
      %s39 = sphi 0, %s36
      %s40 = sphi 0, %s39
      %s56 = sphi 0, %s40
      %s68 = sphi 0, %s70
      %s71 = sphi 0, %s68
      %s72 = sphi 0, %s71
      %s88 = sphi 0, %s72
      %s92 = sphi 0, %s92
      %s94 = sphi 0, %s92
      %s95 = sphi 0, %s94
      %s109 = sphi 0, %s95
      %s113 = sphi 0, %s113
      %s115 = sphi 0, %s113
      %s116 = sphi 0, %s115
      %s130 = sphi 0, %s116
      %s138 = sphi 0, %s140
      %s141 = sphi 0, %s138
      %s142 = sphi 0, %s141
      %s158 = sphi 0, %s142
    $region4: #{mel_encoder_forward.2} parent=1 // loop_header_branch
      %15 = sbr.rel (%p13) target = $region8
    $region5: #{mel_encoder_forward.2} parent=1 // loop_body
      %s17 = ssub.s32 %s12, 1
      %s18 = ssub.s32 %s12, 2
      %s25 = sadd.s32 1, %s20
      %p26 = scmp.ge.s32.totalorder %s25, 1
      %s27 = scalar_select %p26, 0, %s25
      %s28 = sadd.s32 1, %s19
      %s29 = scalar_select %p26, %s28, %s19
      %p30 = scmp.ge.s32.totalorder %s29, 2
      %s31 = scalar_select %p30, 0, %s29
      %s32 = ssub.s32 %s19, %s31
      %s33 = ssub.s32 %s20, %s27
      %s34 = sor.u32 %s32, %s33
      %p35 = scmp.eq.s32.totalorder %s34, 0
      %s37 = sadd.s32 %s36, 1
      %s38 = scalar_select %p35, %s36, %s37
      %p41 = pneg %p35
      %p42 = scmp.eq.s32.totalorder %s12, 1
      %p43 = por %p41, %p42
      %p44 = scmp.ne.s32.totalorder %s36, %s39
      %p45 = scmp.eq.s32.totalorder %s12, 0
      %p46 = por %p44, %p45
      %p47 = scmp.ne.s32.totalorder %s36, %s39
      %p48 = scmp.eq.s32.totalorder %s17, 1
      %p49 = por %p47, %p48
      %p50 = scmp.ne.s32.totalorder %s39, %s40
      %p51 = scmp.eq.s32.totalorder %s17, 0
      %p52 = por %p50, %p51
      %p53 = scmp.ne.s32.totalorder %s39, %s40
      %p54 = scmp.eq.s32.totalorder %s18, 1
      %p55 = por %p53, %p54
      %p57 = scmp.ne.s32.totalorder %s40, %s56
      %p58 = scmp.eq.s32.totalorder %s18, 0
      %p59 = por %p57, %p58
      %s60 = sadd.s32 %s20, 1
      %s61 = smul.u32 %s60, 2
      %s62 = sadd.s32 %s27, 1
      %s63 = smul.u32 %s62, 2
      %s64 = ssub.s32 %s19, %s31
      %s65 = ssub.s32 %s61, %s63
      %s66 = sor.u32 %s64, %s65
      %p67 = scmp.eq.s32.totalorder %s66, 0
      %s69 = sadd.s32 %s68, 1
      %s70 = scalar_select %p67, %s68, %s69
      %p73 = pneg %p67
      %p74 = scmp.eq.s32.totalorder %s12, 1
      %p75 = por %p73, %p74
      %p76 = scmp.ne.s32.totalorder %s68, %s71
      %p77 = scmp.eq.s32.totalorder %s12, 0
      %p78 = por %p76, %p77
      %p79 = scmp.ne.s32.totalorder %s68, %s71
      %p80 = scmp.eq.s32.totalorder %s17, 1
      %p81 = por %p79, %p80
      %p82 = scmp.ne.s32.totalorder %s71, %s72
      %p83 = scmp.eq.s32.totalorder %s17, 0
      %p84 = por %p82, %p83
      %p85 = scmp.ne.s32.totalorder %s71, %s72
      %p86 = scmp.eq.s32.totalorder %s18, 1
      %p87 = por %p85, %p86
      %p89 = scmp.ne.s32.totalorder %s72, %s88
      %p90 = scmp.eq.s32.totalorder %s18, 0
      %p91 = por %p89, %p90
      %s93 = sadd.s32 %s92, 1
      %p96 = scmp.eq.s32.totalorder %s12, 1
      %p97 = scmp.ne.s32.totalorder %s92, %s94
      %p98 = scmp.eq.s32.totalorder %s12, 0
      %p99 = por %p97, %p98
      %p100 = scmp.ne.s32.totalorder %s92, %s94
      %p101 = scmp.eq.s32.totalorder %s17, 1
      %p102 = por %p100, %p101
      %p103 = scmp.ne.s32.totalorder %s94, %s95
      %p104 = scmp.eq.s32.totalorder %s17, 0
      %p105 = por %p103, %p104
      %p106 = scmp.ne.s32.totalorder %s94, %s95
      %p107 = scmp.eq.s32.totalorder %s18, 1
      %p108 = por %p106, %p107
      %p110 = scmp.ne.s32.totalorder %s95, %s109
      %p111 = scmp.eq.s32.totalorder %s18, 0
      %p112 = por %p110, %p111
      %s114 = sadd.s32 %s113, 1
      %p117 = scmp.eq.s32.totalorder %s12, 1
      %p118 = scmp.ne.s32.totalorder %s113, %s115
      %p119 = scmp.eq.s32.totalorder %s12, 0
      %p120 = por %p118, %p119
      %p121 = scmp.ne.s32.totalorder %s113, %s115
      %p122 = scmp.eq.s32.totalorder %s17, 1
      %p123 = por %p121, %p122
      %p124 = scmp.ne.s32.totalorder %s115, %s116
      %p125 = scmp.eq.s32.totalorder %s17, 0
      %p126 = por %p124, %p125
      %p127 = scmp.ne.s32.totalorder %s115, %s116
      %p128 = scmp.eq.s32.totalorder %s18, 1
      %p129 = por %p127, %p128
      %p131 = scmp.ne.s32.totalorder %s116, %s130
      %p132 = scmp.eq.s32.totalorder %s18, 0
      %p133 = por %p131, %p132
      %s134 = ssub.s32 %s19, %s31
      %s135 = ssub.s32 %s20, %s27
      %s136 = sor.u32 %s134, %s135
      %p137 = scmp.eq.s32.totalorder %s136, 0
      %s139 = sadd.s32 %s138, 1
      %s140 = scalar_select %p137, %s138, %s139
      %p143 = pneg %p137
      %p144 = scmp.eq.s32.totalorder %s12, 1
      %p145 = por %p143, %p144
      %p146 = scmp.ne.s32.totalorder %s138, %s141
      %p147 = scmp.eq.s32.totalorder %s12, 0
      %p148 = por %p146, %p147
      %p149 = scmp.ne.s32.totalorder %s138, %s141
      %p150 = scmp.eq.s32.totalorder %s17, 1
      %p151 = por %p149, %p150
      %p152 = scmp.ne.s32.totalorder %s141, %s142
      %p153 = scmp.eq.s32.totalorder %s17, 0
      %p154 = por %p152, %p153
      %p155 = scmp.ne.s32.totalorder %s141, %s142
      %p156 = scmp.eq.s32.totalorder %s18, 1
      %p157 = por %p155, %p156
      %p159 = scmp.ne.s32.totalorder %s142, %s158
      %p160 = scmp.eq.s32.totalorder %s18, 0
      %p161 = por %p159, %p160
      %p162 = scmp.le.s32.totalorder 1, %s12
      %p163 = scmp.lt.s32.totalorder %s12, 3
      %p164 = pnand %p162, %p163
      %p165 = pneg %p164
      // Predicated region
      $region9: #{mel_encoder_forward.2} parent=5 // pred_check
        _
      $region10: #{mel_encoder_forward.2} parent=5 // pred_check_branch
        %167 = sbr.rel (%p164) target = $region12
      $region11: #{mel_encoder_forward.2} parent=5 // pred_region
        %s168 = ssub.s32 %s12, 1
        // Predicated region
        $region13: #{mel_encoder_forward.2} parent=11 // pred_check
          %p169 = pneg %p105
        $region14: #{mel_encoder_forward.2} parent=11 // pred_check_branch
          %171 = sbr.rel (%p169) target = $region16
        $region15: #{mel_encoder_forward.2} parent=11 // pred_region
          %s173 = ssub.s32 2048, 2048
          %174 = vsyncadd [#allocation4], %s173
          %s175 = sshll.u32 [#allocation3], 4
          %s176 = int_to_ptr.vmem [resolvable:$true] %s175
          %181 = dma.hbm_to_vmem [thread:$0]  %s2, 2048, %s176, [#allocation4], 64, 64, 4
        $region16: #{mel_encoder_forward.2} parent=11 // pred_fallthru
          _
        // Predicated region
        $region17: #{mel_encoder_forward.2} parent=11 // pred_check
          %p182 = pneg %p126
        $region18: #{mel_encoder_forward.2} parent=11 // pred_check_branch
          %184 = sbr.rel (%p182) target = $region20
        $region19: #{mel_encoder_forward.2} parent=11 // pred_region
          %s186 = ssub.s32 16, 16
          %187 = vsyncadd [#allocation6], %s186
          %s189 = sshll.u32 [#allocation5], 4
          %s190 = int_to_ptr.vmem [resolvable:$true] %s189
          %192 = dma.hbm_to_vmem [thread:$0]  %s3, 16, %s190, [#allocation6]
        $region20: #{mel_encoder_forward.2} parent=11 // pred_fallthru
          _
      $region12: #{mel_encoder_forward.2} parent=5 // pred_fallthru
        _
      %p193 = scmp.lt.s32.totalorder %s12, 2
      // Predicated region
      $region21: #{mel_encoder_forward.2} parent=5 // pred_check
        %p194 = pneg %p193
      $region22: #{mel_encoder_forward.2} parent=5 // pred_check_branch
        %196 = sbr.rel (%p194) target = $region24
      $region23: #{mel_encoder_forward.2} parent=5 // pred_region
        // Predicated region
        $region25: #{mel_encoder_forward.2} parent=23 // pred_check
          %p197 = pneg %p46
        $region26: #{mel_encoder_forward.2} parent=23 // pred_check_branch
          %199 = sbr.rel (%p197) target = $region28
        $region27: #{mel_encoder_forward.2} parent=23 // pred_region
          %s200 = smul.u32 2, %s20
          %s201 = ssub.s32 3, %s200
          %p202 = scmp.lt.s32.totalorder %s201, 2
          %s203 = scalar_select %p202, %s201, 2
          %s204 = smul.u32 128, %s203
          %p205 = scmp.lt.s32.totalorder %s19, 1
          %s206 = scalar_select %p205, %s19, 1
          %p207 = scmp.lt.s32.totalorder %s200, 2
          %s208 = scalar_select %p207, %s200, 2
          %s209 = smul.addr %s206, 3
          %s210 = sadd.s32 %s208, %s209
          %s211 = smul.addr %s210, 8
          %s212 = scalar_lea.vmem %s0, %s211
          %s213 = smul.u32 2, %s20
          %s214 = ssub.s32 3, %s213
          %p215 = scmp.lt.s32.totalorder %s214, 2
          %s216 = scalar_select %p215, %s214, 2
          %s217 = smul.u32 128, %s216
        $region28: #{mel_encoder_forward.2} parent=23 // pred_fallthru
          _
        // Predicated region
        $region29: #{mel_encoder_forward.2} parent=23 // pred_check
          %p218 = pneg %p78
        $region30: #{mel_encoder_forward.2} parent=23 // pred_check_branch
          %220 = sbr.rel (%p218) target = $region32
        $region31: #{mel_encoder_forward.2} parent=23 // pred_region
          %s221 = sadd.s32 %s20, 1
          %s222 = smul.u32 %s221, 2
          %p223 = scmp.lt.s32.totalorder %s19, 1
          %s224 = scalar_select %p223, %s19, 1
          %p225 = scmp.lt.s32.totalorder %s222, 2
          %s226 = scalar_select %p225, %s222, 2
          %s227 = smul.addr %s224, 3
          %s228 = sadd.s32 %s226, %s227
          %s229 = smul.addr %s228, 8
          %s230 = scalar_lea.vmem %s1, %s229
          %s231 = sadd.s32 %s20, 1
          %s232 = smul.u32 %s231, 2
        $region32: #{mel_encoder_forward.2} parent=23 // pred_fallthru
          _
      $region24: #{mel_encoder_forward.2} parent=5 // pred_fallthru
        _
      %p233 = scmp.le.s32.totalorder 1, %s12
      %p234 = scmp.lt.s32.totalorder %s12, 3
      %p235 = pnand %p233, %p234
      %p236 = pneg %p235
      // Predicated region
      $region33: #{mel_encoder_forward.2} parent=5 // pred_check
        _
      $region34: #{mel_encoder_forward.2} parent=5 // pred_check_branch
        %238 = sbr.rel (%p235) target = $region36
      $region35: #{mel_encoder_forward.2} parent=5 // pred_region
        %s239 = ssub.s32 %s12, 1
        // Predicated region
        $region37: #{mel_encoder_forward.2} parent=35 // pred_check
          %p240 = pneg %p105
        $region38: #{mel_encoder_forward.2} parent=35 // pred_check_branch
          %242 = sbr.rel (%p240) target = $region40
        $region39: #{mel_encoder_forward.2} parent=35 // pred_region
          %243 = dma.done [#allocation4], 2048
        $region40: #{mel_encoder_forward.2} parent=35 // pred_fallthru
          _
        // Predicated region
        $region41: #{mel_encoder_forward.2} parent=35 // pred_check
          %p244 = pneg %p126
        $region42: #{mel_encoder_forward.2} parent=35 // pred_check_branch
          %246 = sbr.rel (%p244) target = $region44
        $region43: #{mel_encoder_forward.2} parent=35 // pred_region
          %247 = dma.done [#allocation6], 16
        $region44: #{mel_encoder_forward.2} parent=35 // pred_fallthru
          _
        %s248 = smul.u32 2, %s22
        %s249 = ssub.s32 3, %s248
        %p250 = scmp.lt.s32.totalorder %s249, 2
        %s251 = scalar_select %p250, %s249, 2
        %s252 = smul.u32 128, %s251
        %p253 = scmp.lt.s32.totalorder %s21, 1
        %s254 = scalar_select %p253, %s21, 1
        %p255 = scmp.lt.s32.totalorder %s248, 2
        %s256 = scalar_select %p255, %s248, 2
        %s257 = smul.addr %s254, 3
        %s258 = sadd.s32 %s256, %s257
        %s259 = smul.addr %s258, 8
        %s260 = scalar_lea.vmem %s0, %s259
        %p261 = pneg %p52
        %p262 = pneg %p49
        %s263 = sadd.s32 %s22, 1
        %s264 = smul.u32 %s263, 2
        %p265 = scmp.lt.s32.totalorder %s21, 1
        %s266 = scalar_select %p265, %s21, 1
        %p267 = scmp.lt.s32.totalorder %s264, 2
        %s268 = scalar_select %p267, %s264, 2
        %s269 = smul.addr %s266, 3
        %s270 = sadd.s32 %s268, %s269
        %s271 = smul.addr %s270, 8
        %s272 = scalar_lea.vmem %s1, %s271
        %p273 = pneg %p84
        %p274 = pneg %p81
        %p275 = pneg %p105
        %p276 = pneg %p102
        %p277 = pneg %p126
        %p278 = pneg %p123
        %p279 = pneg %p154
        %p280 = pneg %p151
        %s281 = smul.u32 2, %s22
        %p282 = scmp.lt.s32.totalorder %s21, 1
        %s283 = scalar_select %p282, %s21, 1
        %p284 = scmp.lt.s32.totalorder %s281, 1
        %s285 = scalar_select %p284, %s281, 1
        %s286 = smul.addr %s283, 2
        %s287 = sadd.s32 %s285, %s286
        %s288 = smul.addr %s287, 8
        %s289 = scalar_lea.vmem %s4, %s288
        %s290 = smul.u32 2, %s22
        %s291 = ssub.s32 3, %s290
        %p292 = scmp.lt.s32.totalorder %s291, 2
        %s293 = scalar_select %p292, %s291, 2
        %s294 = smul.u32 128, %s293
        %p295 = scmp.lt.s32.totalorder %s21, 1
        %s296 = scalar_select %p295, %s21, 1
        %p297 = scmp.lt.s32.totalorder %s290, 2
        %s298 = scalar_select %p297, %s290, 2
        %s299 = smul.addr %s296, 3
        %s300 = sadd.s32 %s298, %s299
        %s301 = smul.addr %s300, 8
        %s302 = scalar_lea.vmem %s0, %s301
        %s303 = smul.u32 2, %s22
        %s304 = ssub.s32 3, %s303
        %p305 = scmp.lt.s32.totalorder %s304, 2
        %s306 = scalar_select %p305, %s304, 2
        %s307 = smul.u32 128, %s306
        %s308 = sadd.s32 %s22, 1
        %s309 = smul.u32 %s308, 2
        %p310 = scmp.lt.s32.totalorder %s21, 1
        %s311 = scalar_select %p310, %s21, 1
        %p312 = scmp.lt.s32.totalorder %s309, 2
        %s313 = scalar_select %p312, %s309, 2
        %s314 = smul.addr %s311, 3
        %s315 = sadd.s32 %s313, %s314
        %s316 = smul.addr %s315, 8
        %s317 = scalar_lea.vmem %s1, %s316
        %s318 = sadd.s32 %s22, 1
        %s319 = smul.u32 %s318, 2
        %s320 = smul.u32 2, %s22
        %p321 = scmp.lt.s32.totalorder %s21, 1
        %s322 = scalar_select %p321, %s21, 1
        %p323 = scmp.lt.s32.totalorder %s320, 1
        %s324 = scalar_select %p323, %s320, 1
        %s325 = smul.addr %s322, 2
        %s326 = sadd.s32 %s324, %s325
        %s327 = smul.addr %s326, 8
        %s328 = scalar_lea.vmem %s4, %s327
        %s329 = smul.u32 2, %s22
        %v331 = vld [vmem:[%s302] sm:$0xff]
        %v332 = vld [vmem:[%s302 + $0x8] sm:$0xff]
        %333 = vst [vmem:[#allocation2] sm:$0xff] %v331
        %334 = vst [vmem:[#allocation2 + $0x8] sm:$0xff] %v332
        %v335 = vld [vmem:[%s317] sm:$0xff]
        %336 = vst [vmem:[#allocation2 + $0x10] sm:$0xff] %v335
        %v337 = vld [vmem:[#allocation2] sm:$0xff]
        %v338 = vld [vmem:[#allocation2 + $0x8] sm:$0xff]
        %v339 = vpack.c.bf16 %v338, %v337
        %v340 = vld [vmem:[#allocation3] sm:$0xf]
        %v341 = vld [vmem:[#allocation3 + $0x4] sm:$0xf]
        %v342 = vld [vmem:[#allocation3 + $0x8] sm:$0xf]
        %v343 = vld [vmem:[#allocation3 + $0xc] sm:$0xf]
        %v344 = vld [vmem:[#allocation3 + $0x10] sm:$0xf]
        %v345 = vld [vmem:[#allocation3 + $0x14] sm:$0xf]
        %v346 = vld [vmem:[#allocation3 + $0x18] sm:$0xf]
        %v347 = vld [vmem:[#allocation3 + $0x1c] sm:$0xf]
        %v348 = vld [vmem:[#allocation3 + $0x20] sm:$0xf]
        %v349 = vld [vmem:[#allocation3 + $0x24] sm:$0xf]
        %v350 = vld [vmem:[#allocation3 + $0x28] sm:$0xf]
        %v351 = vld [vmem:[#allocation3 + $0x2c] sm:$0xf]
        %v352 = vld [vmem:[#allocation3 + $0x30] sm:$0xf]
        %v353 = vld [vmem:[#allocation3 + $0x34] sm:$0xf]
        %v354 = vld [vmem:[#allocation3 + $0x38] sm:$0xf]
        %v355 = vld [vmem:[#allocation3 + $0x3c] sm:$0xf]
        %v356 = vld [vmem:[#allocation2 + $0x1] sm:$0xff]
        %v357 = vld [vmem:[#allocation2 + $0x9] sm:$0xff]
        %v358 = vpack.c.bf16 %v357, %v356
        %s359 = scalar_lea.vmem [#allocation3], 64
        %v360 = vld [vmem:[%s359] sm:$0xf]
        %v361 = vld [vmem:[%s359 + $0x4] sm:$0xf]
        %v362 = vld [vmem:[%s359 + $0x8] sm:$0xf]
        %v363 = vld [vmem:[%s359 + $0xc] sm:$0xf]
        %v364 = vld [vmem:[%s359 + $0x10] sm:$0xf]
        %v365 = vld [vmem:[%s359 + $0x14] sm:$0xf]
        %v366 = vld [vmem:[%s359 + $0x18] sm:$0xf]
        %v367 = vld [vmem:[%s359 + $0x1c] sm:$0xf]
        %v368 = vld [vmem:[%s359 + $0x20] sm:$0xf]
        %v369 = vld [vmem:[%s359 + $0x24] sm:$0xf]
        %v370 = vld [vmem:[%s359 + $0x28] sm:$0xf]
        %v371 = vld [vmem:[%s359 + $0x2c] sm:$0xf]
        %v372 = vld [vmem:[%s359 + $0x30] sm:$0xf]
        %v373 = vld [vmem:[%s359 + $0x34] sm:$0xf]
        %v374 = vld [vmem:[%s359 + $0x38] sm:$0xf]
        %v375 = vld [vmem:[%s359 + $0x3c] sm:$0xf]
        %v392 = vunpack.c.l.b16 %v360
        %v393 = vunpack.c.l.b16 %v361
        %v394 = vunpack.c.l.b16 %v362
        %v395 = vunpack.c.l.b16 %v363
        %v396 = vunpack.c.l.b16 %v364
        %v397 = vunpack.c.l.b16 %v365
        %v398 = vunpack.c.l.b16 %v366
        %v399 = vunpack.c.l.b16 %v367
        %v400 = vunpack.c.l.b16 %v368
        %v401 = vunpack.c.l.b16 %v369
        %v402 = vunpack.c.l.b16 %v370
        %v403 = vunpack.c.l.b16 %v371
        %v404 = vunpack.c.l.b16 %v372
        %v405 = vunpack.c.l.b16 %v373
        %v406 = vunpack.c.l.b16 %v374
        %v407 = vunpack.c.l.b16 %v375
        %v408 = vpack.c.b16 %v393, %v392
        %v409 = vpack.c.b16 %v395, %v394
        %v410 = vpack.c.b16 %v397, %v396
        %v411 = vpack.c.b16 %v399, %v398
        %v412 = vpack.c.b16 %v401, %v400
        %v413 = vpack.c.b16 %v403, %v402
        %v414 = vpack.c.b16 %v405, %v404
        %v415 = vpack.c.b16 %v407, %v406
        %424 = vmatprep.subr.bf16.mxu0 0
        %425 = vmatpush1.bf16.msra.mxu0 %v408
        %426 = vmatprep.subr.bf16.mxu0 0
        %427 = vmatpush1.bf16.msra.mxu0 %v409
        %428 = vmatprep.subr.bf16.mxu0 0
        %429 = vmatpush1.bf16.msra.mxu0 %v410
        %430 = vmatprep.subr.bf16.mxu0 0
        %431 = vmatpush1.bf16.msra.mxu0 %v411
        %432 = vmatprep.subr.bf16.mxu0 0
        %433 = vmatpush1.bf16.msra.mxu0 %v412
        %434 = vmatprep.subr.bf16.mxu0 0
        %435 = vmatpush1.bf16.msra.mxu0 %v413
        %436 = vmatprep.subr.bf16.mxu0 0
        %437 = vmatpush1.bf16.msra.mxu0 %v414
        %438 = vmatprep.subr.bf16.mxu0 0
        %439 = vmatpush1.bf16.msra.mxu0 %v415
        %440 = vmatprep.subr.bf16.mxu0 0
        %441 = vmatpush1.bf16.msra.mxu0 0
        %442 = vmatprep.subr.bf16.mxu0 0
        %443 = vmatpush1.bf16.msra.mxu0 0
        %444 = vmatprep.subr.bf16.mxu0 0
        %445 = vmatpush1.bf16.msra.mxu0 0
        %446 = vmatprep.subr.bf16.mxu0 0
        %447 = vmatpush1.bf16.msra.mxu0 0
        %448 = vmatprep.subr.bf16.mxu0 0
        %449 = vmatpush1.bf16.msra.mxu0 0
        %450 = vmatprep.subr.bf16.mxu0 0
        %451 = vmatpush1.bf16.msra.mxu0 0
        %452 = vmatprep.subr.bf16.mxu0 0
        %453 = vmatpush1.bf16.msra.mxu0 0
        %454 = vmatprep.subr.bf16.mxu0 0
        %455 = vmatpush1.bf16.msra.mxu0 0
        %456 = vmatprep.mubr.bf16.mxu0 0
        %457 = vmatmul.mubr.bf16.gmra.mrb[0].mxu0 %v358
        %v458 = vpop.f32.mrb[0].mxu0
        %v459 = vadd.f32 0.0, %v458
        %v460 = vpop.f32.mrb[0].mxu0
        %v461 = vpop.f32.mrb[0].mxu0
        %v462 = vadd.f32 0.0, %v461
        %v463 = vpop.f32.mrb[0].mxu0
        %464 = vdwg.mxu0
        %v481 = vunpack.c.l.b16 %v340
        %v482 = vunpack.c.l.b16 %v341
        %v483 = vunpack.c.l.b16 %v342
        %v484 = vunpack.c.l.b16 %v343
        %v485 = vunpack.c.l.b16 %v344
        %v486 = vunpack.c.l.b16 %v345
        %v487 = vunpack.c.l.b16 %v346
        %v488 = vunpack.c.l.b16 %v347
        %v489 = vunpack.c.l.b16 %v348
        %v490 = vunpack.c.l.b16 %v349
        %v491 = vunpack.c.l.b16 %v350
        %v492 = vunpack.c.l.b16 %v351
        %v493 = vunpack.c.l.b16 %v352
        %v494 = vunpack.c.l.b16 %v353
        %v495 = vunpack.c.l.b16 %v354
        %v496 = vunpack.c.l.b16 %v355
        %v497 = vpack.c.b16 %v482, %v481
        %v498 = vpack.c.b16 %v484, %v483
        %v499 = vpack.c.b16 %v486, %v485
        %v500 = vpack.c.b16 %v488, %v487
        %v501 = vpack.c.b16 %v490, %v489
        %v502 = vpack.c.b16 %v492, %v491
        %v503 = vpack.c.b16 %v494, %v493
        %v504 = vpack.c.b16 %v496, %v495
        %513 = vmatprep.subr.bf16.mxu0 0
        %514 = vmatpush1.bf16.msra.mxu0 %v497
        %515 = vmatprep.subr.bf16.mxu0 0
        %516 = vmatpush1.bf16.msra.mxu0 %v498
        %517 = vmatprep.subr.bf16.mxu0 0
        %518 = vmatpush1.bf16.msra.mxu0 %v499
        %519 = vmatprep.subr.bf16.mxu0 0
        %520 = vmatpush1.bf16.msra.mxu0 %v500
        %521 = vmatprep.subr.bf16.mxu0 0
        %522 = vmatpush1.bf16.msra.mxu0 %v501
        %523 = vmatprep.subr.bf16.mxu0 0
        %524 = vmatpush1.bf16.msra.mxu0 %v502
        %525 = vmatprep.subr.bf16.mxu0 0
        %526 = vmatpush1.bf16.msra.mxu0 %v503
        %527 = vmatprep.subr.bf16.mxu0 0
        %528 = vmatpush1.bf16.msra.mxu0 %v504
        %529 = vmatprep.subr.bf16.mxu0 0
        %530 = vmatpush1.bf16.msra.mxu0 0
        %531 = vmatprep.subr.bf16.mxu0 0
        %532 = vmatpush1.bf16.msra.mxu0 0
        %533 = vmatprep.subr.bf16.mxu0 0
        %534 = vmatpush1.bf16.msra.mxu0 0
        %535 = vmatprep.subr.bf16.mxu0 0
        %536 = vmatpush1.bf16.msra.mxu0 0
        %537 = vmatprep.subr.bf16.mxu0 0
        %538 = vmatpush1.bf16.msra.mxu0 0
        %539 = vmatprep.subr.bf16.mxu0 0
        %540 = vmatpush1.bf16.msra.mxu0 0
        %541 = vmatprep.subr.bf16.mxu0 0
        %542 = vmatpush1.bf16.msra.mxu0 0
        %543 = vmatprep.subr.bf16.mxu0 0
        %544 = vmatpush1.bf16.msra.mxu0 0
        %545 = vmatprep.mubr.bf16.mxu0 0
        %546 = vmatmul.mubr.bf16.gmra.mrb[0].mxu0 %v339
        %v547 = vpop.f32.mrb[0].mxu0
        %v548 = vadd.f32 %v459, %v547
        %v549 = vpop.f32.mrb[0].mxu0
        %v550 = vpop.f32.mrb[0].mxu0
        %v551 = vadd.f32 %v462, %v550
        %v552 = vpop.f32.mrb[0].mxu0
        %553 = vdwg.mxu0
        %v554 = vld [vmem:[#allocation5] sm:$0x1]
        %v556 = vlaneseq
        %v557 = vshrl.u32 %v556, 7
        %v558 = vsub.s32 0, %v557
        %v559 = vrot.slane %v554, %v558
        %v561 = vadd.f32 %v548, %v559
        %v562 = vadd.f32 %v551, %v559
        %vm563 = vcmp.ge.f32.partialorder %v561, 0.0
        %vm564 = vcmp.ge.f32.partialorder %v562, 0.0
        %v565 = vmul.f32 %v561, 0.01
        %v566 = vmul.f32 %v562, 0.01
        %v567 = vsel %vm563, %v561, %v565
        %v568 = vsel %vm564, %v562, %v566
        %569 = vst [vmem:[%s328] sm:$0xff] %v567
        %570 = vst [vmem:[%s328 + $0x8] sm:$0xff] %v568
        %s571 = smul.u32 2, %s22
        %p572 = scmp.lt.s32.totalorder %s21, 1
        %s573 = scalar_select %p572, %s21, 1
        %p574 = scmp.lt.s32.totalorder %s571, 1
        %s575 = scalar_select %p574, %s571, 1
        %s576 = smul.addr %s573, 2
        %s577 = sadd.s32 %s575, %s576
        %s578 = smul.addr %s577, 8
        %s579 = scalar_lea.vmem %s4, %s578
        // Predicated region
        $region45: #{mel_encoder_forward.2} parent=35 // pred_check
          %p580 = pneg %p151
        $region46: #{mel_encoder_forward.2} parent=35 // pred_check_branch
          %582 = sbr.rel (%p580) target = $region48
        $region47: #{mel_encoder_forward.2} parent=35 // pred_region
          %s583 = smul.u32 2, %s22
        $region48: #{mel_encoder_forward.2} parent=35 // pred_fallthru
          _
      $region36: #{mel_encoder_forward.2} parent=5 // pred_fallthru
        _
      %p584 = scmp.le.s32.totalorder 2, %s12
      // Predicated region
      $region49: #{mel_encoder_forward.2} parent=5 // pred_check
        %p585 = pneg %p584
      $region50: #{mel_encoder_forward.2} parent=5 // pred_check_branch
        %587 = sbr.rel (%p585) target = $region52
      $region51: #{mel_encoder_forward.2} parent=5 // pred_region
        %s588 = ssub.s32 %s12, 2
        // Predicated region
        $region53: #{mel_encoder_forward.2} parent=51 // pred_check
          %p589 = pneg %p157
        $region54: #{mel_encoder_forward.2} parent=51 // pred_check_branch
          %591 = sbr.rel (%p589) target = $region56
        $region55: #{mel_encoder_forward.2} parent=51 // pred_region
          %s592 = smul.u32 2, %s24
          %p593 = scmp.lt.s32.totalorder %s23, 1
          %s594 = scalar_select %p593, %s23, 1
          %p595 = scmp.lt.s32.totalorder %s592, 1
          %s596 = scalar_select %p595, %s592, 1
          %s597 = smul.addr %s594, 2
          %s598 = sadd.s32 %s596, %s597
          %s599 = smul.addr %s598, 8
          %s600 = scalar_lea.vmem %s4, %s599
        $region56: #{mel_encoder_forward.2} parent=51 // pred_fallthru
          _
      $region52: #{mel_encoder_forward.2} parent=5 // pred_fallthru
        _
    $region6: #{mel_encoder_forward.2} parent=1 // loop_footer
      %s16 = sadd.s32 1, %s12
    $region7: #{mel_encoder_forward.2} parent=1 // loop_footer_branch
      %11 = sbr.rel target = $region3
    $region8: #{mel_encoder_forward.2} parent=1 // loop_exit
      _
    %601 = vsyncpa [#allocation4], 1
    %s602 = scalar_lea.sflag [#allocation4], 1
    %603 = vsyncpa %s602, 1
    %604 = vsyncpa [#allocation6], 1

// kernel: mel_encoder_forward.3
$region0: #{mel_encoder_forward.3}
  #allocation0 [shape = 'u32[]', space=smem, size = 0x4, offset = 0x4, fixed_abs, tag = 'smem constant byte address 0x4 - core index']
  #allocation1 [shape = 'u32[144,128]{1,0:T(1,128)}', space=vmem, size = 0x12000, scoped, tag = 'internal scratch']
  #allocation2 [shape = 'f32[32,128]{1,0:T(8,128)}', space=vmem, size = 0x4000, scoped, tag = 'scratch operand']
  %s0 = inlined_call_operand.vmem [shape: f32[2,16,128], index: 0, kind: input, shape index: {}, may-alias: {0,1,2}]
  %s1 = inlined_call_operand.vmem [shape: f32[2,16,128], index: 1, kind: input, shape index: {}, may-alias: {0,1,2}]
  %s2 = inlined_call_operand.vmem [shape: f32[2,16,128], index: 2, kind: input, shape index: {}, may-alias: {0,1,2}]
  %s3 = inlined_call_operand.hbm [shape: bf16[3,128,128], index: 3, kind: input, shape index: {}]
  %s4 = inlined_call_operand.vmem [shape: f32[1,128], index: 4, kind: input, shape index: {}]
  %s5 = inlined_call_operand.vmem [shape: bf16[9,128,128], index: 5, kind: input, shape index: {}]
  %s6 = inlined_call_operand.vmem [shape: f32[3,1,128], index: 6, kind: input, shape index: {}]
  %s7 = inlined_call_operand.vmem [shape: bf16[3,128,128], index: 7, kind: input, shape index: {}]
  %s8 = inlined_call_operand.vmem [shape: f32[3,1,128], index: 8, kind: input, shape index: {}]
  %s9 = inlined_call_operand.vmem [shape: f32[2,16,128], index: 9, kind: output, shape index: {}]
  %s10 = sld [smem:[#allocation0]]
  $region73: #{mel_encoder_forward.3} parent=0
    _
  %s12 = ssub.s32 1, %s10
  %s13 = scalar_select 0, %s12, %s10
  $region1: #{mel_encoder_forward.3} parent=0
    #allocation3 [shape = 'u8[98304]{0}', space=vmem, size = 0x18000, scoped, tag = 'input window, operand 3, single buffered']
    #allocation4 [shape = 's32[2]{0}', space=sflag, size = 0x8, scoped, tag = 'scoped memory for mel_encoder_forward.3']
    %14 = vsyncpa [#allocation4], 0
    loop: start=0, step=1, limit=4
    $region2: #{mel_encoder_forward.3} parent=1 // loop_pre_header
      _
    $region3: #{mel_encoder_forward.3} parent=1 // loop_header
      %s16 = sphi 0, %s20
      %p17 = scmp.ge.s32.totalorder %s16, 4
      %s23 = sphi 0, %s35
      %s24 = sphi 0, %s31
      %s25 = sphi 0, %s23
      %s26 = sphi 0, %s24
      %s27 = sphi 0, %s25
      %s28 = sphi 0, %s26
      %s48 = sphi 0, %s50
      %s51 = sphi 0, %s48
      %s52 = sphi 0, %s51
      %s68 = sphi 0, %s52
      %s76 = sphi 0, %s78
      %s79 = sphi 0, %s76
      %s80 = sphi 0, %s79
      %s96 = sphi 0, %s80
      %s112 = sphi 0, %s114
      %s115 = sphi 0, %s112
      %s116 = sphi 0, %s115
      %s132 = sphi 0, %s116
      %s136 = sphi 0, %s136
      %s138 = sphi 0, %s136
      %s139 = sphi 0, %s138
      %s153 = sphi 0, %s139
      %s157 = sphi 0, %s157
      %s159 = sphi 0, %s157
      %s160 = sphi 0, %s159
      %s174 = sphi 0, %s160
      %s178 = sphi 0, %s178
      %s180 = sphi 0, %s178
      %s181 = sphi 0, %s180
      %s195 = sphi 0, %s181
      %s199 = sphi 0, %s199
      %s201 = sphi 0, %s199
      %s202 = sphi 0, %s201
      %s216 = sphi 0, %s202
      %s220 = sphi 0, %s220
      %s222 = sphi 0, %s220
      %s223 = sphi 0, %s222
      %s237 = sphi 0, %s223
      %s241 = sphi 0, %s241
      %s243 = sphi 0, %s241
      %s244 = sphi 0, %s243
      %s258 = sphi 0, %s244
      %s266 = sphi 0, %s268
      %s269 = sphi 0, %s266
      %s270 = sphi 0, %s269
      %s286 = sphi 0, %s270
    $region4: #{mel_encoder_forward.3} parent=1 // loop_header_branch
      %19 = sbr.rel (%p17) target = $region8
    $region5: #{mel_encoder_forward.3} parent=1 // loop_body
      %s21 = ssub.s32 %s16, 1
      %s22 = ssub.s32 %s16, 2
      %s29 = sadd.s32 1, %s24
      %p30 = scmp.ge.s32.totalorder %s29, 1
      %s31 = scalar_select %p30, 0, %s29
      %s32 = sadd.s32 1, %s23
      %s33 = scalar_select %p30, %s32, %s23
      %p34 = scmp.ge.s32.totalorder %s33, 2
      %s35 = scalar_select %p34, 0, %s33
      %s36 = smul.u32 %s24, 2
      %s37 = ssub.s32 %s36, 1
      %p38 = scmp.gt.s32.totalorder %s37, 0
      %s39 = scalar_select %p38, %s37, 0
      %s40 = smul.u32 %s31, 2
      %s41 = ssub.s32 %s40, 1
      %p42 = scmp.gt.s32.totalorder %s41, 0
      %s43 = scalar_select %p42, %s41, 0
      %s44 = ssub.s32 %s23, %s35
      %s45 = ssub.s32 %s39, %s43
      %s46 = sor.u32 %s44, %s45
      %p47 = scmp.eq.s32.totalorder %s46, 0
      %s49 = sadd.s32 %s48, 1
      %s50 = scalar_select %p47, %s48, %s49
      %p53 = pneg %p47
      %p54 = scmp.eq.s32.totalorder %s16, 1
      %p55 = por %p53, %p54
      %p56 = scmp.ne.s32.totalorder %s48, %s51
      %p57 = scmp.eq.s32.totalorder %s16, 0
      %p58 = por %p56, %p57
      %p59 = scmp.ne.s32.totalorder %s48, %s51
      %p60 = scmp.eq.s32.totalorder %s21, 1
      %p61 = por %p59, %p60
      %p62 = scmp.ne.s32.totalorder %s51, %s52
      %p63 = scmp.eq.s32.totalorder %s21, 0
      %p64 = por %p62, %p63
      %p65 = scmp.ne.s32.totalorder %s51, %s52
      %p66 = scmp.eq.s32.totalorder %s22, 1
      %p67 = por %p65, %p66
      %p69 = scmp.ne.s32.totalorder %s52, %s68
      %p70 = scmp.eq.s32.totalorder %s22, 0
      %p71 = por %p69, %p70
      %s72 = ssub.s32 %s23, %s35
      %s73 = ssub.s32 %s24, %s31
      %s74 = sor.u32 %s72, %s73
      %p75 = scmp.eq.s32.totalorder %s74, 0
      %s77 = sadd.s32 %s76, 1
      %s78 = scalar_select %p75, %s76, %s77
      %p81 = pneg %p75
      %p82 = scmp.eq.s32.totalorder %s16, 1
      %p83 = por %p81, %p82
      %p84 = scmp.ne.s32.totalorder %s76, %s79
      %p85 = scmp.eq.s32.totalorder %s16, 0
      %p86 = por %p84, %p85
      %p87 = scmp.ne.s32.totalorder %s76, %s79
      %p88 = scmp.eq.s32.totalorder %s21, 1
      %p89 = por %p87, %p88
      %p90 = scmp.ne.s32.totalorder %s79, %s80
      %p91 = scmp.eq.s32.totalorder %s21, 0
      %p92 = por %p90, %p91
      %p93 = scmp.ne.s32.totalorder %s79, %s80
      %p94 = scmp.eq.s32.totalorder %s22, 1
      %p95 = por %p93, %p94
      %p97 = scmp.ne.s32.totalorder %s80, %s96
      %p98 = scmp.eq.s32.totalorder %s22, 0
      %p99 = por %p97, %p98
      %s100 = sadd.s32 %s24, 1
      %s101 = smul.u32 %s100, 2
      %p102 = scmp.lt.s32.totalorder %s101, 1
      %s103 = scalar_select %p102, %s101, 1
      %s104 = sadd.s32 %s31, 1
      %s105 = smul.u32 %s104, 2
      %p106 = scmp.lt.s32.totalorder %s105, 1
      %s107 = scalar_select %p106, %s105, 1
      %s108 = ssub.s32 %s23, %s35
      %s109 = ssub.s32 %s103, %s107
      %s110 = sor.u32 %s108, %s109
      %p111 = scmp.eq.s32.totalorder %s110, 0
      %s113 = sadd.s32 %s112, 1
      %s114 = scalar_select %p111, %s112, %s113
      %p117 = pneg %p111
      %p118 = scmp.eq.s32.totalorder %s16, 1
      %p119 = por %p117, %p118
      %p120 = scmp.ne.s32.totalorder %s112, %s115
      %p121 = scmp.eq.s32.totalorder %s16, 0
      %p122 = por %p120, %p121
      %p123 = scmp.ne.s32.totalorder %s112, %s115
      %p124 = scmp.eq.s32.totalorder %s21, 1
      %p125 = por %p123, %p124
      %p126 = scmp.ne.s32.totalorder %s115, %s116
      %p127 = scmp.eq.s32.totalorder %s21, 0
      %p128 = por %p126, %p127
      %p129 = scmp.ne.s32.totalorder %s115, %s116
      %p130 = scmp.eq.s32.totalorder %s22, 1
      %p131 = por %p129, %p130
      %p133 = scmp.ne.s32.totalorder %s116, %s132
      %p134 = scmp.eq.s32.totalorder %s22, 0
      %p135 = por %p133, %p134
      %s137 = sadd.s32 %s136, 1
      %p140 = scmp.eq.s32.totalorder %s16, 1
      %p141 = scmp.ne.s32.totalorder %s136, %s138
      %p142 = scmp.eq.s32.totalorder %s16, 0
      %p143 = por %p141, %p142
      %p144 = scmp.ne.s32.totalorder %s136, %s138
      %p145 = scmp.eq.s32.totalorder %s21, 1
      %p146 = por %p144, %p145
      %p147 = scmp.ne.s32.totalorder %s138, %s139
      %p148 = scmp.eq.s32.totalorder %s21, 0
      %p149 = por %p147, %p148
      %p150 = scmp.ne.s32.totalorder %s138, %s139
      %p151 = scmp.eq.s32.totalorder %s22, 1
      %p152 = por %p150, %p151
      %p154 = scmp.ne.s32.totalorder %s139, %s153
      %p155 = scmp.eq.s32.totalorder %s22, 0
      %p156 = por %p154, %p155
      %s158 = sadd.s32 %s157, 1
      %p161 = scmp.eq.s32.totalorder %s16, 1
      %p162 = scmp.ne.s32.totalorder %s157, %s159
      %p163 = scmp.eq.s32.totalorder %s16, 0
      %p164 = por %p162, %p163
      %p165 = scmp.ne.s32.totalorder %s157, %s159
      %p166 = scmp.eq.s32.totalorder %s21, 1
      %p167 = por %p165, %p166
      %p168 = scmp.ne.s32.totalorder %s159, %s160
      %p169 = scmp.eq.s32.totalorder %s21, 0
      %p170 = por %p168, %p169
      %p171 = scmp.ne.s32.totalorder %s159, %s160
      %p172 = scmp.eq.s32.totalorder %s22, 1
      %p173 = por %p171, %p172
      %p175 = scmp.ne.s32.totalorder %s160, %s174
      %p176 = scmp.eq.s32.totalorder %s22, 0
      %p177 = por %p175, %p176
      %s179 = sadd.s32 %s178, 1
      %p182 = scmp.eq.s32.totalorder %s16, 1
      %p183 = scmp.ne.s32.totalorder %s178, %s180
      %p184 = scmp.eq.s32.totalorder %s16, 0
      %p185 = por %p183, %p184
      %p186 = scmp.ne.s32.totalorder %s178, %s180
      %p187 = scmp.eq.s32.totalorder %s21, 1
      %p188 = por %p186, %p187
      %p189 = scmp.ne.s32.totalorder %s180, %s181
      %p190 = scmp.eq.s32.totalorder %s21, 0
      %p191 = por %p189, %p190
      %p192 = scmp.ne.s32.totalorder %s180, %s181
      %p193 = scmp.eq.s32.totalorder %s22, 1
      %p194 = por %p192, %p193
      %p196 = scmp.ne.s32.totalorder %s181, %s195
      %p197 = scmp.eq.s32.totalorder %s22, 0
      %p198 = por %p196, %p197
      %s200 = sadd.s32 %s199, 1
      %p203 = scmp.eq.s32.totalorder %s16, 1
      %p204 = scmp.ne.s32.totalorder %s199, %s201
      %p205 = scmp.eq.s32.totalorder %s16, 0
      %p206 = por %p204, %p205
      %p207 = scmp.ne.s32.totalorder %s199, %s201
      %p208 = scmp.eq.s32.totalorder %s21, 1
      %p209 = por %p207, %p208
      %p210 = scmp.ne.s32.totalorder %s201, %s202
      %p211 = scmp.eq.s32.totalorder %s21, 0
      %p212 = por %p210, %p211
      %p213 = scmp.ne.s32.totalorder %s201, %s202
      %p214 = scmp.eq.s32.totalorder %s22, 1
      %p215 = por %p213, %p214
      %p217 = scmp.ne.s32.totalorder %s202, %s216
      %p218 = scmp.eq.s32.totalorder %s22, 0
      %p219 = por %p217, %p218
      %s221 = sadd.s32 %s220, 1
      %p224 = scmp.eq.s32.totalorder %s16, 1
      %p225 = scmp.ne.s32.totalorder %s220, %s222
      %p226 = scmp.eq.s32.totalorder %s16, 0
      %p227 = por %p225, %p226
      %p228 = scmp.ne.s32.totalorder %s220, %s222
      %p229 = scmp.eq.s32.totalorder %s21, 1
      %p230 = por %p228, %p229
      %p231 = scmp.ne.s32.totalorder %s222, %s223
      %p232 = scmp.eq.s32.totalorder %s21, 0
      %p233 = por %p231, %p232
      %p234 = scmp.ne.s32.totalorder %s222, %s223
      %p235 = scmp.eq.s32.totalorder %s22, 1
      %p236 = por %p234, %p235
      %p238 = scmp.ne.s32.totalorder %s223, %s237
      %p239 = scmp.eq.s32.totalorder %s22, 0
      %p240 = por %p238, %p239
      %s242 = sadd.s32 %s241, 1
      %p245 = scmp.eq.s32.totalorder %s16, 1
      %p246 = scmp.ne.s32.totalorder %s241, %s243
      %p247 = scmp.eq.s32.totalorder %s16, 0
      %p248 = por %p246, %p247
      %p249 = scmp.ne.s32.totalorder %s241, %s243
      %p250 = scmp.eq.s32.totalorder %s21, 1
      %p251 = por %p249, %p250
      %p252 = scmp.ne.s32.totalorder %s243, %s244
      %p253 = scmp.eq.s32.totalorder %s21, 0
      %p254 = por %p252, %p253
      %p255 = scmp.ne.s32.totalorder %s243, %s244
      %p256 = scmp.eq.s32.totalorder %s22, 1
      %p257 = por %p255, %p256
      %p259 = scmp.ne.s32.totalorder %s244, %s258
      %p260 = scmp.eq.s32.totalorder %s22, 0
      %p261 = por %p259, %p260
      %s262 = ssub.s32 %s23, %s35
      %s263 = ssub.s32 %s24, %s31
      %s264 = sor.u32 %s262, %s263
      %p265 = scmp.eq.s32.totalorder %s264, 0
      %s267 = sadd.s32 %s266, 1
      %s268 = scalar_select %p265, %s266, %s267
      %p271 = pneg %p265
      %p272 = scmp.eq.s32.totalorder %s16, 1
      %p273 = por %p271, %p272
      %p274 = scmp.ne.s32.totalorder %s266, %s269
      %p275 = scmp.eq.s32.totalorder %s16, 0
      %p276 = por %p274, %p275
      %p277 = scmp.ne.s32.totalorder %s266, %s269
      %p278 = scmp.eq.s32.totalorder %s21, 1
      %p279 = por %p277, %p278
      %p280 = scmp.ne.s32.totalorder %s269, %s270
      %p281 = scmp.eq.s32.totalorder %s21, 0
      %p282 = por %p280, %p281
      %p283 = scmp.ne.s32.totalorder %s269, %s270
      %p284 = scmp.eq.s32.totalorder %s22, 1
      %p285 = por %p283, %p284
      %p287 = scmp.ne.s32.totalorder %s270, %s286
      %p288 = scmp.eq.s32.totalorder %s22, 0
      %p289 = por %p287, %p288
      %p290 = scmp.le.s32.totalorder 1, %s16
      %p291 = scmp.lt.s32.totalorder %s16, 3
      %p292 = pnand %p290, %p291
      %p293 = pneg %p292
      // Predicated region
      $region9: #{mel_encoder_forward.3} parent=5 // pred_check
        _
      $region10: #{mel_encoder_forward.3} parent=5 // pred_check_branch
        %295 = sbr.rel (%p292) target = $region12
      $region11: #{mel_encoder_forward.3} parent=5 // pred_region
        %s296 = ssub.s32 %s16, 1
        // Predicated region
        $region13: #{mel_encoder_forward.3} parent=11 // pred_check
          %p297 = pneg %p149
        $region14: #{mel_encoder_forward.3} parent=11 // pred_check_branch
          %299 = sbr.rel (%p297) target = $region16
        $region15: #{mel_encoder_forward.3} parent=11 // pred_region
          %s301 = ssub.s32 3072, 3072
          %302 = vsyncadd [#allocation4], %s301
          %s303 = sshll.u32 [#allocation3], 4
          %s304 = int_to_ptr.vmem [resolvable:$true] %s303
          %309 = dma.hbm_to_vmem [thread:$0]  %s3, 3072, %s304, [#allocation4], 64, 64, 4
        $region16: #{mel_encoder_forward.3} parent=11 // pred_fallthru
          _
        // Predicated region
        $region17: #{mel_encoder_forward.3} parent=11 // pred_check
          %p310 = pneg %p170
        $region18: #{mel_encoder_forward.3} parent=11 // pred_check_branch
          %312 = sbr.rel (%p310) target = $region20
        $region19: #{mel_encoder_forward.3} parent=11 // pred_region
          _
        $region20: #{mel_encoder_forward.3} parent=11 // pred_fallthru
          _
        // Predicated region
        $region21: #{mel_encoder_forward.3} parent=11 // pred_check
          %p313 = pneg %p191
        $region22: #{mel_encoder_forward.3} parent=11 // pred_check_branch
          %315 = sbr.rel (%p313) target = $region24
        $region23: #{mel_encoder_forward.3} parent=11 // pred_region
          _
        $region24: #{mel_encoder_forward.3} parent=11 // pred_fallthru
          _
        // Predicated region
        $region25: #{mel_encoder_forward.3} parent=11 // pred_check
          %p316 = pneg %p212
        $region26: #{mel_encoder_forward.3} parent=11 // pred_check_branch
          %318 = sbr.rel (%p316) target = $region28
        $region27: #{mel_encoder_forward.3} parent=11 // pred_region
          _
        $region28: #{mel_encoder_forward.3} parent=11 // pred_fallthru
          _
        // Predicated region
        $region29: #{mel_encoder_forward.3} parent=11 // pred_check
          %p319 = pneg %p233
        $region30: #{mel_encoder_forward.3} parent=11 // pred_check_branch
          %321 = sbr.rel (%p319) target = $region32
        $region31: #{mel_encoder_forward.3} parent=11 // pred_region
          _
        $region32: #{mel_encoder_forward.3} parent=11 // pred_fallthru
          _
        // Predicated region
        $region33: #{mel_encoder_forward.3} parent=11 // pred_check
          %p322 = pneg %p254
        $region34: #{mel_encoder_forward.3} parent=11 // pred_check_branch
          %324 = sbr.rel (%p322) target = $region36
        $region35: #{mel_encoder_forward.3} parent=11 // pred_region
          _
        $region36: #{mel_encoder_forward.3} parent=11 // pred_fallthru
          _
      $region12: #{mel_encoder_forward.3} parent=5 // pred_fallthru
        _
      %p325 = scmp.lt.s32.totalorder %s16, 2
      // Predicated region
      $region37: #{mel_encoder_forward.3} parent=5 // pred_check
        %p326 = pneg %p325
      $region38: #{mel_encoder_forward.3} parent=5 // pred_check_branch
        %328 = sbr.rel (%p326) target = $region40
      $region39: #{mel_encoder_forward.3} parent=5 // pred_region
        // Predicated region
        $region41: #{mel_encoder_forward.3} parent=39 // pred_check
          %p329 = pneg %p58
        $region42: #{mel_encoder_forward.3} parent=39 // pred_check_branch
          %331 = sbr.rel (%p329) target = $region44
        $region43: #{mel_encoder_forward.3} parent=39 // pred_region
          %s332 = smul.u32 %s24, 2
          %s333 = ssub.s32 %s332, 1
          %p334 = scmp.gt.s32.totalorder %s333, 0
          %s335 = scalar_select %p334, %s333, 0
          %p336 = scmp.lt.s32.totalorder %s23, 1
          %s337 = scalar_select %p336, %s23, 1
          %p338 = scmp.lt.s32.totalorder %s335, 1
          %s339 = scalar_select %p338, %s335, 1
          %s340 = smul.addr %s337, 2
          %s341 = sadd.s32 %s339, %s340
          %s342 = smul.addr %s341, 8
          %s343 = scalar_lea.vmem %s0, %s342
          %s344 = smul.u32 %s24, 2
          %s345 = ssub.s32 %s344, 1
          %p346 = scmp.gt.s32.totalorder %s345, 0
          %s347 = scalar_select %p346, %s345, 0
        $region44: #{mel_encoder_forward.3} parent=39 // pred_fallthru
          _
        // Predicated region
        $region45: #{mel_encoder_forward.3} parent=39 // pred_check
          %p348 = pneg %p86
        $region46: #{mel_encoder_forward.3} parent=39 // pred_check_branch
          %350 = sbr.rel (%p348) target = $region48
        $region47: #{mel_encoder_forward.3} parent=39 // pred_region
          %s351 = smul.u32 2, %s24
          %p352 = scmp.lt.s32.totalorder %s23, 1
          %s353 = scalar_select %p352, %s23, 1
          %p354 = scmp.lt.s32.totalorder %s351, 1
          %s355 = scalar_select %p354, %s351, 1
          %s356 = smul.addr %s353, 2
          %s357 = sadd.s32 %s355, %s356
          %s358 = smul.addr %s357, 8
          %s359 = scalar_lea.vmem %s1, %s358
          %s360 = smul.u32 2, %s24
        $region48: #{mel_encoder_forward.3} parent=39 // pred_fallthru
          _
        // Predicated region
        $region49: #{mel_encoder_forward.3} parent=39 // pred_check
          %p361 = pneg %p122
        $region50: #{mel_encoder_forward.3} parent=39 // pred_check_branch
          %363 = sbr.rel (%p361) target = $region52
        $region51: #{mel_encoder_forward.3} parent=39 // pred_region
          %s364 = sadd.s32 %s24, 1
          %s365 = smul.u32 %s364, 2
          %p366 = scmp.lt.s32.totalorder %s365, 1
          %s367 = scalar_select %p366, %s365, 1
          %p368 = scmp.lt.s32.totalorder %s23, 1
          %s369 = scalar_select %p368, %s23, 1
          %p370 = scmp.lt.s32.totalorder %s367, 1
          %s371 = scalar_select %p370, %s367, 1
          %s372 = smul.addr %s369, 2
          %s373 = sadd.s32 %s371, %s372
          %s374 = smul.addr %s373, 8
          %s375 = scalar_lea.vmem %s2, %s374
          %s376 = sadd.s32 %s24, 1
          %s377 = smul.u32 %s376, 2
          %p378 = scmp.lt.s32.totalorder %s377, 1
          %s379 = scalar_select %p378, %s377, 1
        $region52: #{mel_encoder_forward.3} parent=39 // pred_fallthru
          _
      $region40: #{mel_encoder_forward.3} parent=5 // pred_fallthru
        _
      %p380 = scmp.le.s32.totalorder 1, %s16
      %p381 = scmp.lt.s32.totalorder %s16, 3
      %p382 = pnand %p380, %p381
      %p383 = pneg %p382
      // Predicated region
      $region53: #{mel_encoder_forward.3} parent=5 // pred_check
        _
      $region54: #{mel_encoder_forward.3} parent=5 // pred_check_branch
        %385 = sbr.rel (%p382) target = $region56
      $region55: #{mel_encoder_forward.3} parent=5 // pred_region
        %s386 = ssub.s32 %s16, 1
        // Predicated region
        $region57: #{mel_encoder_forward.3} parent=55 // pred_check
          %p387 = pneg %p149
        $region58: #{mel_encoder_forward.3} parent=55 // pred_check_branch
          %389 = sbr.rel (%p387) target = $region60
        $region59: #{mel_encoder_forward.3} parent=55 // pred_region
          %390 = dma.done [#allocation4], 3072
        $region60: #{mel_encoder_forward.3} parent=55 // pred_fallthru
          _
        %s391 = smul.u32 %s26, 2
        %s392 = ssub.s32 %s391, 1
        %p393 = scmp.gt.s32.totalorder %s392, 0
        %s394 = scalar_select %p393, %s392, 0
        %p395 = scmp.lt.s32.totalorder %s25, 1
        %s396 = scalar_select %p395, %s25, 1
        %p397 = scmp.lt.s32.totalorder %s394, 1
        %s398 = scalar_select %p397, %s394, 1
        %s399 = smul.addr %s396, 2
        %s400 = sadd.s32 %s398, %s399
        %s401 = smul.addr %s400, 8
        %s402 = scalar_lea.vmem %s0, %s401
        %p403 = pneg %p64
        %p404 = pneg %p61
        %s405 = smul.u32 2, %s26
        %p406 = scmp.lt.s32.totalorder %s25, 1
        %s407 = scalar_select %p406, %s25, 1
        %p408 = scmp.lt.s32.totalorder %s405, 1
        %s409 = scalar_select %p408, %s405, 1
        %s410 = smul.addr %s407, 2
        %s411 = sadd.s32 %s409, %s410
        %s412 = smul.addr %s411, 8
        %s413 = scalar_lea.vmem %s1, %s412
        %p414 = pneg %p92
        %p415 = pneg %p89
        %s416 = sadd.s32 %s26, 1
        %s417 = smul.u32 %s416, 2
        %p418 = scmp.lt.s32.totalorder %s417, 1
        %s419 = scalar_select %p418, %s417, 1
        %p420 = scmp.lt.s32.totalorder %s25, 1
        %s421 = scalar_select %p420, %s25, 1
        %p422 = scmp.lt.s32.totalorder %s419, 1
        %s423 = scalar_select %p422, %s419, 1
        %s424 = smul.addr %s421, 2
        %s425 = sadd.s32 %s423, %s424
        %s426 = smul.addr %s425, 8
        %s427 = scalar_lea.vmem %s2, %s426
        %p428 = pneg %p128
        %p429 = pneg %p125
        %p430 = pneg %p149
        %p431 = pneg %p146
        %p432 = pneg %p170
        %p433 = pneg %p167
        %p434 = pneg %p191
        %p435 = pneg %p188
        %p436 = pneg %p212
        %p437 = pneg %p209
        %p438 = pneg %p233
        %p439 = pneg %p230
        %p440 = pneg %p254
        %p441 = pneg %p251
        %p442 = pneg %p282
        %p443 = pneg %p279
        %s444 = smul.u32 2, %s26
        %p445 = scmp.lt.s32.totalorder %s25, 1
        %s446 = scalar_select %p445, %s25, 1
        %p447 = scmp.lt.s32.totalorder %s444, 1
        %s448 = scalar_select %p447, %s444, 1
        %s449 = smul.addr %s446, 2
        %s450 = sadd.s32 %s448, %s449
        %s451 = smul.addr %s450, 8
        %s452 = scalar_lea.vmem %s9, %s451
        %s453 = smul.u32 %s26, 2
        %s454 = ssub.s32 %s453, 1
        %p455 = scmp.gt.s32.totalorder %s454, 0
        %s456 = scalar_select %p455, %s454, 0
        %p457 = scmp.lt.s32.totalorder %s25, 1
        %s458 = scalar_select %p457, %s25, 1
        %p459 = scmp.lt.s32.totalorder %s456, 1
        %s460 = scalar_select %p459, %s456, 1
        %s461 = smul.addr %s458, 2
        %s462 = sadd.s32 %s460, %s461
        %s463 = smul.addr %s462, 8
        %s464 = scalar_lea.vmem %s0, %s463
        %s465 = smul.u32 %s26, 2
        %s466 = ssub.s32 %s465, 1
        %p467 = scmp.gt.s32.totalorder %s466, 0
        %s468 = scalar_select %p467, %s466, 0
        %s469 = smul.u32 2, %s26
        %p470 = scmp.lt.s32.totalorder %s25, 1
        %s471 = scalar_select %p470, %s25, 1
        %p472 = scmp.lt.s32.totalorder %s469, 1
        %s473 = scalar_select %p472, %s469, 1
        %s474 = smul.addr %s471, 2
        %s475 = sadd.s32 %s473, %s474
        %s476 = smul.addr %s475, 8
        %s477 = scalar_lea.vmem %s1, %s476
        %s478 = smul.u32 2, %s26
        %s479 = sadd.s32 %s26, 1
        %s480 = smul.u32 %s479, 2
        %p481 = scmp.lt.s32.totalorder %s480, 1
        %s482 = scalar_select %p481, %s480, 1
        %p483 = scmp.lt.s32.totalorder %s25, 1
        %s484 = scalar_select %p483, %s25, 1
        %p485 = scmp.lt.s32.totalorder %s482, 1
        %s486 = scalar_select %p485, %s482, 1
        %s487 = smul.addr %s484, 2
        %s488 = sadd.s32 %s486, %s487
        %s489 = smul.addr %s488, 8
        %s490 = scalar_lea.vmem %s2, %s489
        %s491 = sadd.s32 %s26, 1
        %s492 = smul.u32 %s491, 2
        %p493 = scmp.lt.s32.totalorder %s492, 1
        %s494 = scalar_select %p493, %s492, 1
        %s495 = smul.u32 2, %s26
        %p496 = scmp.lt.s32.totalorder %s25, 1
        %s497 = scalar_select %p496, %s25, 1
        %p498 = scmp.lt.s32.totalorder %s495, 1
        %s499 = scalar_select %p498, %s495, 1
        %s500 = smul.addr %s497, 2
        %s501 = sadd.s32 %s499, %s500
        %s502 = smul.addr %s501, 8
        %s503 = scalar_lea.vmem %s9, %s502
        %s504 = smul.u32 2, %s26
        %v506 = vld [vmem:[%s464] sm:$0xff]
        %507 = vst [vmem:[#allocation2] sm:$0xff] %v506
        %v508 = vld [vmem:[%s477] sm:$0xff]
        %v509 = vld [vmem:[%s477 + $0x8] sm:$0xff]
        %510 = vst [vmem:[#allocation2 + $0x8] sm:$0xff] %v508
        %511 = vst [vmem:[#allocation2 + $0x10] sm:$0xff] %v509
        %v512 = vld [vmem:[%s490] sm:$0xff]
        %513 = vst [vmem:[#allocation2 + $0x18] sm:$0xff] %v512
        %s514 = smul.u32 %s26, 16
        %s515 = ssub.s32 %s514, 8
        %v516 = vlaneseq
        %v517 = vshrl.u32 %v516, 7
        %v518 = vadd.s32 %v517, 8
        %v519 = vadd.s32 %v517, 16
        %v520 = vadd.s32 %v517, 24
        %v521 = vstv %s515
        %v522 = vadd.s32 %v521, %v517
        %v523 = vadd.s32 %v521, %v518
        %v524 = vadd.s32 %v521, %v519
        %v525 = vadd.s32 %v521, %v520
        %vm526 = vcmp.ge.s32.totalorder %v522, 0
        %vm527 = vcmp.ge.s32.totalorder %v523, 0
        %vm528 = vcmp.ge.s32.totalorder %v524, 0
        %vm529 = vcmp.ge.s32.totalorder %v525, 0
        %vm530 = vcmp.lt.s32.totalorder %v522, 16
        %vm531 = vcmp.lt.s32.totalorder %v523, 16
        %vm532 = vcmp.lt.s32.totalorder %v524, 16
        %vm533 = vcmp.lt.s32.totalorder %v525, 16
        %vm534 = vmand %vm526, %vm530
        %vm535 = vmand %vm527, %vm531
        %vm536 = vmand %vm528, %vm532
        %vm537 = vmand %vm529, %vm533
        %v538 = vsel %vm534, 1, 0
        %v539 = vsel %vm535, 1, 0
        %v540 = vsel %vm536, 1, 0
        %v541 = vsel %vm537, 1, 0
        %v542 = vcvt.s32.f32 %v538
        %v543 = vcvt.s32.f32 %v539
        %v544 = vcvt.s32.f32 %v540
        %v545 = vcvt.s32.f32 %v541
        %v546 = vld [vmem:[#allocation2 + $0x4] sm:$0xff]
        %v547 = vld [vmem:[#allocation2 + $0xc] sm:$0xff]
        %v548 = vld [vmem:[#allocation2 + $0x14] sm:$0xff]
        %vm553 = vcmask 1043456
        %v554 = vrot.slane %v542, 4
        %v555 = vrot.slane %v543, 4
        %v556 = vsel %vm553, %v554, %v555
        %v557 = vrot.slane %v544, 4
        %v558 = vsel %vm553, %v555, %v557
        %v559 = vrot.slane %v545, 4
        %v560 = vsel %vm553, %v557, %v559
        %v564 = vmul.f32 %v546, %v556
        %v565 = vmul.f32 %v547, %v558
        %v566 = vmul.f32 %v548, %v560
        %v567 = vpack.c.bf16 %v565, %v564
        %v568 = vpack.c.bf16 %v566, %v566
        %v569 = vld [vmem:[#allocation3] sm:$0xf]
        %v570 = vld [vmem:[#allocation3 + $0x4] sm:$0xf]
        %v571 = vld [vmem:[#allocation3 + $0x8] sm:$0xf]
        %v572 = vld [vmem:[#allocation3 + $0xc] sm:$0xf]
        %v573 = vld [vmem:[#allocation3 + $0x10] sm:$0xf]
        %v574 = vld [vmem:[#allocation3 + $0x14] sm:$0xf]
        %v575 = vld [vmem:[#allocation3 + $0x18] sm:$0xf]
        %v576 = vld [vmem:[#allocation3 + $0x1c] sm:$0xf]
        %v577 = vld [vmem:[#allocation3 + $0x20] sm:$0xf]
        %v578 = vld [vmem:[#allocation3 + $0x24] sm:$0xf]
        %v579 = vld [vmem:[#allocation3 + $0x28] sm:$0xf]
        %v580 = vld [vmem:[#allocation3 + $0x2c] sm:$0xf]
        %v581 = vld [vmem:[#allocation3 + $0x30] sm:$0xf]
        %v582 = vld [vmem:[#allocation3 + $0x34] sm:$0xf]
        %v583 = vld [vmem:[#allocation3 + $0x38] sm:$0xf]
        %v584 = vld [vmem:[#allocation3 + $0x3c] sm:$0xf]
        %s585 = scalar_lea.vmem [#allocation3], 64
        %v586 = vld [vmem:[%s585] sm:$0xf]
        %v587 = vld [vmem:[%s585 + $0x4] sm:$0xf]
        %v588 = vld [vmem:[%s585 + $0x8] sm:$0xf]
        %v589 = vld [vmem:[%s585 + $0xc] sm:$0xf]
        %v590 = vld [vmem:[%s585 + $0x10] sm:$0xf]
        %v591 = vld [vmem:[%s585 + $0x14] sm:$0xf]
        %v592 = vld [vmem:[%s585 + $0x18] sm:$0xf]
        %v593 = vld [vmem:[%s585 + $0x1c] sm:$0xf]
        %v594 = vld [vmem:[%s585 + $0x20] sm:$0xf]
        %v595 = vld [vmem:[%s585 + $0x24] sm:$0xf]
        %v596 = vld [vmem:[%s585 + $0x28] sm:$0xf]
        %v597 = vld [vmem:[%s585 + $0x2c] sm:$0xf]
        %v598 = vld [vmem:[%s585 + $0x30] sm:$0xf]
        %v599 = vld [vmem:[%s585 + $0x34] sm:$0xf]
        %v600 = vld [vmem:[%s585 + $0x38] sm:$0xf]
        %v601 = vld [vmem:[%s585 + $0x3c] sm:$0xf]
        %vm602 = vsmask.f32 7424
        %v604 = vshrl.u32 %v567, 16
        %v606 = vshll.u32 %v567, 16
        %v608 = vrot.slane %v606, 1
        %v609 = vor.u32 %v604, %v608
        %v611 = vshll.u32 %v568, 16
        %v613 = vrot.slane %v611, 1
        %v614 = vsel %vm602, %v609, %v613
        %v615 = vshrl.u32 %v568, 16
        %v617 = vor.u32 %v615, %v613
        %v636 = vunpack.c.l.b16 %v586
        %v637 = vunpack.c.l.b16 %v587
        %v638 = vunpack.c.l.b16 %v588
        %v639 = vunpack.c.l.b16 %v589
        %v640 = vunpack.c.l.b16 %v590
        %v641 = vunpack.c.l.b16 %v591
        %v642 = vunpack.c.l.b16 %v592
        %v643 = vunpack.c.l.b16 %v593
        %v644 = vunpack.c.l.b16 %v594
        %v645 = vunpack.c.l.b16 %v595
        %v646 = vunpack.c.l.b16 %v596
        %v647 = vunpack.c.l.b16 %v597
        %v648 = vunpack.c.l.b16 %v598
        %v649 = vunpack.c.l.b16 %v599
        %v650 = vunpack.c.l.b16 %v600
        %v651 = vunpack.c.l.b16 %v601
        %v652 = vpack.c.b16 %v637, %v636
        %v653 = vpack.c.b16 %v639, %v638
        %v654 = vpack.c.b16 %v641, %v640
        %v655 = vpack.c.b16 %v643, %v642
        %v656 = vpack.c.b16 %v645, %v644
        %v657 = vpack.c.b16 %v647, %v646
        %v658 = vpack.c.b16 %v649, %v648
        %v659 = vpack.c.b16 %v651, %v650
        %668 = vmatprep.subr.bf16.mxu0 0
        %669 = vmatpush1.bf16.msra.mxu0 %v652
        %670 = vmatprep.subr.bf16.mxu0 0
        %671 = vmatpush1.bf16.msra.mxu0 %v653
        %672 = vmatprep.subr.bf16.mxu0 0
        %673 = vmatpush1.bf16.msra.mxu0 %v654
        %674 = vmatprep.subr.bf16.mxu0 0
        %675 = vmatpush1.bf16.msra.mxu0 %v655
        %676 = vmatprep.subr.bf16.mxu0 0
        %677 = vmatpush1.bf16.msra.mxu0 %v656
        %678 = vmatprep.subr.bf16.mxu0 0
        %679 = vmatpush1.bf16.msra.mxu0 %v657
        %680 = vmatprep.subr.bf16.mxu0 0
        %681 = vmatpush1.bf16.msra.mxu0 %v658
        %682 = vmatprep.subr.bf16.mxu0 0
        %683 = vmatpush1.bf16.msra.mxu0 %v659
        %684 = vmatprep.subr.bf16.mxu0 0
        %685 = vmatpush1.bf16.msra.mxu0 0
        %686 = vmatprep.subr.bf16.mxu0 0
        %687 = vmatpush1.bf16.msra.mxu0 0
        %688 = vmatprep.subr.bf16.mxu0 0
        %689 = vmatpush1.bf16.msra.mxu0 0
        %690 = vmatprep.subr.bf16.mxu0 0
        %691 = vmatpush1.bf16.msra.mxu0 0
        %692 = vmatprep.subr.bf16.mxu0 0
        %693 = vmatpush1.bf16.msra.mxu0 0
        %694 = vmatprep.subr.bf16.mxu0 0
        %695 = vmatpush1.bf16.msra.mxu0 0
        %696 = vmatprep.subr.bf16.mxu0 0
        %697 = vmatpush1.bf16.msra.mxu0 0
        %698 = vmatprep.subr.bf16.mxu0 0
        %699 = vmatpush1.bf16.msra.mxu0 0
        %700 = vmatprep.mubr.bf16.mxu0 0
        %701 = vmatmul.mubr.bf16.gmra.mrb[0].mxu0 %v614
        %v702 = vpop.f32.mrb[0].mxu0
        %v703 = vadd.f32 0.0, %v702
        %v704 = vpop.f32.mrb[0].mxu0
        %v705 = vpop.f32.mrb[0].mxu0
        %v706 = vadd.f32 0.0, %v705
        %v707 = vpop.f32.mrb[0].mxu0
        %708 = vmatprep.mubr.bf16.mxu0 0
        %709 = vmatmul.mubr.bf16.gmra.mrb[0].mxu0 %v617
        %v710 = vpop.f32.mrb[0].mxu0
        %v711 = vadd.f32 0.0, %v710
        %v712 = vpop.f32.mrb[0].mxu0
        %v713 = vpop.f32.mrb[0].mxu0
        %v714 = vpop.f32.mrb[0].mxu0
        %715 = vdwg.mxu0
        %v732 = vunpack.c.l.b16 %v569
        %v733 = vunpack.c.l.b16 %v570
        %v734 = vunpack.c.l.b16 %v571
        %v735 = vunpack.c.l.b16 %v572
        %v736 = vunpack.c.l.b16 %v573
        %v737 = vunpack.c.l.b16 %v574
        %v738 = vunpack.c.l.b16 %v575
        %v739 = vunpack.c.l.b16 %v576
        %v740 = vunpack.c.l.b16 %v577
        %v741 = vunpack.c.l.b16 %v578
        %v742 = vunpack.c.l.b16 %v579
        %v743 = vunpack.c.l.b16 %v580
        %v744 = vunpack.c.l.b16 %v581
        %v745 = vunpack.c.l.b16 %v582
        %v746 = vunpack.c.l.b16 %v583
        %v747 = vunpack.c.l.b16 %v584
        %v748 = vpack.c.b16 %v733, %v732
        %v749 = vpack.c.b16 %v735, %v734
        %v750 = vpack.c.b16 %v737, %v736
        %v751 = vpack.c.b16 %v739, %v738
        %v752 = vpack.c.b16 %v741, %v740
        %v753 = vpack.c.b16 %v743, %v742
        %v754 = vpack.c.b16 %v745, %v744
        %v755 = vpack.c.b16 %v747, %v746
        %764 = vmatprep.subr.bf16.mxu0 0
        %765 = vmatpush1.bf16.msra.mxu0 %v748
        %766 = vmatprep.subr.bf16.mxu0 0
        %767 = vmatpush1.bf16.msra.mxu0 %v749
        %768 = vmatprep.subr.bf16.mxu0 0
        %769 = vmatpush1.bf16.msra.mxu0 %v750
        %770 = vmatprep.subr.bf16.mxu0 0
        %771 = vmatpush1.bf16.msra.mxu0 %v751
        %772 = vmatprep.subr.bf16.mxu0 0
        %773 = vmatpush1.bf16.msra.mxu0 %v752
        %774 = vmatprep.subr.bf16.mxu0 0
        %775 = vmatpush1.bf16.msra.mxu0 %v753
        %776 = vmatprep.subr.bf16.mxu0 0
        %777 = vmatpush1.bf16.msra.mxu0 %v754
        %778 = vmatprep.subr.bf16.mxu0 0
        %779 = vmatpush1.bf16.msra.mxu0 %v755
        %780 = vmatprep.subr.bf16.mxu0 0
        %781 = vmatpush1.bf16.msra.mxu0 0
        %782 = vmatprep.subr.bf16.mxu0 0
        %783 = vmatpush1.bf16.msra.mxu0 0
        %784 = vmatprep.subr.bf16.mxu0 0
        %785 = vmatpush1.bf16.msra.mxu0 0
        %786 = vmatprep.subr.bf16.mxu0 0
        %787 = vmatpush1.bf16.msra.mxu0 0
        %788 = vmatprep.subr.bf16.mxu0 0
        %789 = vmatpush1.bf16.msra.mxu0 0
        %790 = vmatprep.subr.bf16.mxu0 0
        %791 = vmatpush1.bf16.msra.mxu0 0
        %792 = vmatprep.subr.bf16.mxu0 0
        %793 = vmatpush1.bf16.msra.mxu0 0
        %794 = vmatprep.subr.bf16.mxu0 0
        %795 = vmatpush1.bf16.msra.mxu0 0
        %796 = vmatprep.mubr.bf16.mxu0 0
        %797 = vmatmul.mubr.bf16.gmra.mrb[0].mxu0 %v567
        %v798 = vpop.f32.mrb[0].mxu0
        %v799 = vadd.f32 %v703, %v798
        %v800 = vpop.f32.mrb[0].mxu0
        %v801 = vpop.f32.mrb[0].mxu0
        %v802 = vadd.f32 %v706, %v801
        %v803 = vpop.f32.mrb[0].mxu0
        %804 = vmatprep.mubr.bf16.mxu0 0
        %805 = vmatmul.mubr.bf16.gmra.mrb[0].mxu0 %v568
        %v806 = vpop.f32.mrb[0].mxu0
        %v807 = vadd.f32 %v711, %v806
        %v808 = vpop.f32.mrb[0].mxu0
        %v809 = vpop.f32.mrb[0].mxu0
        %v810 = vpop.f32.mrb[0].mxu0
        %811 = vdwg.mxu0
        %s812 = scalar_lea.vmem [#allocation3], 128
        %v813 = vld [vmem:[%s812] sm:$0xf]
        %v814 = vld [vmem:[%s812 + $0x4] sm:$0xf]
        %v815 = vld [vmem:[%s812 + $0x8] sm:$0xf]
        %v816 = vld [vmem:[%s812 + $0xc] sm:$0xf]
        %v817 = vld [vmem:[%s812 + $0x10] sm:$0xf]
        %v818 = vld [vmem:[%s812 + $0x14] sm:$0xf]
        %v819 = vld [vmem:[%s812 + $0x18] sm:$0xf]
        %v820 = vld [vmem:[%s812 + $0x1c] sm:$0xf]
        %v821 = vld [vmem:[%s812 + $0x20] sm:$0xf]
        %v822 = vld [vmem:[%s812 + $0x24] sm:$0xf]
        %v823 = vld [vmem:[%s812 + $0x28] sm:$0xf]
        %v824 = vld [vmem:[%s812 + $0x2c] sm:$0xf]
        %v825 = vld [vmem:[%s812 + $0x30] sm:$0xf]
        %v826 = vld [vmem:[%s812 + $0x34] sm:$0xf]
        %v827 = vld [vmem:[%s812 + $0x38] sm:$0xf]
        %v828 = vld [vmem:[%s812 + $0x3c] sm:$0xf]
        %vm831 = vcmask 1046528
        %v832 = vrot.slane %v567, 1
        %v833 = vrot.slane %v568, 1
        %v834 = vsel %vm831, %v832, %v833
        %v853 = vunpack.c.l.b16 %v813
        %v854 = vunpack.c.l.b16 %v814
        %v855 = vunpack.c.l.b16 %v815
        %v856 = vunpack.c.l.b16 %v816
        %v857 = vunpack.c.l.b16 %v817
        %v858 = vunpack.c.l.b16 %v818
        %v859 = vunpack.c.l.b16 %v819
        %v860 = vunpack.c.l.b16 %v820
        %v861 = vunpack.c.l.b16 %v821
        %v862 = vunpack.c.l.b16 %v822
        %v863 = vunpack.c.l.b16 %v823
        %v864 = vunpack.c.l.b16 %v824
        %v865 = vunpack.c.l.b16 %v825
        %v866 = vunpack.c.l.b16 %v826
        %v867 = vunpack.c.l.b16 %v827
        %v868 = vunpack.c.l.b16 %v828
        %v869 = vpack.c.b16 %v854, %v853
        %v870 = vpack.c.b16 %v856, %v855
        %v871 = vpack.c.b16 %v858, %v857
        %v872 = vpack.c.b16 %v860, %v859
        %v873 = vpack.c.b16 %v862, %v861
        %v874 = vpack.c.b16 %v864, %v863
        %v875 = vpack.c.b16 %v866, %v865
        %v876 = vpack.c.b16 %v868, %v867
        %885 = vmatprep.subr.bf16.mxu0 0
        %886 = vmatpush1.bf16.msra.mxu0 %v869
        %887 = vmatprep.subr.bf16.mxu0 0
        %888 = vmatpush1.bf16.msra.mxu0 %v870
        %889 = vmatprep.subr.bf16.mxu0 0
        %890 = vmatpush1.bf16.msra.mxu0 %v871
        %891 = vmatprep.subr.bf16.mxu0 0
        %892 = vmatpush1.bf16.msra.mxu0 %v872
        %893 = vmatprep.subr.bf16.mxu0 0
        %894 = vmatpush1.bf16.msra.mxu0 %v873
        %895 = vmatprep.subr.bf16.mxu0 0
        %896 = vmatpush1.bf16.msra.mxu0 %v874
        %897 = vmatprep.subr.bf16.mxu0 0
        %898 = vmatpush1.bf16.msra.mxu0 %v875
        %899 = vmatprep.subr.bf16.mxu0 0
        %900 = vmatpush1.bf16.msra.mxu0 %v876
        %901 = vmatprep.subr.bf16.mxu0 0
        %902 = vmatpush1.bf16.msra.mxu0 0
        %903 = vmatprep.subr.bf16.mxu0 0
        %904 = vmatpush1.bf16.msra.mxu0 0
        %905 = vmatprep.subr.bf16.mxu0 0
        %906 = vmatpush1.bf16.msra.mxu0 0
        %907 = vmatprep.subr.bf16.mxu0 0
        %908 = vmatpush1.bf16.msra.mxu0 0
        %909 = vmatprep.subr.bf16.mxu0 0
        %910 = vmatpush1.bf16.msra.mxu0 0
        %911 = vmatprep.subr.bf16.mxu0 0
        %912 = vmatpush1.bf16.msra.mxu0 0
        %913 = vmatprep.subr.bf16.mxu0 0
        %914 = vmatpush1.bf16.msra.mxu0 0
        %915 = vmatprep.subr.bf16.mxu0 0
        %916 = vmatpush1.bf16.msra.mxu0 0
        %917 = vmatprep.mubr.bf16.mxu0 0
        %918 = vmatmul.mubr.bf16.gmra.mrb[0].mxu0 %v834
        %v919 = vpop.f32.mrb[0].mxu0
        %v920 = vadd.f32 0.0, %v919
        %v921 = vpop.f32.mrb[0].mxu0
        %v922 = vpop.f32.mrb[0].mxu0
        %v923 = vadd.f32 0.0, %v922
        %v924 = vpop.f32.mrb[0].mxu0
        %925 = vmatprep.mubr.bf16.mxu0 0
        %926 = vmatmul.mubr.bf16.gmra.mrb[0].mxu0 %v833
        %v927 = vpop.f32.mrb[0].mxu0
        %v928 = vadd.f32 0.0, %v927
        %v929 = vpop.f32.mrb[0].mxu0
        %v930 = vpop.f32.mrb[0].mxu0
        %v931 = vpop.f32.mrb[0].mxu0
        %932 = vdwg.mxu0
        %v933 = vadd.f32 %v799, %v920
        %v934 = vadd.f32 %v802, %v923
        %v935 = vadd.f32 %v807, %v928
        %v936 = vld [vmem:[%s4] sm:$0x1]
        %v938 = vlaneseq
        %v939 = vshrl.u32 %v938, 7
        %v940 = vsub.s32 0, %v939
        %v941 = vrot.slane %v936, %v940
        %v943 = vadd.f32 %v933, %v941
        %v944 = vadd.f32 %v934, %v941
        %v945 = vadd.f32 %v935, %v941
        %vm946 = vcmp.ge.f32.partialorder %v943, 0.0
        %vm947 = vcmp.ge.f32.partialorder %v944, 0.0
        %vm948 = vcmp.ge.f32.partialorder %v945, 0.0
        %v949 = vmul.f32 %v943, 0.01
        %v950 = vmul.f32 %v944, 0.01
        %v951 = vmul.f32 %v945, 0.01
        %v952 = vsel %vm946, %v943, %v949
        %v953 = vsel %vm947, %v944, %v950
        %v954 = vsel %vm948, %v945, %v951
        %vm955 = vcmask 1042432
        %v956 = vrot.slane %v542, 5
        %v957 = vrot.slane %v543, 5
        %v958 = vsel %vm955, %v956, %v957
        %v959 = vrot.slane %v544, 5
        %v960 = vsel %vm955, %v957, %v959
        %v961 = vrot.slane %v545, 5
        %v962 = vsel %vm955, %v959, %v961
        %v966 = vmul.f32 %v952, %v958
        %v967 = vmul.f32 %v953, %v960
        %v968 = vmul.f32 %v954, %v962
        %v969 = vpack.c.bf16 %v967, %v966
        %v970 = vpack.c.bf16 %v968, %v968
        %v971 = vld [vmem:[%s5] sm:$0xf]
        %v972 = vld [vmem:[%s5 + $0x4] sm:$0xf]
        %v973 = vld [vmem:[%s5 + $0x8] sm:$0xf]
        %v974 = vld [vmem:[%s5 + $0xc] sm:$0xf]
        %v975 = vld [vmem:[%s5 + $0x10] sm:$0xf]
        %v976 = vld [vmem:[%s5 + $0x14] sm:$0xf]
        %v977 = vld [vmem:[%s5 + $0x18] sm:$0xf]
        %v978 = vld [vmem:[%s5 + $0x1c] sm:$0xf]
        %v979 = vld [vmem:[%s5 + $0x20] sm:$0xf]
        %v980 = vld [vmem:[%s5 + $0x24] sm:$0xf]
        %v981 = vld [vmem:[%s5 + $0x28] sm:$0xf]
        %v982 = vld [vmem:[%s5 + $0x2c] sm:$0xf]
        %v983 = vld [vmem:[%s5 + $0x30] sm:$0xf]
        %v984 = vld [vmem:[%s5 + $0x34] sm:$0xf]
        %v985 = vld [vmem:[%s5 + $0x38] sm:$0xf]
        %v986 = vld [vmem:[%s5 + $0x3c] sm:$0xf]
        %s987 = scalar_lea.vmem %s5, 64
        %v988 = vld [vmem:[%s987] sm:$0xf]
        %v989 = vld [vmem:[%s987 + $0x4] sm:$0xf]
        %v990 = vld [vmem:[%s987 + $0x8] sm:$0xf]
        %v991 = vld [vmem:[%s987 + $0xc] sm:$0xf]
        %v992 = vld [vmem:[%s987 + $0x10] sm:$0xf]
        %v993 = vld [vmem:[%s987 + $0x14] sm:$0xf]
        %v994 = vld [vmem:[%s987 + $0x18] sm:$0xf]
        %v995 = vld [vmem:[%s987 + $0x1c] sm:$0xf]
        %v996 = vld [vmem:[%s987 + $0x20] sm:$0xf]
        %v997 = vld [vmem:[%s987 + $0x24] sm:$0xf]
        %v998 = vld [vmem:[%s987 + $0x28] sm:$0xf]
        %v999 = vld [vmem:[%s987 + $0x2c] sm:$0xf]
        %v1000 = vld [vmem:[%s987 + $0x30] sm:$0xf]
        %v1001 = vld [vmem:[%s987 + $0x34] sm:$0xf]
        %v1002 = vld [vmem:[%s987 + $0x38] sm:$0xf]
        %v1003 = vld [vmem:[%s987 + $0x3c] sm:$0xf]
        %v1005 = vshrl.u32 %v969, 16
        %v1007 = vshll.u32 %v969, 16
        %v1009 = vrot.slane %v1007, 1
        %v1010 = vor.u32 %v1005, %v1009
        %v1012 = vshll.u32 %v970, 16
        %v1014 = vrot.slane %v1012, 1
        %v1015 = vsel %vm602, %v1010, %v1014
        %v1016 = vshrl.u32 %v970, 16
        %v1018 = vor.u32 %v1016, %v1014
        %v1037 = vunpack.c.l.b16 %v988
        %v1038 = vunpack.c.l.b16 %v989
        %v1039 = vunpack.c.l.b16 %v990
        %v1040 = vunpack.c.l.b16 %v991
        %v1041 = vunpack.c.l.b16 %v992
        %v1042 = vunpack.c.l.b16 %v993
        %v1043 = vunpack.c.l.b16 %v994
        %v1044 = vunpack.c.l.b16 %v995
        %v1045 = vunpack.c.l.b16 %v996
        %v1046 = vunpack.c.l.b16 %v997
        %v1047 = vunpack.c.l.b16 %v998
        %v1048 = vunpack.c.l.b16 %v999
        %v1049 = vunpack.c.l.b16 %v1000
        %v1050 = vunpack.c.l.b16 %v1001
        %v1051 = vunpack.c.l.b16 %v1002
        %v1052 = vunpack.c.l.b16 %v1003
        %v1053 = vpack.c.b16 %v1038, %v1037
        %v1054 = vpack.c.b16 %v1040, %v1039
        %v1055 = vpack.c.b16 %v1042, %v1041
        %v1056 = vpack.c.b16 %v1044, %v1043
        %v1057 = vpack.c.b16 %v1046, %v1045
        %v1058 = vpack.c.b16 %v1048, %v1047
        %v1059 = vpack.c.b16 %v1050, %v1049
        %v1060 = vpack.c.b16 %v1052, %v1051
        %1069 = vmatprep.subr.bf16.mxu0 0
        %1070 = vmatpush1.bf16.msra.mxu0 %v1053
        %1071 = vmatprep.subr.bf16.mxu0 0
        %1072 = vmatpush1.bf16.msra.mxu0 %v1054
        %1073 = vmatprep.subr.bf16.mxu0 0
        %1074 = vmatpush1.bf16.msra.mxu0 %v1055
        %1075 = vmatprep.subr.bf16.mxu0 0
        %1076 = vmatpush1.bf16.msra.mxu0 %v1056
        %1077 = vmatprep.subr.bf16.mxu0 0
        %1078 = vmatpush1.bf16.msra.mxu0 %v1057
        %1079 = vmatprep.subr.bf16.mxu0 0
        %1080 = vmatpush1.bf16.msra.mxu0 %v1058
        %1081 = vmatprep.subr.bf16.mxu0 0
        %1082 = vmatpush1.bf16.msra.mxu0 %v1059
        %1083 = vmatprep.subr.bf16.mxu0 0
        %1084 = vmatpush1.bf16.msra.mxu0 %v1060
        %1085 = vmatprep.subr.bf16.mxu0 0
        %1086 = vmatpush1.bf16.msra.mxu0 0
        %1087 = vmatprep.subr.bf16.mxu0 0
        %1088 = vmatpush1.bf16.msra.mxu0 0
        %1089 = vmatprep.subr.bf16.mxu0 0
        %1090 = vmatpush1.bf16.msra.mxu0 0
        %1091 = vmatprep.subr.bf16.mxu0 0
        %1092 = vmatpush1.bf16.msra.mxu0 0
        %1093 = vmatprep.subr.bf16.mxu0 0
        %1094 = vmatpush1.bf16.msra.mxu0 0
        %1095 = vmatprep.subr.bf16.mxu0 0
        %1096 = vmatpush1.bf16.msra.mxu0 0
        %1097 = vmatprep.subr.bf16.mxu0 0
        %1098 = vmatpush1.bf16.msra.mxu0 0
        %1099 = vmatprep.subr.bf16.mxu0 0
        %1100 = vmatpush1.bf16.msra.mxu0 0
        %1101 = vmatprep.mubr.bf16.mxu0 0
        %1102 = vmatmul.mubr.bf16.gmra.mrb[0].mxu0 %v1015
        %v1103 = vpop.f32.mrb[0].mxu0
        %v1104 = vadd.f32 0.0, %v1103
        %v1105 = vpop.f32.mrb[0].mxu0
        %v1106 = vpop.f32.mrb[0].mxu0
        %v1107 = vadd.f32 0.0, %v1106
        %v1108 = vpop.f32.mrb[0].mxu0
        %1109 = vmatprep.mubr.bf16.mxu0 0
        %1110 = vmatmul.mubr.bf16.gmra.mrb[0].mxu0 %v1018
        %v1111 = vpop.f32.mrb[0].mxu0
        %v1112 = vadd.f32 0.0, %v1111
        %v1113 = vpop.f32.mrb[0].mxu0
        %v1114 = vpop.f32.mrb[0].mxu0
        %v1115 = vpop.f32.mrb[0].mxu0
        %1116 = vdwg.mxu0
        %v1133 = vunpack.c.l.b16 %v971
        %v1134 = vunpack.c.l.b16 %v972
        %v1135 = vunpack.c.l.b16 %v973
        %v1136 = vunpack.c.l.b16 %v974
        %v1137 = vunpack.c.l.b16 %v975
        %v1138 = vunpack.c.l.b16 %v976
        %v1139 = vunpack.c.l.b16 %v977
        %v1140 = vunpack.c.l.b16 %v978
        %v1141 = vunpack.c.l.b16 %v979
        %v1142 = vunpack.c.l.b16 %v980
        %v1143 = vunpack.c.l.b16 %v981
        %v1144 = vunpack.c.l.b16 %v982
        %v1145 = vunpack.c.l.b16 %v983
        %v1146 = vunpack.c.l.b16 %v984
        %v1147 = vunpack.c.l.b16 %v985
        %v1148 = vunpack.c.l.b16 %v986
        %v1149 = vpack.c.b16 %v1134, %v1133
        %v1150 = vpack.c.b16 %v1136, %v1135
        %v1151 = vpack.c.b16 %v1138, %v1137
        %v1152 = vpack.c.b16 %v1140, %v1139
        %v1153 = vpack.c.b16 %v1142, %v1141
        %v1154 = vpack.c.b16 %v1144, %v1143
        %v1155 = vpack.c.b16 %v1146, %v1145
        %v1156 = vpack.c.b16 %v1148, %v1147
        %1165 = vmatprep.subr.bf16.mxu0 0
        %1166 = vmatpush1.bf16.msra.mxu0 %v1149
        %1167 = vmatprep.subr.bf16.mxu0 0
        %1168 = vmatpush1.bf16.msra.mxu0 %v1150
        %1169 = vmatprep.subr.bf16.mxu0 0
        %1170 = vmatpush1.bf16.msra.mxu0 %v1151
        %1171 = vmatprep.subr.bf16.mxu0 0
        %1172 = vmatpush1.bf16.msra.mxu0 %v1152
        %1173 = vmatprep.subr.bf16.mxu0 0
        %1174 = vmatpush1.bf16.msra.mxu0 %v1153
        %1175 = vmatprep.subr.bf16.mxu0 0
        %1176 = vmatpush1.bf16.msra.mxu0 %v1154
        %1177 = vmatprep.subr.bf16.mxu0 0
        %1178 = vmatpush1.bf16.msra.mxu0 %v1155
        %1179 = vmatprep.subr.bf16.mxu0 0
        %1180 = vmatpush1.bf16.msra.mxu0 %v1156
        %1181 = vmatprep.subr.bf16.mxu0 0
        %1182 = vmatpush1.bf16.msra.mxu0 0
        %1183 = vmatprep.subr.bf16.mxu0 0
        %1184 = vmatpush1.bf16.msra.mxu0 0
        %1185 = vmatprep.subr.bf16.mxu0 0
        %1186 = vmatpush1.bf16.msra.mxu0 0
        %1187 = vmatprep.subr.bf16.mxu0 0
        %1188 = vmatpush1.bf16.msra.mxu0 0
        %1189 = vmatprep.subr.bf16.mxu0 0
        %1190 = vmatpush1.bf16.msra.mxu0 0
        %1191 = vmatprep.subr.bf16.mxu0 0
        %1192 = vmatpush1.bf16.msra.mxu0 0
        %1193 = vmatprep.subr.bf16.mxu0 0
        %1194 = vmatpush1.bf16.msra.mxu0 0
        %1195 = vmatprep.subr.bf16.mxu0 0
        %1196 = vmatpush1.bf16.msra.mxu0 0
        %1197 = vmatprep.mubr.bf16.mxu0 0
        %1198 = vmatmul.mubr.bf16.gmra.mrb[0].mxu0 %v969
        %v1199 = vpop.f32.mrb[0].mxu0
        %v1200 = vadd.f32 %v1104, %v1199
        %v1201 = vpop.f32.mrb[0].mxu0
        %v1202 = vpop.f32.mrb[0].mxu0
        %v1203 = vadd.f32 %v1107, %v1202
        %v1204 = vpop.f32.mrb[0].mxu0
        %1205 = vmatprep.mubr.bf16.mxu0 0
        %1206 = vmatmul.mubr.bf16.gmra.mrb[0].mxu0 %v970
        %v1207 = vpop.f32.mrb[0].mxu0
        %v1208 = vadd.f32 %v1112, %v1207
        %v1209 = vpop.f32.mrb[0].mxu0
        %v1210 = vpop.f32.mrb[0].mxu0
        %v1211 = vpop.f32.mrb[0].mxu0
        %1212 = vdwg.mxu0
        %s1213 = scalar_lea.vmem %s5, 128
        %v1214 = vld [vmem:[%s1213] sm:$0xf]
        %v1215 = vld [vmem:[%s1213 + $0x4] sm:$0xf]
        %v1216 = vld [vmem:[%s1213 + $0x8] sm:$0xf]
        %v1217 = vld [vmem:[%s1213 + $0xc] sm:$0xf]
        %v1218 = vld [vmem:[%s1213 + $0x10] sm:$0xf]
        %v1219 = vld [vmem:[%s1213 + $0x14] sm:$0xf]
        %v1220 = vld [vmem:[%s1213 + $0x18] sm:$0xf]
        %v1221 = vld [vmem:[%s1213 + $0x1c] sm:$0xf]
        %v1222 = vld [vmem:[%s1213 + $0x20] sm:$0xf]
        %v1223 = vld [vmem:[%s1213 + $0x24] sm:$0xf]
        %v1224 = vld [vmem:[%s1213 + $0x28] sm:$0xf]
        %v1225 = vld [vmem:[%s1213 + $0x2c] sm:$0xf]
        %v1226 = vld [vmem:[%s1213 + $0x30] sm:$0xf]
        %v1227 = vld [vmem:[%s1213 + $0x34] sm:$0xf]
        %v1228 = vld [vmem:[%s1213 + $0x38] sm:$0xf]
        %v1229 = vld [vmem:[%s1213 + $0x3c] sm:$0xf]
        %v1232 = vrot.slane %v969, 1
        %v1233 = vrot.slane %v970, 1
        %v1234 = vsel %vm831, %v1232, %v1233
        %v1253 = vunpack.c.l.b16 %v1214
        %v1254 = vunpack.c.l.b16 %v1215
        %v1255 = vunpack.c.l.b16 %v1216
        %v1256 = vunpack.c.l.b16 %v1217
        %v1257 = vunpack.c.l.b16 %v1218
        %v1258 = vunpack.c.l.b16 %v1219
        %v1259 = vunpack.c.l.b16 %v1220
        %v1260 = vunpack.c.l.b16 %v1221
        %v1261 = vunpack.c.l.b16 %v1222
        %v1262 = vunpack.c.l.b16 %v1223
        %v1263 = vunpack.c.l.b16 %v1224
        %v1264 = vunpack.c.l.b16 %v1225
        %v1265 = vunpack.c.l.b16 %v1226
        %v1266 = vunpack.c.l.b16 %v1227
        %v1267 = vunpack.c.l.b16 %v1228
        %v1268 = vunpack.c.l.b16 %v1229
        %v1269 = vpack.c.b16 %v1254, %v1253
        %v1270 = vpack.c.b16 %v1256, %v1255
        %v1271 = vpack.c.b16 %v1258, %v1257
        %v1272 = vpack.c.b16 %v1260, %v1259
        %v1273 = vpack.c.b16 %v1262, %v1261
        %v1274 = vpack.c.b16 %v1264, %v1263
        %v1275 = vpack.c.b16 %v1266, %v1265
        %v1276 = vpack.c.b16 %v1268, %v1267
        %1285 = vmatprep.subr.bf16.mxu0 0
        %1286 = vmatpush1.bf16.msra.mxu0 %v1269
        %1287 = vmatprep.subr.bf16.mxu0 0
        %1288 = vmatpush1.bf16.msra.mxu0 %v1270
        %1289 = vmatprep.subr.bf16.mxu0 0
        %1290 = vmatpush1.bf16.msra.mxu0 %v1271
        %1291 = vmatprep.subr.bf16.mxu0 0
        %1292 = vmatpush1.bf16.msra.mxu0 %v1272
        %1293 = vmatprep.subr.bf16.mxu0 0
        %1294 = vmatpush1.bf16.msra.mxu0 %v1273
        %1295 = vmatprep.subr.bf16.mxu0 0
        %1296 = vmatpush1.bf16.msra.mxu0 %v1274
        %1297 = vmatprep.subr.bf16.mxu0 0
        %1298 = vmatpush1.bf16.msra.mxu0 %v1275
        %1299 = vmatprep.subr.bf16.mxu0 0
        %1300 = vmatpush1.bf16.msra.mxu0 %v1276
        %1301 = vmatprep.subr.bf16.mxu0 0
        %1302 = vmatpush1.bf16.msra.mxu0 0
        %1303 = vmatprep.subr.bf16.mxu0 0
        %1304 = vmatpush1.bf16.msra.mxu0 0
        %1305 = vmatprep.subr.bf16.mxu0 0
        %1306 = vmatpush1.bf16.msra.mxu0 0
        %1307 = vmatprep.subr.bf16.mxu0 0
        %1308 = vmatpush1.bf16.msra.mxu0 0
        %1309 = vmatprep.subr.bf16.mxu0 0
        %1310 = vmatpush1.bf16.msra.mxu0 0
        %1311 = vmatprep.subr.bf16.mxu0 0
        %1312 = vmatpush1.bf16.msra.mxu0 0
        %1313 = vmatprep.subr.bf16.mxu0 0
        %1314 = vmatpush1.bf16.msra.mxu0 0
        %1315 = vmatprep.subr.bf16.mxu0 0
        %1316 = vmatpush1.bf16.msra.mxu0 0
        %1317 = vmatprep.mubr.bf16.mxu0 0
        %1318 = vmatmul.mubr.bf16.gmra.mrb[0].mxu0 %v1234
        %v1319 = vpop.f32.mrb[0].mxu0
        %v1320 = vadd.f32 0.0, %v1319
        %v1321 = vpop.f32.mrb[0].mxu0
        %v1322 = vpop.f32.mrb[0].mxu0
        %v1323 = vadd.f32 0.0, %v1322
        %v1324 = vpop.f32.mrb[0].mxu0
        %1325 = vmatprep.mubr.bf16.mxu0 0
        %1326 = vmatmul.mubr.bf16.gmra.mrb[0].mxu0 %v1233
        %v1327 = vpop.f32.mrb[0].mxu0
        %v1328 = vadd.f32 0.0, %v1327
        %v1329 = vpop.f32.mrb[0].mxu0
        %v1330 = vpop.f32.mrb[0].mxu0
        %v1331 = vpop.f32.mrb[0].mxu0
        %1332 = vdwg.mxu0
        %v1333 = vadd.f32 %v1200, %v1320
        %v1334 = vadd.f32 %v1203, %v1323
        %v1335 = vadd.f32 %v1208, %v1328
        %v1336 = vld [vmem:[%s6] sm:$0x1]
        %v1338 = vlaneseq
        %v1339 = vshrl.u32 %v1338, 7
        %v1340 = vsub.s32 0, %v1339
        %v1341 = vrot.slane %v1336, %v1340
        %v1343 = vadd.f32 %v1333, %v1341
        %v1344 = vadd.f32 %v1334, %v1341
        %v1345 = vadd.f32 %v1335, %v1341
        %vm1346 = vcmp.ge.f32.partialorder %v1343, 0.0
        %vm1347 = vcmp.ge.f32.partialorder %v1344, 0.0
        %vm1348 = vcmp.ge.f32.partialorder %v1345, 0.0
        %v1349 = vmul.f32 %v1343, 0.01
        %v1350 = vmul.f32 %v1344, 0.01
        %v1351 = vmul.f32 %v1345, 0.01
        %v1352 = vsel %vm1346, %v1343, %v1349
        %v1353 = vsel %vm1347, %v1344, %v1350
        %v1354 = vsel %vm1348, %v1345, %v1351
        %v1355 = vpack.c.bf16 %v1353, %v1352
        %v1356 = vpack.c.bf16 %v1354, %v1354
        %v1357 = vld [vmem:[%s7] sm:$0xf]
        %v1358 = vld [vmem:[%s7 + $0x4] sm:$0xf]
        %v1359 = vld [vmem:[%s7 + $0x8] sm:$0xf]
        %v1360 = vld [vmem:[%s7 + $0xc] sm:$0xf]
        %v1361 = vld [vmem:[%s7 + $0x10] sm:$0xf]
        %v1362 = vld [vmem:[%s7 + $0x14] sm:$0xf]
        %v1363 = vld [vmem:[%s7 + $0x18] sm:$0xf]
        %v1364 = vld [vmem:[%s7 + $0x1c] sm:$0xf]
        %v1365 = vld [vmem:[%s7 + $0x20] sm:$0xf]
        %v1366 = vld [vmem:[%s7 + $0x24] sm:$0xf]
        %v1367 = vld [vmem:[%s7 + $0x28] sm:$0xf]
        %v1368 = vld [vmem:[%s7 + $0x2c] sm:$0xf]
        %v1369 = vld [vmem:[%s7 + $0x30] sm:$0xf]
        %v1370 = vld [vmem:[%s7 + $0x34] sm:$0xf]
        %v1371 = vld [vmem:[%s7 + $0x38] sm:$0xf]
        %v1372 = vld [vmem:[%s7 + $0x3c] sm:$0xf]
        %v1373 = vld [vmem:[%s8] sm:$0x1]
        %v1375 = vlaneseq
        %v1376 = vshrl.u32 %v1375, 7
        %v1377 = vsub.s32 0, %v1376
        %v1378 = vrot.slane %v1373, %v1377
        %v1396 = vunpack.c.l.b16 %v1357
        %v1397 = vunpack.c.l.b16 %v1358
        %v1398 = vunpack.c.l.b16 %v1359
        %v1399 = vunpack.c.l.b16 %v1360
        %v1400 = vunpack.c.l.b16 %v1361
        %v1401 = vunpack.c.l.b16 %v1362
        %v1402 = vunpack.c.l.b16 %v1363
        %v1403 = vunpack.c.l.b16 %v1364
        %v1404 = vunpack.c.l.b16 %v1365
        %v1405 = vunpack.c.l.b16 %v1366
        %v1406 = vunpack.c.l.b16 %v1367
        %v1407 = vunpack.c.l.b16 %v1368
        %v1408 = vunpack.c.l.b16 %v1369
        %v1409 = vunpack.c.l.b16 %v1370
        %v1410 = vunpack.c.l.b16 %v1371
        %v1411 = vunpack.c.l.b16 %v1372
        %v1412 = vpack.c.b16 %v1397, %v1396
        %v1413 = vpack.c.b16 %v1399, %v1398
        %v1414 = vpack.c.b16 %v1401, %v1400
        %v1415 = vpack.c.b16 %v1403, %v1402
        %v1416 = vpack.c.b16 %v1405, %v1404
        %v1417 = vpack.c.b16 %v1407, %v1406
        %v1418 = vpack.c.b16 %v1409, %v1408
        %v1419 = vpack.c.b16 %v1411, %v1410
        %1428 = vmatprep.subr.bf16.mxu0 0
        %1429 = vmatpush1.bf16.msra.mxu0 %v1412
        %1430 = vmatprep.subr.bf16.mxu0 0
        %1431 = vmatpush1.bf16.msra.mxu0 %v1413
        %1432 = vmatprep.subr.bf16.mxu0 0
        %1433 = vmatpush1.bf16.msra.mxu0 %v1414
        %1434 = vmatprep.subr.bf16.mxu0 0
        %1435 = vmatpush1.bf16.msra.mxu0 %v1415
        %1436 = vmatprep.subr.bf16.mxu0 0
        %1437 = vmatpush1.bf16.msra.mxu0 %v1416
        %1438 = vmatprep.subr.bf16.mxu0 0
        %1439 = vmatpush1.bf16.msra.mxu0 %v1417
        %1440 = vmatprep.subr.bf16.mxu0 0
        %1441 = vmatpush1.bf16.msra.mxu0 %v1418
        %1442 = vmatprep.subr.bf16.mxu0 0
        %1443 = vmatpush1.bf16.msra.mxu0 %v1419
        %1444 = vmatprep.subr.bf16.mxu0 0
        %1445 = vmatpush1.bf16.msra.mxu0 0
        %1446 = vmatprep.subr.bf16.mxu0 0
        %1447 = vmatpush1.bf16.msra.mxu0 0
        %1448 = vmatprep.subr.bf16.mxu0 0
        %1449 = vmatpush1.bf16.msra.mxu0 0
        %1450 = vmatprep.subr.bf16.mxu0 0
        %1451 = vmatpush1.bf16.msra.mxu0 0
        %1452 = vmatprep.subr.bf16.mxu0 0
        %1453 = vmatpush1.bf16.msra.mxu0 0
        %1454 = vmatprep.subr.bf16.mxu0 0
        %1455 = vmatpush1.bf16.msra.mxu0 0
        %1456 = vmatprep.subr.bf16.mxu0 0
        %1457 = vmatpush1.bf16.msra.mxu0 0
        %1458 = vmatprep.subr.bf16.mxu0 0
        %1459 = vmatpush1.bf16.msra.mxu0 0
        %1460 = vmatprep.mubr.bf16.mxu0 0
        %1461 = vmatmul.mubr.bf16.gmra.mrb[0].mxu0 %v1355
        %v1462 = vpop.f32.mrb[0].mxu0
        %v1463 = vadd.f32 %v1378, %v1462
        %v1464 = vpop.f32.mrb[0].mxu0
        %v1465 = vpop.f32.mrb[0].mxu0
        %v1466 = vadd.f32 %v1378, %v1465
        %v1467 = vpop.f32.mrb[0].mxu0
        %1468 = vmatprep.mubr.bf16.mxu0 0
        %1469 = vmatmul.mubr.bf16.gmra.mrb[0].mxu0 %v1356
        %v1470 = vpop.f32.mrb[0].mxu0
        %v1471 = vadd.f32 %v1378, %v1470
        %v1472 = vpop.f32.mrb[0].mxu0
        %v1473 = vpop.f32.mrb[0].mxu0
        %v1474 = vpop.f32.mrb[0].mxu0
        %1475 = vdwg.mxu0
        %vm1479 = vcmask 1040384
        %v1480 = vrot.slane %v1463, 7
        %v1481 = vrot.slane %v1466, 7
        %v1482 = vsel %vm1479, %v1480, %v1481
        %v1483 = vrot.slane %v1471, 7
        %v1484 = vsel %vm1479, %v1481, %v1483
        %v1488 = vadd.f32 %v943, %v1480
        %v1489 = vadd.f32 %v944, %v1482
        %v1490 = vadd.f32 %v945, %v1484
        %vm1491 = vcmp.ge.f32.partialorder %v1488, 0.0
        %vm1492 = vcmp.ge.f32.partialorder %v1489, 0.0
        %vm1493 = vcmp.ge.f32.partialorder %v1490, 0.0
        %v1494 = vmul.f32 %v1488, 0.01
        %v1495 = vmul.f32 %v1489, 0.01
        %v1496 = vmul.f32 %v1490, 0.01
        %v1497 = vsel %vm1491, %v1488, %v1494
        %v1498 = vsel %vm1492, %v1489, %v1495
        %v1499 = vsel %vm1493, %v1490, %v1496
        %v1500 = vmul.f32 %v1497, %v958
        %v1501 = vmul.f32 %v1498, %v960
        %v1502 = vmul.f32 %v1499, %v962
        %v1503 = vpack.c.bf16 %v1501, %v1500
        %v1504 = vpack.c.bf16 %v1502, %v1502
        %s1505 = scalar_lea.vmem %s5, 192
        %v1506 = vld [vmem:[%s1505] sm:$0xf]
        %v1507 = vld [vmem:[%s1505 + $0x4] sm:$0xf]
        %v1508 = vld [vmem:[%s1505 + $0x8] sm:$0xf]
        %v1509 = vld [vmem:[%s1505 + $0xc] sm:$0xf]
        %v1510 = vld [vmem:[%s1505 + $0x10] sm:$0xf]
        %v1511 = vld [vmem:[%s1505 + $0x14] sm:$0xf]
        %v1512 = vld [vmem:[%s1505 + $0x18] sm:$0xf]
        %v1513 = vld [vmem:[%s1505 + $0x1c] sm:$0xf]
        %v1514 = vld [vmem:[%s1505 + $0x20] sm:$0xf]
        %v1515 = vld [vmem:[%s1505 + $0x24] sm:$0xf]
        %v1516 = vld [vmem:[%s1505 + $0x28] sm:$0xf]
        %v1517 = vld [vmem:[%s1505 + $0x2c] sm:$0xf]
        %v1518 = vld [vmem:[%s1505 + $0x30] sm:$0xf]
        %v1519 = vld [vmem:[%s1505 + $0x34] sm:$0xf]
        %v1520 = vld [vmem:[%s1505 + $0x38] sm:$0xf]
        %v1521 = vld [vmem:[%s1505 + $0x3c] sm:$0xf]
        %s1522 = scalar_lea.vmem %s5, 256
        %v1523 = vld [vmem:[%s1522] sm:$0xf]
        %v1524 = vld [vmem:[%s1522 + $0x4] sm:$0xf]
        %v1525 = vld [vmem:[%s1522 + $0x8] sm:$0xf]
        %v1526 = vld [vmem:[%s1522 + $0xc] sm:$0xf]
        %v1527 = vld [vmem:[%s1522 + $0x10] sm:$0xf]
        %v1528 = vld [vmem:[%s1522 + $0x14] sm:$0xf]
        %v1529 = vld [vmem:[%s1522 + $0x18] sm:$0xf]
        %v1530 = vld [vmem:[%s1522 + $0x1c] sm:$0xf]
        %v1531 = vld [vmem:[%s1522 + $0x20] sm:$0xf]
        %v1532 = vld [vmem:[%s1522 + $0x24] sm:$0xf]
        %v1533 = vld [vmem:[%s1522 + $0x28] sm:$0xf]
        %v1534 = vld [vmem:[%s1522 + $0x2c] sm:$0xf]
        %v1535 = vld [vmem:[%s1522 + $0x30] sm:$0xf]
        %v1536 = vld [vmem:[%s1522 + $0x34] sm:$0xf]
        %v1537 = vld [vmem:[%s1522 + $0x38] sm:$0xf]
        %v1538 = vld [vmem:[%s1522 + $0x3c] sm:$0xf]
        %v1541 = vrot.slane %v1503, 1
        %v1542 = vrot.slane %v1504, 1
        %v1543 = vsel %vm831, %v1541, %v1542
        %v1562 = vunpack.c.l.b16 %v1523
        %v1563 = vunpack.c.l.b16 %v1524
        %v1564 = vunpack.c.l.b16 %v1525
        %v1565 = vunpack.c.l.b16 %v1526
        %v1566 = vunpack.c.l.b16 %v1527
        %v1567 = vunpack.c.l.b16 %v1528
        %v1568 = vunpack.c.l.b16 %v1529
        %v1569 = vunpack.c.l.b16 %v1530
        %v1570 = vunpack.c.l.b16 %v1531
        %v1571 = vunpack.c.l.b16 %v1532
        %v1572 = vunpack.c.l.b16 %v1533
        %v1573 = vunpack.c.l.b16 %v1534
        %v1574 = vunpack.c.l.b16 %v1535
        %v1575 = vunpack.c.l.b16 %v1536
        %v1576 = vunpack.c.l.b16 %v1537
        %v1577 = vunpack.c.l.b16 %v1538
        %v1578 = vpack.c.b16 %v1563, %v1562
        %v1579 = vpack.c.b16 %v1565, %v1564
        %v1580 = vpack.c.b16 %v1567, %v1566
        %v1581 = vpack.c.b16 %v1569, %v1568
        %v1582 = vpack.c.b16 %v1571, %v1570
        %v1583 = vpack.c.b16 %v1573, %v1572
        %v1584 = vpack.c.b16 %v1575, %v1574
        %v1585 = vpack.c.b16 %v1577, %v1576
        %1594 = vmatprep.subr.bf16.mxu0 0
        %1595 = vmatpush1.bf16.msra.mxu0 %v1578
        %1596 = vmatprep.subr.bf16.mxu0 0
        %1597 = vmatpush1.bf16.msra.mxu0 %v1579
        %1598 = vmatprep.subr.bf16.mxu0 0
        %1599 = vmatpush1.bf16.msra.mxu0 %v1580
        %1600 = vmatprep.subr.bf16.mxu0 0
        %1601 = vmatpush1.bf16.msra.mxu0 %v1581
        %1602 = vmatprep.subr.bf16.mxu0 0
        %1603 = vmatpush1.bf16.msra.mxu0 %v1582
        %1604 = vmatprep.subr.bf16.mxu0 0
        %1605 = vmatpush1.bf16.msra.mxu0 %v1583
        %1606 = vmatprep.subr.bf16.mxu0 0
        %1607 = vmatpush1.bf16.msra.mxu0 %v1584
        %1608 = vmatprep.subr.bf16.mxu0 0
        %1609 = vmatpush1.bf16.msra.mxu0 %v1585
        %1610 = vmatprep.subr.bf16.mxu0 0
        %1611 = vmatpush1.bf16.msra.mxu0 0
        %1612 = vmatprep.subr.bf16.mxu0 0
        %1613 = vmatpush1.bf16.msra.mxu0 0
        %1614 = vmatprep.subr.bf16.mxu0 0
        %1615 = vmatpush1.bf16.msra.mxu0 0
        %1616 = vmatprep.subr.bf16.mxu0 0
        %1617 = vmatpush1.bf16.msra.mxu0 0
        %1618 = vmatprep.subr.bf16.mxu0 0
        %1619 = vmatpush1.bf16.msra.mxu0 0
        %1620 = vmatprep.subr.bf16.mxu0 0
        %1621 = vmatpush1.bf16.msra.mxu0 0
        %1622 = vmatprep.subr.bf16.mxu0 0
        %1623 = vmatpush1.bf16.msra.mxu0 0
        %1624 = vmatprep.subr.bf16.mxu0 0
        %1625 = vmatpush1.bf16.msra.mxu0 0
        %1626 = vmatprep.mubr.bf16.mxu0 0
        %1627 = vmatmul.mubr.bf16.gmra.mrb[0].mxu0 %v1543
        %v1628 = vpop.f32.mrb[0].mxu0
        %v1629 = vadd.f32 0.0, %v1628
        %v1630 = vpop.f32.mrb[0].mxu0
        %v1631 = vpop.f32.mrb[0].mxu0
        %v1632 = vadd.f32 0.0, %v1631
        %v1633 = vpop.f32.mrb[0].mxu0
        %1634 = vmatprep.mubr.bf16.mxu0 0
        %1635 = vmatmul.mubr.bf16.gmra.mrb[0].mxu0 %v1542
        %v1636 = vpop.f32.mrb[0].mxu0
        %v1637 = vadd.f32 0.0, %v1636
        %v1638 = vpop.f32.mrb[0].mxu0
        %v1639 = vpop.f32.mrb[0].mxu0
        %v1640 = vpop.f32.mrb[0].mxu0
        %1641 = vdwg.mxu0
        %v1643 = vshrl.u32 %v1503, 16
        %v1645 = vshll.u32 %v1503, 16
        %v1647 = vrot.slane %v1645, 1
        %v1648 = vor.u32 %v1643, %v1647
        %v1650 = vshll.u32 %v1504, 16
        %v1652 = vrot.slane %v1650, 1
        %v1653 = vsel %vm602, %v1648, %v1652
        %v1654 = vshrl.u32 %v1504, 16
        %v1656 = vor.u32 %v1654, %v1652
        %v1675 = vunpack.c.l.b16 %v1506
        %v1676 = vunpack.c.l.b16 %v1507
        %v1677 = vunpack.c.l.b16 %v1508
        %v1678 = vunpack.c.l.b16 %v1509
        %v1679 = vunpack.c.l.b16 %v1510
        %v1680 = vunpack.c.l.b16 %v1511
        %v1681 = vunpack.c.l.b16 %v1512
        %v1682 = vunpack.c.l.b16 %v1513
        %v1683 = vunpack.c.l.b16 %v1514
        %v1684 = vunpack.c.l.b16 %v1515
        %v1685 = vunpack.c.l.b16 %v1516
        %v1686 = vunpack.c.l.b16 %v1517
        %v1687 = vunpack.c.l.b16 %v1518
        %v1688 = vunpack.c.l.b16 %v1519
        %v1689 = vunpack.c.l.b16 %v1520
        %v1690 = vunpack.c.l.b16 %v1521
        %v1691 = vpack.c.b16 %v1676, %v1675
        %v1692 = vpack.c.b16 %v1678, %v1677
        %v1693 = vpack.c.b16 %v1680, %v1679
        %v1694 = vpack.c.b16 %v1682, %v1681
        %v1695 = vpack.c.b16 %v1684, %v1683
        %v1696 = vpack.c.b16 %v1686, %v1685
        %v1697 = vpack.c.b16 %v1688, %v1687
        %v1698 = vpack.c.b16 %v1690, %v1689
        %1707 = vmatprep.subr.bf16.mxu0 0
        %1708 = vmatpush1.bf16.msra.mxu0 %v1691
        %1709 = vmatprep.subr.bf16.mxu0 0
        %1710 = vmatpush1.bf16.msra.mxu0 %v1692
        %1711 = vmatprep.subr.bf16.mxu0 0
        %1712 = vmatpush1.bf16.msra.mxu0 %v1693
        %1713 = vmatprep.subr.bf16.mxu0 0
        %1714 = vmatpush1.bf16.msra.mxu0 %v1694
        %1715 = vmatprep.subr.bf16.mxu0 0
        %1716 = vmatpush1.bf16.msra.mxu0 %v1695
        %1717 = vmatprep.subr.bf16.mxu0 0
        %1718 = vmatpush1.bf16.msra.mxu0 %v1696
        %1719 = vmatprep.subr.bf16.mxu0 0
        %1720 = vmatpush1.bf16.msra.mxu0 %v1697
        %1721 = vmatprep.subr.bf16.mxu0 0
        %1722 = vmatpush1.bf16.msra.mxu0 %v1698
        %1723 = vmatprep.subr.bf16.mxu0 0
        %1724 = vmatpush1.bf16.msra.mxu0 0
        %1725 = vmatprep.subr.bf16.mxu0 0
        %1726 = vmatpush1.bf16.msra.mxu0 0
        %1727 = vmatprep.subr.bf16.mxu0 0
        %1728 = vmatpush1.bf16.msra.mxu0 0
        %1729 = vmatprep.subr.bf16.mxu0 0
        %1730 = vmatpush1.bf16.msra.mxu0 0
        %1731 = vmatprep.subr.bf16.mxu0 0
        %1732 = vmatpush1.bf16.msra.mxu0 0
        %1733 = vmatprep.subr.bf16.mxu0 0
        %1734 = vmatpush1.bf16.msra.mxu0 0
        %1735 = vmatprep.subr.bf16.mxu0 0
        %1736 = vmatpush1.bf16.msra.mxu0 0
        %1737 = vmatprep.subr.bf16.mxu0 0
        %1738 = vmatpush1.bf16.msra.mxu0 0
        %1739 = vmatprep.mubr.bf16.mxu0 0
        %1740 = vmatmul.mubr.bf16.gmra.mrb[0].mxu0 %v1653
        %v1741 = vpop.f32.mrb[0].mxu0
        %v1742 = vadd.f32 %v1629, %v1741
        %v1743 = vpop.f32.mrb[0].mxu0
        %v1744 = vpop.f32.mrb[0].mxu0
        %v1745 = vadd.f32 %v1632, %v1744
        %v1746 = vpop.f32.mrb[0].mxu0
        %1747 = vmatprep.mubr.bf16.mxu0 0
        %1748 = vmatmul.mubr.bf16.gmra.mrb[0].mxu0 %v1656
        %v1749 = vpop.f32.mrb[0].mxu0
        %v1750 = vadd.f32 %v1637, %v1749
        %v1751 = vpop.f32.mrb[0].mxu0
        %v1752 = vpop.f32.mrb[0].mxu0
        %v1753 = vpop.f32.mrb[0].mxu0
        %1754 = vdwg.mxu0
        %s1755 = scalar_lea.vmem %s5, 320
        %v1756 = vld [vmem:[%s1755] sm:$0xf]
        %v1757 = vld [vmem:[%s1755 + $0x4] sm:$0xf]
        %v1758 = vld [vmem:[%s1755 + $0x8] sm:$0xf]
        %v1759 = vld [vmem:[%s1755 + $0xc] sm:$0xf]
        %v1760 = vld [vmem:[%s1755 + $0x10] sm:$0xf]
        %v1761 = vld [vmem:[%s1755 + $0x14] sm:$0xf]
        %v1762 = vld [vmem:[%s1755 + $0x18] sm:$0xf]
        %v1763 = vld [vmem:[%s1755 + $0x1c] sm:$0xf]
        %v1764 = vld [vmem:[%s1755 + $0x20] sm:$0xf]
        %v1765 = vld [vmem:[%s1755 + $0x24] sm:$0xf]
        %v1766 = vld [vmem:[%s1755 + $0x28] sm:$0xf]
        %v1767 = vld [vmem:[%s1755 + $0x2c] sm:$0xf]
        %v1768 = vld [vmem:[%s1755 + $0x30] sm:$0xf]
        %v1769 = vld [vmem:[%s1755 + $0x34] sm:$0xf]
        %v1770 = vld [vmem:[%s1755 + $0x38] sm:$0xf]
        %v1771 = vld [vmem:[%s1755 + $0x3c] sm:$0xf]
        %vm1772 = vsmask.f32 6400
        %v1773 = vrot.slane %v1643, 1
        %v1774 = vrot.slane %v1645, 2
        %v1775 = vor.u32 %v1773, %v1774
        %v1776 = vrot.slane %v1654, 1
        %v1777 = vrot.slane %v1650, 2
        %v1778 = vor.u32 %v1776, %v1777
        %v1779 = vsel %vm1772, %v1775, %v1778
        %v1798 = vunpack.c.l.b16 %v1756
        %v1799 = vunpack.c.l.b16 %v1757
        %v1800 = vunpack.c.l.b16 %v1758
        %v1801 = vunpack.c.l.b16 %v1759
        %v1802 = vunpack.c.l.b16 %v1760
        %v1803 = vunpack.c.l.b16 %v1761
        %v1804 = vunpack.c.l.b16 %v1762
        %v1805 = vunpack.c.l.b16 %v1763
        %v1806 = vunpack.c.l.b16 %v1764
        %v1807 = vunpack.c.l.b16 %v1765
        %v1808 = vunpack.c.l.b16 %v1766
        %v1809 = vunpack.c.l.b16 %v1767
        %v1810 = vunpack.c.l.b16 %v1768
        %v1811 = vunpack.c.l.b16 %v1769
        %v1812 = vunpack.c.l.b16 %v1770
        %v1813 = vunpack.c.l.b16 %v1771
        %v1814 = vpack.c.b16 %v1799, %v1798
        %v1815 = vpack.c.b16 %v1801, %v1800
        %v1816 = vpack.c.b16 %v1803, %v1802
        %v1817 = vpack.c.b16 %v1805, %v1804
        %v1818 = vpack.c.b16 %v1807, %v1806
        %v1819 = vpack.c.b16 %v1809, %v1808
        %v1820 = vpack.c.b16 %v1811, %v1810
        %v1821 = vpack.c.b16 %v1813, %v1812
        %1830 = vmatprep.subr.bf16.mxu0 0
        %1831 = vmatpush1.bf16.msra.mxu0 %v1814
        %1832 = vmatprep.subr.bf16.mxu0 0
        %1833 = vmatpush1.bf16.msra.mxu0 %v1815
        %1834 = vmatprep.subr.bf16.mxu0 0
        %1835 = vmatpush1.bf16.msra.mxu0 %v1816
        %1836 = vmatprep.subr.bf16.mxu0 0
        %1837 = vmatpush1.bf16.msra.mxu0 %v1817
        %1838 = vmatprep.subr.bf16.mxu0 0
        %1839 = vmatpush1.bf16.msra.mxu0 %v1818
        %1840 = vmatprep.subr.bf16.mxu0 0
        %1841 = vmatpush1.bf16.msra.mxu0 %v1819
        %1842 = vmatprep.subr.bf16.mxu0 0
        %1843 = vmatpush1.bf16.msra.mxu0 %v1820
        %1844 = vmatprep.subr.bf16.mxu0 0
        %1845 = vmatpush1.bf16.msra.mxu0 %v1821
        %1846 = vmatprep.subr.bf16.mxu0 0
        %1847 = vmatpush1.bf16.msra.mxu0 0
        %1848 = vmatprep.subr.bf16.mxu0 0
        %1849 = vmatpush1.bf16.msra.mxu0 0
        %1850 = vmatprep.subr.bf16.mxu0 0
        %1851 = vmatpush1.bf16.msra.mxu0 0
        %1852 = vmatprep.subr.bf16.mxu0 0
        %1853 = vmatpush1.bf16.msra.mxu0 0
        %1854 = vmatprep.subr.bf16.mxu0 0
        %1855 = vmatpush1.bf16.msra.mxu0 0
        %1856 = vmatprep.subr.bf16.mxu0 0
        %1857 = vmatpush1.bf16.msra.mxu0 0
        %1858 = vmatprep.subr.bf16.mxu0 0
        %1859 = vmatpush1.bf16.msra.mxu0 0
        %1860 = vmatprep.subr.bf16.mxu0 0
        %1861 = vmatpush1.bf16.msra.mxu0 0
        %1862 = vmatprep.mubr.bf16.mxu0 0
        %1863 = vmatmul.mubr.bf16.gmra.mrb[0].mxu0 %v1779
        %v1864 = vpop.f32.mrb[0].mxu0
        %v1865 = vadd.f32 0.0, %v1864
        %v1866 = vpop.f32.mrb[0].mxu0
        %v1867 = vpop.f32.mrb[0].mxu0
        %v1868 = vadd.f32 0.0, %v1867
        %v1869 = vpop.f32.mrb[0].mxu0
        %1870 = vmatprep.mubr.bf16.mxu0 0
        %1871 = vmatmul.mubr.bf16.gmra.mrb[0].mxu0 %v1778
        %v1872 = vpop.f32.mrb[0].mxu0
        %v1873 = vadd.f32 0.0, %v1872
        %v1874 = vpop.f32.mrb[0].mxu0
        %v1875 = vpop.f32.mrb[0].mxu0
        %v1876 = vpop.f32.mrb[0].mxu0
        %1877 = vdwg.mxu0
        %v1878 = vadd.f32 %v1742, %v1865
        %v1879 = vadd.f32 %v1745, %v1868
        %v1880 = vadd.f32 %v1750, %v1873
        %s1881 = scalar_lea.vmem %s6, 1
        %v1882 = vld [vmem:[%s1881] sm:$0x1]
        %v1884 = vlaneseq
        %v1885 = vshrl.u32 %v1884, 7
        %v1886 = vsub.s32 0, %v1885
        %v1887 = vrot.slane %v1882, %v1886
        %v1889 = vadd.f32 %v1878, %v1887
        %v1890 = vadd.f32 %v1879, %v1887
        %v1891 = vadd.f32 %v1880, %v1887
        %vm1892 = vcmp.ge.f32.partialorder %v1889, 0.0
        %vm1893 = vcmp.ge.f32.partialorder %v1890, 0.0
        %vm1894 = vcmp.ge.f32.partialorder %v1891, 0.0
        %v1895 = vmul.f32 %v1889, 0.01
        %v1896 = vmul.f32 %v1890, 0.01
        %v1897 = vmul.f32 %v1891, 0.01
        %v1898 = vsel %vm1892, %v1889, %v1895
        %v1899 = vsel %vm1893, %v1890, %v1896
        %v1900 = vsel %vm1894, %v1891, %v1897
        %v1901 = vpack.c.bf16 %v1899, %v1898
        %v1902 = vpack.c.bf16 %v1900, %v1900
        %s1903 = scalar_lea.vmem %s7, 64
        %v1904 = vld [vmem:[%s1903] sm:$0xf]
        %v1905 = vld [vmem:[%s1903 + $0x4] sm:$0xf]
        %v1906 = vld [vmem:[%s1903 + $0x8] sm:$0xf]
        %v1907 = vld [vmem:[%s1903 + $0xc] sm:$0xf]
        %v1908 = vld [vmem:[%s1903 + $0x10] sm:$0xf]
        %v1909 = vld [vmem:[%s1903 + $0x14] sm:$0xf]
        %v1910 = vld [vmem:[%s1903 + $0x18] sm:$0xf]
        %v1911 = vld [vmem:[%s1903 + $0x1c] sm:$0xf]
        %v1912 = vld [vmem:[%s1903 + $0x20] sm:$0xf]
        %v1913 = vld [vmem:[%s1903 + $0x24] sm:$0xf]
        %v1914 = vld [vmem:[%s1903 + $0x28] sm:$0xf]
        %v1915 = vld [vmem:[%s1903 + $0x2c] sm:$0xf]
        %v1916 = vld [vmem:[%s1903 + $0x30] sm:$0xf]
        %v1917 = vld [vmem:[%s1903 + $0x34] sm:$0xf]
        %v1918 = vld [vmem:[%s1903 + $0x38] sm:$0xf]
        %v1919 = vld [vmem:[%s1903 + $0x3c] sm:$0xf]
        %s1920 = scalar_lea.vmem %s8, 1
        %v1921 = vld [vmem:[%s1920] sm:$0x1]
        %v1923 = vlaneseq
        %v1924 = vshrl.u32 %v1923, 7
        %v1925 = vsub.s32 0, %v1924
        %v1926 = vrot.slane %v1921, %v1925
        %v1944 = vunpack.c.l.b16 %v1904
        %v1945 = vunpack.c.l.b16 %v1905
        %v1946 = vunpack.c.l.b16 %v1906
        %v1947 = vunpack.c.l.b16 %v1907
        %v1948 = vunpack.c.l.b16 %v1908
        %v1949 = vunpack.c.l.b16 %v1909
        %v1950 = vunpack.c.l.b16 %v1910
        %v1951 = vunpack.c.l.b16 %v1911
        %v1952 = vunpack.c.l.b16 %v1912
        %v1953 = vunpack.c.l.b16 %v1913
        %v1954 = vunpack.c.l.b16 %v1914
        %v1955 = vunpack.c.l.b16 %v1915
        %v1956 = vunpack.c.l.b16 %v1916
        %v1957 = vunpack.c.l.b16 %v1917
        %v1958 = vunpack.c.l.b16 %v1918
        %v1959 = vunpack.c.l.b16 %v1919
        %v1960 = vpack.c.b16 %v1945, %v1944
        %v1961 = vpack.c.b16 %v1947, %v1946
        %v1962 = vpack.c.b16 %v1949, %v1948
        %v1963 = vpack.c.b16 %v1951, %v1950
        %v1964 = vpack.c.b16 %v1953, %v1952
        %v1965 = vpack.c.b16 %v1955, %v1954
        %v1966 = vpack.c.b16 %v1957, %v1956
        %v1967 = vpack.c.b16 %v1959, %v1958
        %1976 = vmatprep.subr.bf16.mxu0 0
        %1977 = vmatpush1.bf16.msra.mxu0 %v1960
        %1978 = vmatprep.subr.bf16.mxu0 0
        %1979 = vmatpush1.bf16.msra.mxu0 %v1961
        %1980 = vmatprep.subr.bf16.mxu0 0
        %1981 = vmatpush1.bf16.msra.mxu0 %v1962
        %1982 = vmatprep.subr.bf16.mxu0 0
        %1983 = vmatpush1.bf16.msra.mxu0 %v1963
        %1984 = vmatprep.subr.bf16.mxu0 0
        %1985 = vmatpush1.bf16.msra.mxu0 %v1964
        %1986 = vmatprep.subr.bf16.mxu0 0
        %1987 = vmatpush1.bf16.msra.mxu0 %v1965
        %1988 = vmatprep.subr.bf16.mxu0 0
        %1989 = vmatpush1.bf16.msra.mxu0 %v1966
        %1990 = vmatprep.subr.bf16.mxu0 0
        %1991 = vmatpush1.bf16.msra.mxu0 %v1967
        %1992 = vmatprep.subr.bf16.mxu0 0
        %1993 = vmatpush1.bf16.msra.mxu0 0
        %1994 = vmatprep.subr.bf16.mxu0 0
        %1995 = vmatpush1.bf16.msra.mxu0 0
        %1996 = vmatprep.subr.bf16.mxu0 0
        %1997 = vmatpush1.bf16.msra.mxu0 0
        %1998 = vmatprep.subr.bf16.mxu0 0
        %1999 = vmatpush1.bf16.msra.mxu0 0
        %2000 = vmatprep.subr.bf16.mxu0 0
        %2001 = vmatpush1.bf16.msra.mxu0 0
        %2002 = vmatprep.subr.bf16.mxu0 0
        %2003 = vmatpush1.bf16.msra.mxu0 0
        %2004 = vmatprep.subr.bf16.mxu0 0
        %2005 = vmatpush1.bf16.msra.mxu0 0
        %2006 = vmatprep.subr.bf16.mxu0 0
        %2007 = vmatpush1.bf16.msra.mxu0 0
        %2008 = vmatprep.mubr.bf16.mxu0 0
        %2009 = vmatmul.mubr.bf16.gmra.mrb[0].mxu0 %v1901
        %v2010 = vpop.f32.mrb[0].mxu0
        %v2011 = vadd.f32 %v1926, %v2010
        %v2012 = vpop.f32.mrb[0].mxu0
        %v2013 = vpop.f32.mrb[0].mxu0
        %v2014 = vadd.f32 %v1926, %v2013
        %v2015 = vpop.f32.mrb[0].mxu0
        %2016 = vmatprep.mubr.bf16.mxu0 0
        %2017 = vmatmul.mubr.bf16.gmra.mrb[0].mxu0 %v1902
        %v2018 = vpop.f32.mrb[0].mxu0
        %v2019 = vadd.f32 %v1926, %v2018
        %v2020 = vpop.f32.mrb[0].mxu0
        %v2021 = vpop.f32.mrb[0].mxu0
        %v2022 = vpop.f32.mrb[0].mxu0
        %2023 = vdwg.mxu0
        %vm2027 = vcmask 1041408
        %v2028 = vrot.slane %v2011, 6
        %v2029 = vrot.slane %v2014, 6
        %v2030 = vsel %vm2027, %v2028, %v2029
        %v2031 = vrot.slane %v2019, 6
        %v2032 = vsel %vm2027, %v2029, %v2031
        %v2036 = vadd.f32 %v1488, %v2028
        %v2037 = vadd.f32 %v1489, %v2030
        %v2038 = vadd.f32 %v1490, %v2032
        %vm2039 = vcmp.ge.f32.partialorder %v2036, 0.0
        %vm2040 = vcmp.ge.f32.partialorder %v2037, 0.0
        %vm2041 = vcmp.ge.f32.partialorder %v2038, 0.0
        %v2042 = vmul.f32 %v2036, 0.01
        %v2043 = vmul.f32 %v2037, 0.01
        %v2044 = vmul.f32 %v2038, 0.01
        %v2045 = vsel %vm2039, %v2036, %v2042
        %v2046 = vsel %vm2040, %v2037, %v2043
        %v2047 = vsel %vm2041, %v2038, %v2044
        %v2048 = vmul.f32 %v2045, %v958
        %v2049 = vmul.f32 %v2046, %v960
        %v2050 = vmul.f32 %v2047, %v962
        %v2051 = vpack.c.bf16 %v2049, %v2048
        %v2052 = vpack.c.bf16 %v2050, %v2050
        %s2053 = scalar_lea.vmem %s5, 384
        %v2054 = vld [vmem:[%s2053] sm:$0xf]
        %v2055 = vld [vmem:[%s2053 + $0x4] sm:$0xf]
        %v2056 = vld [vmem:[%s2053 + $0x8] sm:$0xf]
        %v2057 = vld [vmem:[%s2053 + $0xc] sm:$0xf]
        %v2058 = vld [vmem:[%s2053 + $0x10] sm:$0xf]
        %v2059 = vld [vmem:[%s2053 + $0x14] sm:$0xf]
        %v2060 = vld [vmem:[%s2053 + $0x18] sm:$0xf]
        %v2061 = vld [vmem:[%s2053 + $0x1c] sm:$0xf]
        %v2062 = vld [vmem:[%s2053 + $0x20] sm:$0xf]
        %v2063 = vld [vmem:[%s2053 + $0x24] sm:$0xf]
        %v2064 = vld [vmem:[%s2053 + $0x28] sm:$0xf]
        %v2065 = vld [vmem:[%s2053 + $0x2c] sm:$0xf]
        %v2066 = vld [vmem:[%s2053 + $0x30] sm:$0xf]
        %v2067 = vld [vmem:[%s2053 + $0x34] sm:$0xf]
        %v2068 = vld [vmem:[%s2053 + $0x38] sm:$0xf]
        %v2069 = vld [vmem:[%s2053 + $0x3c] sm:$0xf]
        %s2070 = scalar_lea.vmem %s5, 448
        %v2071 = vld [vmem:[%s2070] sm:$0xf]
        %v2072 = vld [vmem:[%s2070 + $0x4] sm:$0xf]
        %v2073 = vld [vmem:[%s2070 + $0x8] sm:$0xf]
        %v2074 = vld [vmem:[%s2070 + $0xc] sm:$0xf]
        %v2075 = vld [vmem:[%s2070 + $0x10] sm:$0xf]
        %v2076 = vld [vmem:[%s2070 + $0x14] sm:$0xf]
        %v2077 = vld [vmem:[%s2070 + $0x18] sm:$0xf]
        %v2078 = vld [vmem:[%s2070 + $0x1c] sm:$0xf]
        %v2079 = vld [vmem:[%s2070 + $0x20] sm:$0xf]
        %v2080 = vld [vmem:[%s2070 + $0x24] sm:$0xf]
        %v2081 = vld [vmem:[%s2070 + $0x28] sm:$0xf]
        %v2082 = vld [vmem:[%s2070 + $0x2c] sm:$0xf]
        %v2083 = vld [vmem:[%s2070 + $0x30] sm:$0xf]
        %v2084 = vld [vmem:[%s2070 + $0x34] sm:$0xf]
        %v2085 = vld [vmem:[%s2070 + $0x38] sm:$0xf]
        %v2086 = vld [vmem:[%s2070 + $0x3c] sm:$0xf]
        %v2088 = vshrl.u32 %v2051, 16
        %v2090 = vrot.slane %v2088, 1
        %v2091 = vshll.u32 %v2051, 16
        %v2093 = vrot.slane %v2091, 2
        %v2094 = vor.u32 %v2090, %v2093
        %v2096 = vshrl.u32 %v2052, 16
        %v2098 = vrot.slane %v2096, 1
        %v2099 = vshll.u32 %v2052, 16
        %v2101 = vrot.slane %v2099, 2
        %v2102 = vor.u32 %v2098, %v2101
        %v2103 = vsel %vm1772, %v2094, %v2102
        %v2121 = vunpack.c.l.b16 %v2071
        %v2122 = vunpack.c.l.b16 %v2072
        %v2123 = vunpack.c.l.b16 %v2073
        %v2124 = vunpack.c.l.b16 %v2074
        %v2125 = vunpack.c.l.b16 %v2075
        %v2126 = vunpack.c.l.b16 %v2076
        %v2127 = vunpack.c.l.b16 %v2077
        %v2128 = vunpack.c.l.b16 %v2078
        %v2129 = vunpack.c.l.b16 %v2079
        %v2130 = vunpack.c.l.b16 %v2080
        %v2131 = vunpack.c.l.b16 %v2081
        %v2132 = vunpack.c.l.b16 %v2082
        %v2133 = vunpack.c.l.b16 %v2083
        %v2134 = vunpack.c.l.b16 %v2084
        %v2135 = vunpack.c.l.b16 %v2085
        %v2136 = vunpack.c.l.b16 %v2086
        %v2137 = vpack.c.b16 %v2122, %v2121
        %v2138 = vpack.c.b16 %v2124, %v2123
        %v2139 = vpack.c.b16 %v2126, %v2125
        %v2140 = vpack.c.b16 %v2128, %v2127
        %v2141 = vpack.c.b16 %v2130, %v2129
        %v2142 = vpack.c.b16 %v2132, %v2131
        %v2143 = vpack.c.b16 %v2134, %v2133
        %v2144 = vpack.c.b16 %v2136, %v2135
        %2153 = vmatprep.subr.bf16.mxu0 0
        %2154 = vmatpush1.bf16.msra.mxu0 %v2137
        %2155 = vmatprep.subr.bf16.mxu0 0
        %2156 = vmatpush1.bf16.msra.mxu0 %v2138
        %2157 = vmatprep.subr.bf16.mxu0 0
        %2158 = vmatpush1.bf16.msra.mxu0 %v2139
        %2159 = vmatprep.subr.bf16.mxu0 0
        %2160 = vmatpush1.bf16.msra.mxu0 %v2140
        %2161 = vmatprep.subr.bf16.mxu0 0
        %2162 = vmatpush1.bf16.msra.mxu0 %v2141
        %2163 = vmatprep.subr.bf16.mxu0 0
        %2164 = vmatpush1.bf16.msra.mxu0 %v2142
        %2165 = vmatprep.subr.bf16.mxu0 0
        %2166 = vmatpush1.bf16.msra.mxu0 %v2143
        %2167 = vmatprep.subr.bf16.mxu0 0
        %2168 = vmatpush1.bf16.msra.mxu0 %v2144
        %2169 = vmatprep.subr.bf16.mxu0 0
        %2170 = vmatpush1.bf16.msra.mxu0 0
        %2171 = vmatprep.subr.bf16.mxu0 0
        %2172 = vmatpush1.bf16.msra.mxu0 0
        %2173 = vmatprep.subr.bf16.mxu0 0
        %2174 = vmatpush1.bf16.msra.mxu0 0
        %2175 = vmatprep.subr.bf16.mxu0 0
        %2176 = vmatpush1.bf16.msra.mxu0 0
        %2177 = vmatprep.subr.bf16.mxu0 0
        %2178 = vmatpush1.bf16.msra.mxu0 0
        %2179 = vmatprep.subr.bf16.mxu0 0
        %2180 = vmatpush1.bf16.msra.mxu0 0
        %2181 = vmatprep.subr.bf16.mxu0 0
        %2182 = vmatpush1.bf16.msra.mxu0 0
        %2183 = vmatprep.subr.bf16.mxu0 0
        %2184 = vmatpush1.bf16.msra.mxu0 0
        %2185 = vmatprep.mubr.bf16.mxu0 0
        %2186 = vmatmul.mubr.bf16.gmra.mrb[0].mxu0 %v2103
        %v2187 = vpop.f32.mrb[0].mxu0
        %v2188 = vadd.f32 0.0, %v2187
        %v2189 = vpop.f32.mrb[0].mxu0
        %v2190 = vpop.f32.mrb[0].mxu0
        %v2191 = vadd.f32 0.0, %v2190
        %v2192 = vpop.f32.mrb[0].mxu0
        %2193 = vdwg.mxu0
        %v2196 = vrot.slane %v2051, 1
        %v2197 = vrot.slane %v2052, 1
        %v2198 = vsel %vm831, %v2196, %v2197
        %v2216 = vunpack.c.l.b16 %v2054
        %v2217 = vunpack.c.l.b16 %v2055
        %v2218 = vunpack.c.l.b16 %v2056
        %v2219 = vunpack.c.l.b16 %v2057
        %v2220 = vunpack.c.l.b16 %v2058
        %v2221 = vunpack.c.l.b16 %v2059
        %v2222 = vunpack.c.l.b16 %v2060
        %v2223 = vunpack.c.l.b16 %v2061
        %v2224 = vunpack.c.l.b16 %v2062
        %v2225 = vunpack.c.l.b16 %v2063
        %v2226 = vunpack.c.l.b16 %v2064
        %v2227 = vunpack.c.l.b16 %v2065
        %v2228 = vunpack.c.l.b16 %v2066
        %v2229 = vunpack.c.l.b16 %v2067
        %v2230 = vunpack.c.l.b16 %v2068
        %v2231 = vunpack.c.l.b16 %v2069
        %v2232 = vpack.c.b16 %v2217, %v2216
        %v2233 = vpack.c.b16 %v2219, %v2218
        %v2234 = vpack.c.b16 %v2221, %v2220
        %v2235 = vpack.c.b16 %v2223, %v2222
        %v2236 = vpack.c.b16 %v2225, %v2224
        %v2237 = vpack.c.b16 %v2227, %v2226
        %v2238 = vpack.c.b16 %v2229, %v2228
        %v2239 = vpack.c.b16 %v2231, %v2230
        %2248 = vmatprep.subr.bf16.mxu0 0
        %2249 = vmatpush1.bf16.msra.mxu0 %v2232
        %2250 = vmatprep.subr.bf16.mxu0 0
        %2251 = vmatpush1.bf16.msra.mxu0 %v2233
        %2252 = vmatprep.subr.bf16.mxu0 0
        %2253 = vmatpush1.bf16.msra.mxu0 %v2234
        %2254 = vmatprep.subr.bf16.mxu0 0
        %2255 = vmatpush1.bf16.msra.mxu0 %v2235
        %2256 = vmatprep.subr.bf16.mxu0 0
        %2257 = vmatpush1.bf16.msra.mxu0 %v2236
        %2258 = vmatprep.subr.bf16.mxu0 0
        %2259 = vmatpush1.bf16.msra.mxu0 %v2237
        %2260 = vmatprep.subr.bf16.mxu0 0
        %2261 = vmatpush1.bf16.msra.mxu0 %v2238
        %2262 = vmatprep.subr.bf16.mxu0 0
        %2263 = vmatpush1.bf16.msra.mxu0 %v2239
        %2264 = vmatprep.subr.bf16.mxu0 0
        %2265 = vmatpush1.bf16.msra.mxu0 0
        %2266 = vmatprep.subr.bf16.mxu0 0
        %2267 = vmatpush1.bf16.msra.mxu0 0
        %2268 = vmatprep.subr.bf16.mxu0 0
        %2269 = vmatpush1.bf16.msra.mxu0 0
        %2270 = vmatprep.subr.bf16.mxu0 0
        %2271 = vmatpush1.bf16.msra.mxu0 0
        %2272 = vmatprep.subr.bf16.mxu0 0
        %2273 = vmatpush1.bf16.msra.mxu0 0
        %2274 = vmatprep.subr.bf16.mxu0 0
        %2275 = vmatpush1.bf16.msra.mxu0 0
        %2276 = vmatprep.subr.bf16.mxu0 0
        %2277 = vmatpush1.bf16.msra.mxu0 0
        %2278 = vmatprep.subr.bf16.mxu0 0
        %2279 = vmatpush1.bf16.msra.mxu0 0
        %2280 = vmatprep.mubr.bf16.mxu0 0
        %2281 = vmatmul.mubr.bf16.gmra.mrb[0].mxu0 %v2198
        %v2282 = vpop.f32.mrb[0].mxu0
        %v2283 = vadd.f32 %v2188, %v2282
        %v2284 = vpop.f32.mrb[0].mxu0
        %v2285 = vpop.f32.mrb[0].mxu0
        %v2286 = vadd.f32 %v2191, %v2285
        %v2287 = vpop.f32.mrb[0].mxu0
        %2288 = vdwg.mxu0
        %s2289 = scalar_lea.vmem %s5, 512
        %v2290 = vld [vmem:[%s2289] sm:$0xf]
        %v2291 = vld [vmem:[%s2289 + $0x4] sm:$0xf]
        %v2292 = vld [vmem:[%s2289 + $0x8] sm:$0xf]
        %v2293 = vld [vmem:[%s2289 + $0xc] sm:$0xf]
        %v2294 = vld [vmem:[%s2289 + $0x10] sm:$0xf]
        %v2295 = vld [vmem:[%s2289 + $0x14] sm:$0xf]
        %v2296 = vld [vmem:[%s2289 + $0x18] sm:$0xf]
        %v2297 = vld [vmem:[%s2289 + $0x1c] sm:$0xf]
        %v2298 = vld [vmem:[%s2289 + $0x20] sm:$0xf]
        %v2299 = vld [vmem:[%s2289 + $0x24] sm:$0xf]
        %v2300 = vld [vmem:[%s2289 + $0x28] sm:$0xf]
        %v2301 = vld [vmem:[%s2289 + $0x2c] sm:$0xf]
        %v2302 = vld [vmem:[%s2289 + $0x30] sm:$0xf]
        %v2303 = vld [vmem:[%s2289 + $0x34] sm:$0xf]
        %v2304 = vld [vmem:[%s2289 + $0x38] sm:$0xf]
        %v2305 = vld [vmem:[%s2289 + $0x3c] sm:$0xf]
        %vm2306 = vcmask 1045504
        %v2307 = vrot.slane %v2051, 2
        %v2308 = vrot.slane %v2052, 2
        %v2309 = vsel %vm2306, %v2307, %v2308
        %v2327 = vunpack.c.l.b16 %v2290
        %v2328 = vunpack.c.l.b16 %v2291
        %v2329 = vunpack.c.l.b16 %v2292
        %v2330 = vunpack.c.l.b16 %v2293
        %v2331 = vunpack.c.l.b16 %v2294
        %v2332 = vunpack.c.l.b16 %v2295
        %v2333 = vunpack.c.l.b16 %v2296
        %v2334 = vunpack.c.l.b16 %v2297
        %v2335 = vunpack.c.l.b16 %v2298
        %v2336 = vunpack.c.l.b16 %v2299
        %v2337 = vunpack.c.l.b16 %v2300
        %v2338 = vunpack.c.l.b16 %v2301
        %v2339 = vunpack.c.l.b16 %v2302
        %v2340 = vunpack.c.l.b16 %v2303
        %v2341 = vunpack.c.l.b16 %v2304
        %v2342 = vunpack.c.l.b16 %v2305
        %v2343 = vpack.c.b16 %v2328, %v2327
        %v2344 = vpack.c.b16 %v2330, %v2329
        %v2345 = vpack.c.b16 %v2332, %v2331
        %v2346 = vpack.c.b16 %v2334, %v2333
        %v2347 = vpack.c.b16 %v2336, %v2335
        %v2348 = vpack.c.b16 %v2338, %v2337
        %v2349 = vpack.c.b16 %v2340, %v2339
        %v2350 = vpack.c.b16 %v2342, %v2341
        %2359 = vmatprep.subr.bf16.mxu0 0
        %2360 = vmatpush1.bf16.msra.mxu0 %v2343
        %2361 = vmatprep.subr.bf16.mxu0 0
        %2362 = vmatpush1.bf16.msra.mxu0 %v2344
        %2363 = vmatprep.subr.bf16.mxu0 0
        %2364 = vmatpush1.bf16.msra.mxu0 %v2345
        %2365 = vmatprep.subr.bf16.mxu0 0
        %2366 = vmatpush1.bf16.msra.mxu0 %v2346
        %2367 = vmatprep.subr.bf16.mxu0 0
        %2368 = vmatpush1.bf16.msra.mxu0 %v2347
        %2369 = vmatprep.subr.bf16.mxu0 0
        %2370 = vmatpush1.bf16.msra.mxu0 %v2348
        %2371 = vmatprep.subr.bf16.mxu0 0
        %2372 = vmatpush1.bf16.msra.mxu0 %v2349
        %2373 = vmatprep.subr.bf16.mxu0 0
        %2374 = vmatpush1.bf16.msra.mxu0 %v2350
        %2375 = vmatprep.subr.bf16.mxu0 0
        %2376 = vmatpush1.bf16.msra.mxu0 0
        %2377 = vmatprep.subr.bf16.mxu0 0
        %2378 = vmatpush1.bf16.msra.mxu0 0
        %2379 = vmatprep.subr.bf16.mxu0 0
        %2380 = vmatpush1.bf16.msra.mxu0 0
        %2381 = vmatprep.subr.bf16.mxu0 0
        %2382 = vmatpush1.bf16.msra.mxu0 0
        %2383 = vmatprep.subr.bf16.mxu0 0
        %2384 = vmatpush1.bf16.msra.mxu0 0
        %2385 = vmatprep.subr.bf16.mxu0 0
        %2386 = vmatpush1.bf16.msra.mxu0 0
        %2387 = vmatprep.subr.bf16.mxu0 0
        %2388 = vmatpush1.bf16.msra.mxu0 0
        %2389 = vmatprep.subr.bf16.mxu0 0
        %2390 = vmatpush1.bf16.msra.mxu0 0
        %2391 = vmatprep.mubr.bf16.mxu0 0
        %2392 = vmatmul.mubr.bf16.gmra.mrb[0].mxu0 %v2309
        %v2393 = vpop.f32.mrb[0].mxu0
        %v2394 = vadd.f32 0.0, %v2393
        %v2395 = vpop.f32.mrb[0].mxu0
        %v2396 = vpop.f32.mrb[0].mxu0
        %v2397 = vadd.f32 0.0, %v2396
        %v2398 = vpop.f32.mrb[0].mxu0
        %2399 = vdwg.mxu0
        %v2400 = vadd.f32 %v2283, %v2394
        %v2401 = vadd.f32 %v2286, %v2397
        %s2402 = scalar_lea.vmem %s6, 2
        %v2403 = vld [vmem:[%s2402] sm:$0x1]
        %v2405 = vlaneseq
        %v2406 = vshrl.u32 %v2405, 7
        %v2407 = vsub.s32 0, %v2406
        %v2408 = vrot.slane %v2403, %v2407
        %v2410 = vadd.f32 %v2400, %v2408
        %v2411 = vadd.f32 %v2401, %v2408
        %vm2412 = vcmp.ge.f32.partialorder %v2410, 0.0
        %vm2413 = vcmp.ge.f32.partialorder %v2411, 0.0
        %v2414 = vmul.f32 %v2410, 0.01
        %v2415 = vmul.f32 %v2411, 0.01
        %v2416 = vsel %vm2412, %v2410, %v2414
        %v2417 = vsel %vm2413, %v2411, %v2415
        %v2418 = vpack.c.bf16 %v2417, %v2416
        %s2419 = scalar_lea.vmem %s7, 128
        %v2420 = vld [vmem:[%s2419] sm:$0xf]
        %v2421 = vld [vmem:[%s2419 + $0x4] sm:$0xf]
        %v2422 = vld [vmem:[%s2419 + $0x8] sm:$0xf]
        %v2423 = vld [vmem:[%s2419 + $0xc] sm:$0xf]
        %v2424 = vld [vmem:[%s2419 + $0x10] sm:$0xf]
        %v2425 = vld [vmem:[%s2419 + $0x14] sm:$0xf]
        %v2426 = vld [vmem:[%s2419 + $0x18] sm:$0xf]
        %v2427 = vld [vmem:[%s2419 + $0x1c] sm:$0xf]
        %v2428 = vld [vmem:[%s2419 + $0x20] sm:$0xf]
        %v2429 = vld [vmem:[%s2419 + $0x24] sm:$0xf]
        %v2430 = vld [vmem:[%s2419 + $0x28] sm:$0xf]
        %v2431 = vld [vmem:[%s2419 + $0x2c] sm:$0xf]
        %v2432 = vld [vmem:[%s2419 + $0x30] sm:$0xf]
        %v2433 = vld [vmem:[%s2419 + $0x34] sm:$0xf]
        %v2434 = vld [vmem:[%s2419 + $0x38] sm:$0xf]
        %v2435 = vld [vmem:[%s2419 + $0x3c] sm:$0xf]
        %s2436 = scalar_lea.vmem %s8, 2
        %v2437 = vld [vmem:[%s2436] sm:$0x1]
        %v2439 = vlaneseq
        %v2440 = vshrl.u32 %v2439, 7
        %v2441 = vsub.s32 0, %v2440
        %v2442 = vrot.slane %v2437, %v2441
        %v2460 = vunpack.c.l.b16 %v2420
        %v2461 = vunpack.c.l.b16 %v2421
        %v2462 = vunpack.c.l.b16 %v2422
        %v2463 = vunpack.c.l.b16 %v2423
        %v2464 = vunpack.c.l.b16 %v2424
        %v2465 = vunpack.c.l.b16 %v2425
        %v2466 = vunpack.c.l.b16 %v2426
        %v2467 = vunpack.c.l.b16 %v2427
        %v2468 = vunpack.c.l.b16 %v2428
        %v2469 = vunpack.c.l.b16 %v2429
        %v2470 = vunpack.c.l.b16 %v2430
        %v2471 = vunpack.c.l.b16 %v2431
        %v2472 = vunpack.c.l.b16 %v2432
        %v2473 = vunpack.c.l.b16 %v2433
        %v2474 = vunpack.c.l.b16 %v2434
        %v2475 = vunpack.c.l.b16 %v2435
        %v2476 = vpack.c.b16 %v2461, %v2460
        %v2477 = vpack.c.b16 %v2463, %v2462
        %v2478 = vpack.c.b16 %v2465, %v2464
        %v2479 = vpack.c.b16 %v2467, %v2466
        %v2480 = vpack.c.b16 %v2469, %v2468
        %v2481 = vpack.c.b16 %v2471, %v2470
        %v2482 = vpack.c.b16 %v2473, %v2472
        %v2483 = vpack.c.b16 %v2475, %v2474
        %2492 = vmatprep.subr.bf16.mxu0 0
        %2493 = vmatpush1.bf16.msra.mxu0 %v2476
        %2494 = vmatprep.subr.bf16.mxu0 0
        %2495 = vmatpush1.bf16.msra.mxu0 %v2477
        %2496 = vmatprep.subr.bf16.mxu0 0
        %2497 = vmatpush1.bf16.msra.mxu0 %v2478
        %2498 = vmatprep.subr.bf16.mxu0 0
        %2499 = vmatpush1.bf16.msra.mxu0 %v2479
        %2500 = vmatprep.subr.bf16.mxu0 0
        %2501 = vmatpush1.bf16.msra.mxu0 %v2480
        %2502 = vmatprep.subr.bf16.mxu0 0
        %2503 = vmatpush1.bf16.msra.mxu0 %v2481
        %2504 = vmatprep.subr.bf16.mxu0 0
        %2505 = vmatpush1.bf16.msra.mxu0 %v2482
        %2506 = vmatprep.subr.bf16.mxu0 0
        %2507 = vmatpush1.bf16.msra.mxu0 %v2483
        %2508 = vmatprep.subr.bf16.mxu0 0
        %2509 = vmatpush1.bf16.msra.mxu0 0
        %2510 = vmatprep.subr.bf16.mxu0 0
        %2511 = vmatpush1.bf16.msra.mxu0 0
        %2512 = vmatprep.subr.bf16.mxu0 0
        %2513 = vmatpush1.bf16.msra.mxu0 0
        %2514 = vmatprep.subr.bf16.mxu0 0
        %2515 = vmatpush1.bf16.msra.mxu0 0
        %2516 = vmatprep.subr.bf16.mxu0 0
        %2517 = vmatpush1.bf16.msra.mxu0 0
        %2518 = vmatprep.subr.bf16.mxu0 0
        %2519 = vmatpush1.bf16.msra.mxu0 0
        %2520 = vmatprep.subr.bf16.mxu0 0
        %2521 = vmatpush1.bf16.msra.mxu0 0
        %2522 = vmatprep.subr.bf16.mxu0 0
        %2523 = vmatpush1.bf16.msra.mxu0 0
        %2524 = vmatprep.mubr.bf16.mxu0 0
        %2525 = vmatmul.mubr.bf16.gmra.mrb[0].mxu0 %v2418
        %v2526 = vpop.f32.mrb[0].mxu0
        %v2527 = vadd.f32 %v2442, %v2526
        %v2528 = vpop.f32.mrb[0].mxu0
        %v2529 = vpop.f32.mrb[0].mxu0
        %v2530 = vadd.f32 %v2442, %v2529
        %v2531 = vpop.f32.mrb[0].mxu0
        %2532 = vdwg.mxu0
        %v2535 = vrot.slane %v2527, 5
        %v2536 = vrot.slane %v2530, 5
        %v2537 = vsel %vm955, %v2535, %v2536
        %v2541 = vadd.f32 %v2036, %v2535
        %v2542 = vadd.f32 %v2037, %v2537
        %v2543 = vadd.f32 %v2038, %v2536
        %vm2544 = vcmp.ge.f32.partialorder %v2541, 0.0
        %vm2545 = vcmp.ge.f32.partialorder %v2542, 0.0
        %vm2546 = vcmp.ge.f32.partialorder %v2543, 0.0
        %v2547 = vmul.f32 %v2541, 0.01
        %v2548 = vmul.f32 %v2542, 0.01
        %v2549 = vmul.f32 %v2543, 0.01
        %v2550 = vsel %vm2544, %v2541, %v2547
        %v2551 = vsel %vm2545, %v2542, %v2548
        %v2552 = vsel %vm2546, %v2543, %v2549
        %2553 = vst [vmem:[%s503 - $0x3] sm:$0xf8] %v2550
        %2554 = vst [vmem:[%s503 + $0x5] sm:$0xff] %v2551
        %2555 = vst [vmem:[%s503 + $0xd] sm:$0x7] %v2552
        %s2556 = smul.u32 2, %s26
        %p2557 = scmp.lt.s32.totalorder %s25, 1
        %s2558 = scalar_select %p2557, %s25, 1
        %p2559 = scmp.lt.s32.totalorder %s2556, 1
        %s2560 = scalar_select %p2559, %s2556, 1
        %s2561 = smul.addr %s2558, 2
        %s2562 = sadd.s32 %s2560, %s2561
        %s2563 = smul.addr %s2562, 8
        %s2564 = scalar_lea.vmem %s9, %s2563
        // Predicated region
        $region61: #{mel_encoder_forward.3} parent=55 // pred_check
          %p2565 = pneg %p279
        $region62: #{mel_encoder_forward.3} parent=55 // pred_check_branch
          %2567 = sbr.rel (%p2565) target = $region64
        $region63: #{mel_encoder_forward.3} parent=55 // pred_region
          %s2568 = smul.u32 2, %s26
        $region64: #{mel_encoder_forward.3} parent=55 // pred_fallthru
          _
      $region56: #{mel_encoder_forward.3} parent=5 // pred_fallthru
        _
      %p2569 = scmp.le.s32.totalorder 2, %s16
      // Predicated region
      $region65: #{mel_encoder_forward.3} parent=5 // pred_check
        %p2570 = pneg %p2569
      $region66: #{mel_encoder_forward.3} parent=5 // pred_check_branch
        %2572 = sbr.rel (%p2570) target = $region68
      $region67: #{mel_encoder_forward.3} parent=5 // pred_region
        %s2573 = ssub.s32 %s16, 2
        // Predicated region
        $region69: #{mel_encoder_forward.3} parent=67 // pred_check
          %p2574 = pneg %p285
        $region70: #{mel_encoder_forward.3} parent=67 // pred_check_branch
          %2576 = sbr.rel (%p2574) target = $region72
        $region71: #{mel_encoder_forward.3} parent=67 // pred_region
          %s2577 = smul.u32 2, %s28
          %p2578 = scmp.lt.s32.totalorder %s27, 1
          %s2579 = scalar_select %p2578, %s27, 1
          %p2580 = scmp.lt.s32.totalorder %s2577, 1
          %s2581 = scalar_select %p2580, %s2577, 1
          %s2582 = smul.addr %s2579, 2
          %s2583 = sadd.s32 %s2581, %s2582
          %s2584 = smul.addr %s2583, 8
          %s2585 = scalar_lea.vmem %s9, %s2584
        $region72: #{mel_encoder_forward.3} parent=67 // pred_fallthru
          _
      $region68: #{mel_encoder_forward.3} parent=5 // pred_fallthru
        _
    $region6: #{mel_encoder_forward.3} parent=1 // loop_footer
      %s20 = sadd.s32 1, %s16
    $region7: #{mel_encoder_forward.3} parent=1 // loop_footer_branch
      %15 = sbr.rel target = $region3
    $region8: #{mel_encoder_forward.3} parent=1 // loop_exit
      _
    %2586 = vsyncpa [#allocation4], 1
    %s2587 = scalar_lea.sflag [#allocation4], 1
    %2588 = vsyncpa %s2587, 1

</llo_original>
